<compile_context>
chip_gen: v5e
topology: v5e:2x2
jax: 0.10.0
libtpu: 0.0.40
codegen_flags: <defaults>
</compile_context>

<pallas_src>
import jax
import jax.numpy as jnp
from jax.experimental import pallas as pl
from jax.experimental.pallas import tpu as pltpu

# ---------------- configuration (small shapes) ----------------
RNN_INPUT_SIZE = 8
RNN_HIDDEN_SIZE = 32          # H  (8H = 256 gate lanes, fwd+bwd fused)
NB_LAYERS = 3
NUM_CLASSES = 15              # output features = NUM_CLASSES + 1 = 16
NUM_DIRECTIONS = 2            # bidirectional
BN_EPS = 1e-5
BATCH = 2
T_MAX = 8


# ---------------- the fused forward kernel ----------------
def _make_kernel(T, B, n_mid):
    """Build the fused kernel for static (T, B) and n_mid = NB_LAYERS - 1.

    Ref layout (inputs, outputs, scratch):
      x_cat (T*B, 2I)        : [x(t) | x(T-1-t)] lanes, row = t*B + b
      m2    (T*B, 2H)        : [mask(t) over H lanes | mask(T-1-t) over H lanes]
      w0 (2I, 8H) bf16, whh0 (2H, 8H) bf16
      per mid layer: w (4H, 8H) bf16, bias (1, 8H) f32, whh (2H, 8H) bf16
      fcw (4H, C) f32, fcb (1, C) f32
      out (T*B, C)
      scratch: xg (T*B, 8H) f32, hcat (T*B, 4H) f32

    Gate lane layout (8H): [i_f,i_b | f_f,f_b | o_f,o_b | g_f,g_b], H lanes each
      -> sigmoid over lanes [0:6H], tanh over [6H:8H].
    State lane layout (2H): [fwd | bwd].
    Hidden scratch lane layout (4H):
      [h_f(t) | h_b(T-1-t) | h_f(T-1-t) | h_b(t)]   (row index = t*B + b)
    """
    H = RNN_HIDDEN_SIZE
    H2, H4, H6, G = 2 * H, 4 * H, 6 * H, 8 * H

    def kernel(*refs):
        pos = 0
        x_ref, m2_ref = refs[pos], refs[pos + 1]; pos += 2
        w0_ref, whh0_ref = refs[pos], refs[pos + 1]; pos += 2
        mids = []
        for _ in range(n_mid):
            mids.append(refs[pos:pos + 3]); pos += 3           # (w, bias, whh)
        fcw_ref, fcb_ref = refs[pos], refs[pos + 1]; pos += 2
        out_ref = refs[pos]; pos += 1
        xg_scr, h_scr = refs[pos], refs[pos + 1]

        def run_recurrence(whh_bf16):
            """Bidirectional LSTM over xg_scr (both directions per step)."""
            h = jnp.zeros((B, H2), jnp.float32)
            c = jnp.zeros((B, H2), jnp.float32)
            for s in range(T):                     # static, fully unrolled
                r = T - 1 - s                      # bwd direction's time index
                x_step = xg_scr[pl.ds(s * B, B), :]            # (B, 8H), pre-aligned
                gates = x_step + jnp.dot(h.astype(jnp.bfloat16), whh_bf16,
                                         preferred_element_type=jnp.float32)
                sig = jax.nn.sigmoid(gates[:, 0:H6])           # i, f, o gates
                g_g = jnp.tanh(gates[:, H6:G])                 # g gate only
                i_g = sig[:, 0:H2]
                f_g = sig[:, H2:H4]
                o_g = sig[:, H4:H6]
                c_new = f_g * c + i_g * g_g
                h_new = o_g * jnp.tanh(c_new)
                m2 = m2_ref[pl.ds(s * B, B), :]                # (B, 2H) per-dir mask
                inv = 1.0 - m2
                out = m2 * h_new                   # packed-seq: zero past seq end
                c = m2 * c_new + inv * c           # freeze state past seq end
                h = out + inv * h
                h_scr[pl.ds(s * B, B), 0:H2] = out     # [fwd aligned | bwd reversed]
                h_scr[pl.ds(r * B, B), H2:H4] = out    # [fwd reversed | bwd aligned]

        # ---------------- layer 0 (no BatchNorm): one batched projection ----------------
        xg_scr[...] = jnp.dot(x_ref[...].astype(jnp.bfloat16), w0_ref[...],
                              preferred_element_type=jnp.float32)
        run_recurrence(whh0_ref[...])

        # ------- layers 1..L-1 (eval BN folded): one batched projection each -------
        for (w_ref, b_ref, whh_ref) in mids:
            xg_scr[...] = (jnp.dot(h_scr[...].astype(jnp.bfloat16), w_ref[...],
                                   preferred_element_type=jnp.float32)
                           + b_ref[...])
            run_recurrence(whh_ref[...])

        # ------- FC head (BN folded) + pad zeroing + log_softmax, fully batched -------
        lg = (jnp.dot(h_scr[...], fcw_ref[...], preferred_element_type=jnp.float32)
              + fcb_ref[...])                      # (T*B, C)
        lg = lg * m2_ref[:, 0:1]                   # pad_packed_sequence -> zeros
        mx = jnp.max(lg, axis=-1, keepdims=True)
        sh = lg - mx
        lse = jnp.log(jnp.sum(jnp.exp(sh), axis=-1, keepdims=True))
        out_ref[...] = sh - lse                    # single store of all T*B rows

    return kernel


# ---------------- parameter construction (deterministic, synthetic) ----------------
def _bn_params(key, features):
    k1, k2, k3, k4 = jax.random.split(key, 4)
    return dict(
        gamma=1.0 + 0.1 * jax.random.normal(k1, (features,), jnp.float32),
        beta=0.1 * jax.random.normal(k2, (features,), jnp.float32),
        mean=0.1 * jax.random.normal(k3, (features,), jnp.float32),
        var=jax.random.uniform(k4, (features,), jnp.float32, 0.5, 1.5),
    )


def build_params(key):
    H = RNN_HIDDEN_SIZE
    layers = []
    for li in range(NB_LAYERS):
        in_size = RNN_INPUT_SIZE if li == 0 else NUM_DIRECTIONS * H
        key, kbn, k1, k2, k3, k4 = jax.random.split(key, 6)
        layers.append({
            "bn": None if li == 0 else _bn_params(kbn, in_size),
            "w_ih_fwd": 0.1 * jax.random.normal(k1, (4 * H, in_size), jnp.float32),
            "w_hh_fwd": 0.1 * jax.random.normal(k2, (4 * H, H), jnp.float32),
            "w_ih_bwd": 0.1 * jax.random.normal(k3, (4 * H, in_size), jnp.float32),
            "w_hh_bwd": 0.1 * jax.random.normal(k4, (4 * H, H), jnp.float32),
        })
    key, kbn, kw = jax.random.split(key, 3)
    return {
        "layers": layers,
        "fc_bn": _bn_params(kbn, NUM_DIRECTIONS * H),
        "fc_w": 0.1 * jax.random.normal(kw, (NUM_CLASSES + 1, NUM_DIRECTIONS * H),
                                        jnp.float32),
    }


# -------- weight packing: BN fold + gate reorder + fwd/bwd fusion (plain JAX, once) --------
def _bn_fold(bn):
    scale = bn["gamma"] / jnp.sqrt(bn["var"] + BN_EPS)
    shift = bn["beta"] - bn["mean"] * scale
    return scale, shift


def _scatter_gates(w_t, direction):
    """(F, 4H) torch gate order [i,f,g,o] -> (F, 8H) cols [i_f,i_b,f_f,f_b,o_f,o_b,g_f,g_b],
    with zeros in the other direction's columns."""
    H = RNN_HIDDEN_SIZE
    f_in = w_t.shape[0]
    w4 = w_t.reshape(f_in, 4, H)
    i_, f_, g_, o_ = w4[:, 0], w4[:, 1], w4[:, 2], w4[:, 3]
    z = jnp.zeros((f_in, H), w_t.dtype)
    if direction == 0:          # forward
        cols = [i_, z, f_, z, o_, z, g_, z]
    else:                       # backward
        cols = [z, i_, z, f_, z, o_, z, g_]
    return jnp.concatenate(cols, axis=1)


def _block_diag_whh(w_hh_f, w_hh_b):
    """(2H, 8H): state rows [h_f | h_b] feed only their own direction's gate columns."""
    return jnp.concatenate([_scatter_gates(w_hh_f.T, 0),
                            _scatter_gates(w_hh_b.T, 1)], axis=0)


def pack_params(params):
    """Fold eval-mode BatchNorm, reorder gates, fuse fwd/bwd operands, cast LSTM
    weights to bf16 (f32 MXU accumulation is kept in the kernel)."""
    H = RNN_HIDDEN_SIZE
    C = NUM_CLASSES + 1
    layers = params["layers"]
    packed = []

    # layer 0: input rows are [x(t) | x(T-1-t)]
    l0 = layers[0]
    w0 = jnp.concatenate([_scatter_gates(l0["w_ih_fwd"].T, 0),
                          _scatter_gates(l0["w_ih_bwd"].T, 1)], axis=0)   # (2I, 8H)
    packed += [w0.astype(jnp.bfloat16),
               _block_diag_whh(l0["w_hh_fwd"], l0["w_hh_bwd"]).astype(jnp.bfloat16)]

    # mid layers: input rows are [h_f(t) | h_b(T-1-t) | h_f(T-1-t) | h_b(t)]
    for layer in layers[1:]:
        scale, shift = _bn_fold(layer["bn"])                  # per input feature (2H,)
        wf_t = layer["w_ih_fwd"].T * scale[:, None]           # (2H, 4H)
        wb_t = layer["w_ih_bwd"].T * scale[:, None]
        w_mid = jnp.concatenate([
            _scatter_gates(wf_t[:H], 0),     # h_f(t)     -> fwd gates
            _scatter_gates(wb_t[H:], 1),     # h_b(T-1-t) -> bwd gates
            _scatter_gates(wb_t[:H], 1),     # h_f(T-1-t) -> bwd gates
            _scatter_gates(wf_t[H:], 0),     # h_b(t)     -> fwd gates
        ], axis=0)                                            # (4H, 8H)
        bias = (_scatter_gates((shift @ layer["w_ih_fwd"].T)[None, :], 0)
                + _scatter_gates((shift @ layer["w_ih_bwd"].T)[None, :], 1))  # (1, 8H)
        whh = _block_diag_whh(layer["w_hh_fwd"], layer["w_hh_bwd"])
        packed += [w_mid.astype(jnp.bfloat16), bias, whh.astype(jnp.bfloat16)]

    # FC head (BN folded); only the time-aligned columns of hcat contribute.
    scale, shift = _bn_fold(params["fc_bn"])
    fcwt = params["fc_w"].T * scale[:, None]                  # (2H, C)
    zH = jnp.zeros((H, C), jnp.float32)
    fcw = jnp.concatenate([fcwt[:H], zH, zH, fcwt[H:]], axis=0)   # (4H, C)
    fcb = (shift @ params["fc_w"].T)[None, :]                     # (1, C)
    packed += [fcw, fcb]
    return packed


# ---------------- forward pass: ONE pallas_call ----------------
def layered_rnn_forward(packed_params, x_bti, lengths):
    """x_bti: (B, T, I) zero-padded; lengths: (B,) descending. Returns (T, B, C)."""
    B, T, I = x_bti.shape
    H = RNN_HIDDEN_SIZE
    C = NUM_CLASSES + 1

    # [x(t) | x(T-1-t)] lanes so the batched layer-0 projection is already
    # time-aligned per direction (reversal never touches the serial chain).
    x_tbi = jnp.transpose(x_bti, (1, 0, 2)).astype(jnp.float32)          # (T, B, I)
    x_cat = jnp.concatenate([x_tbi, x_tbi[::-1]], axis=2).reshape(T * B, 2 * I)

    # per-direction validity mask over the fused state lanes, per recurrence step
    mask_tb = (jnp.arange(T)[:, None] < lengths[None, :]).astype(jnp.float32)   # (T, B)
    m_f = jnp.broadcast_to(mask_tb[:, :, None], (T, B, H))
    m_b = jnp.broadcast_to(mask_tb[::-1][:, :, None], (T, B, H))
    m2 = jnp.concatenate([m_f, m_b], axis=2).reshape(T * B, 2 * H)

    out_flat = pl.pallas_call(
        _make_kernel(T, B, NB_LAYERS - 1),
        out_shape=jax.ShapeDtypeStruct((T * B, C), jnp.float32),
        scratch_shapes=[
            pltpu.VMEM((T * B, 8 * H), jnp.float32),   # pre-aligned gate projections
            pltpu.VMEM((T * B, 4 * H), jnp.float32),   # hidden: aligned + reversed
        ],
    )(x_cat, m2, *packed_params)
    return out_flat.reshape(T, B, C)


# ---------------- demo ----------------
if __name__ == "__main__":
    key = jax.random.PRNGKey(0)
    kp, kx = jax.random.split(key)
    params = build_params(kp)
    packed = pack_params(params)

    lengths = jnp.array([T_MAX, T_MAX - 2], dtype=jnp.int32)             # descending
    x = jax.random.normal(kx, (BATCH, T_MAX, RNN_INPUT_SIZE), jnp.float32)
    # zero out padding beyond each sequence length (as a padded batch would be)
    valid = (jnp.arange(T_MAX)[None, :, None] < lengths[:, None, None]).astype(jnp.float32)
    x = x * valid

    out = layered_rnn_forward(packed, x, lengths)
    out = jax.block_until_ready(out)

    assert out.shape == (T_MAX, BATCH, NUM_CLASSES + 1)
    assert bool(jnp.all(jnp.isfinite(out)))
    # each row of the output must be a valid log-prob distribution
    row_sums = jnp.sum(jnp.exp(out), axis=-1)
    assert bool(jnp.all(jnp.abs(row_sums - 1.0) < 1e-3))
    # padded rows must be uniform (log_softmax of zeros), as pad_packed_sequence gives
    pad_rows = out[T_MAX - 2:, 1, :]
    assert bool(jnp.all(jnp.abs(pad_rows + jnp.log(NUM_CLASSES + 1.0)) < 1e-3))
    print("KERNEL_OK")
</pallas_src>

<mosaic_0001>
module attributes {stable_mosaic.version = 11 : i64} {
  func.func @kernel(%arg0: memref<16x16xf32, #tpu.memory_space<vmem>>, %arg1: memref<16x64xf32, #tpu.memory_space<vmem>>, %arg2: memref<16x256xbf16, #tpu.memory_space<vmem>>, %arg3: memref<64x256xbf16, #tpu.memory_space<vmem>>, %arg4: memref<128x256xbf16, #tpu.memory_space<vmem>>, %arg5: memref<1x256xf32, #tpu.memory_space<vmem>>, %arg6: memref<64x256xbf16, #tpu.memory_space<vmem>>, %arg7: memref<128x256xbf16, #tpu.memory_space<vmem>>, %arg8: memref<1x256xf32, #tpu.memory_space<vmem>>, %arg9: memref<64x256xbf16, #tpu.memory_space<vmem>>, %arg10: memref<128x16xf32, #tpu.memory_space<vmem>>, %arg11: memref<1x16xf32, #tpu.memory_space<vmem>>, %arg12: memref<16x16xf32, #tpu.memory_space<vmem>>, %arg13: memref<16x256xf32, #tpu.memory_space<vmem>>, %arg14: memref<16x128xf32, #tpu.memory_space<vmem>>) attributes {dimension_semantics = [], scalar_prefetch = 0 : i64, scratch_operands = 2 : i64, tpu.core_type = #tpu.core_type<tc>} {
    %c0 = arith.constant 0 : index
    %c0_0 = arith.constant 0 : index
    %0 = vector.load %arg0[%c0, %c0_0] : memref<16x16xf32, #tpu.memory_space<vmem>>, vector<16x16xf32>
    %1 = arith.truncf %0 : vector<16x16xf32> to vector<16x16xbf16>
    %c0_1 = arith.constant 0 : index
    %c0_2 = arith.constant 0 : index
    %2 = vector.load %arg2[%c0_1, %c0_2] : memref<16x256xbf16, #tpu.memory_space<vmem>>, vector<16x256xbf16>
    %cst = arith.constant dense<0.000000e+00> : vector<16x256xf32>
    %3 = tpu.matmul %1, %2, %cst {dimension_numbers = #tpu.dot_dimension_numbers<[1], [0], [0], [1], [0, 0, 1, 1], [], []>} : vector<16x16xbf16>, vector<16x256xbf16>, vector<16x256xf32> -> vector<16x256xf32>
    %c0_3 = arith.constant 0 : index
    %c0_4 = arith.constant 0 : index
    %4 = vector.load %arg13[%c0_3, %c0_4] : memref<16x256xf32, #tpu.memory_space<vmem>>, vector<16x256xf32>
    tpu.vector_store %arg13[%c0_3, %c0_4], %3 {strides = array<i32>} : memref<16x256xf32, #tpu.memory_space<vmem>>, vector<16x256xf32>,
    %c0_5 = arith.constant 0 : index
    %c0_6 = arith.constant 0 : index
    %5 = vector.load %arg3[%c0_5, %c0_6] : memref<64x256xbf16, #tpu.memory_space<vmem>>, vector<64x256xbf16>
    %cst_7 = arith.constant 0.000000e+00 : f32
    %6 = vector.broadcast %cst_7 : f32 to vector<2x64xf32>
    %cst_8 = arith.constant 0.000000e+00 : f32
    %7 = vector.broadcast %cst_8 : f32 to vector<2x64xf32>
    %c0_9 = arith.constant 0 : index
    %c0_10 = arith.constant 0 : index
    %8 = vector.load %arg13[%c0_9, %c0_10] : memref<16x256xf32, #tpu.memory_space<vmem>>, vector<2x256xf32>
    %9 = arith.truncf %6 : vector<2x64xf32> to vector<2x64xbf16>
    %cst_11 = arith.constant dense<0.000000e+00> : vector<2x256xf32>
    %10 = tpu.matmul %9, %5, %cst_11 {dimension_numbers = #tpu.dot_dimension_numbers<[1], [0], [0], [1], [0, 0, 1, 1], [], []>} : vector<2x64xbf16>, vector<64x256xbf16>, vector<2x256xf32> -> vector<2x256xf32>
    %11 = arith.addf %8, %10 : vector<2x256xf32>
    %12 = vector.extract_strided_slice %11 {offsets = [0, 0], sizes = [2, 192], strides = [1, 1]} : vector<2x256xf32> to vector<2x192xf32>
    %13 = arith.negf %12 : vector<2x192xf32>
    %14 = math.exp %13 : vector<2x192xf32>
    %cst_12 = arith.constant 1.000000e+00 : f32
    %15 = vector.broadcast %cst_12 : f32 to vector<2x192xf32>
    %16 = arith.addf %15, %14 : vector<2x192xf32>
    %17 = arith.divf %15, %16 : vector<2x192xf32>
    %18 = vector.extract_strided_slice %11 {offsets = [0, 192], sizes = [2, 64], strides = [1, 1]} : vector<2x256xf32> to vector<2x64xf32>
    %19 = math.tanh %18 : vector<2x64xf32>
    %20 = vector.extract_strided_slice %17 {offsets = [0, 0], sizes = [2, 64], strides = [1, 1]} : vector<2x192xf32> to vector<2x64xf32>
    %21 = vector.extract_strided_slice %17 {offsets = [0, 64], sizes = [2, 64], strides = [1, 1]} : vector<2x192xf32> to vector<2x64xf32>
    %22 = vector.extract_strided_slice %17 {offsets = [0, 128], sizes = [2, 64], strides = [1, 1]} : vector<2x192xf32> to vector<2x64xf32>
    %23 = arith.mulf %21, %7 : vector<2x64xf32>
    %24 = arith.mulf %20, %19 : vector<2x64xf32>
    %25 = arith.addf %23, %24 : vector<2x64xf32>
    %26 = math.tanh %25 : vector<2x64xf32>
    %27 = arith.mulf %22, %26 : vector<2x64xf32>
    %c0_13 = arith.constant 0 : index
    %c0_14 = arith.constant 0 : index
    %28 = vector.load %arg1[%c0_13, %c0_14] : memref<16x64xf32, #tpu.memory_space<vmem>>, vector<2x64xf32>
    %cst_15 = arith.constant 1.000000e+00 : f32
    %29 = vector.broadcast %cst_15 : f32 to vector<2x64xf32>
    %30 = arith.subf %29, %28 : vector<2x64xf32>
    %31 = arith.mulf %28, %27 : vector<2x64xf32>
    %32 = arith.mulf %28, %25 : vector<2x64xf32>
    %33 = arith.mulf %30, %7 : vector<2x64xf32>
    %34 = arith.addf %32, %33 : vector<2x64xf32>
    %35 = arith.mulf %30, %6 : vector<2x64xf32>
    %36 = arith.addf %31, %35 : vector<2x64xf32>
    %c0_16 = arith.constant 0 : index
    %c0_17 = arith.constant 0 : index
    %37 = vector.load %arg14[%c0_16, %c0_17] : memref<16x128xf32, #tpu.memory_space<vmem>>, vector<2x64xf32>
    tpu.vector_store %arg14[%c0_16, %c0_17], %31 {strides = array<i32>} : memref<16x128xf32, #tpu.memory_space<vmem>>, vector<2x64xf32>,
    %c14 = arith.constant 14 : index
    %c64 = arith.constant 64 : index
    %38 = vector.load %arg14[%c14, %c64] : memref<16x128xf32, #tpu.memory_space<vmem>>, vector<2x64xf32>
    tpu.vector_store %arg14[%c14, %c64], %31 {strides = array<i32>} : memref<16x128xf32, #tpu.memory_space<vmem>>, vector<2x64xf32>,
    %c2 = arith.constant 2 : index
    %c0_18 = arith.constant 0 : index
    %39 = vector.load %arg13[%c2, %c0_18] : memref<16x256xf32, #tpu.memory_space<vmem>>, vector<2x256xf32>
    %40 = arith.truncf %36 : vector<2x64xf32> to vector<2x64xbf16>
    %cst_19 = arith.constant dense<0.000000e+00> : vector<2x256xf32>
    %41 = tpu.matmul %40, %5, %cst_19 {dimension_numbers = #tpu.dot_dimension_numbers<[1], [0], [0], [1], [0, 0, 1, 1], [], []>} : vector<2x64xbf16>, vector<64x256xbf16>, vector<2x256xf32> -> vector<2x256xf32>
    %42 = arith.addf %39, %41 : vector<2x256xf32>
    %43 = vector.extract_strided_slice %42 {offsets = [0, 0], sizes = [2, 192], strides = [1, 1]} : vector<2x256xf32> to vector<2x192xf32>
    %44 = arith.negf %43 : vector<2x192xf32>
    %45 = math.exp %44 : vector<2x192xf32>
    %cst_20 = arith.constant 1.000000e+00 : f32
    %46 = vector.broadcast %cst_20 : f32 to vector<2x192xf32>
    %47 = arith.addf %46, %45 : vector<2x192xf32>
    %48 = arith.divf %46, %47 : vector<2x192xf32>
    %49 = vector.extract_strided_slice %42 {offsets = [0, 192], sizes = [2, 64], strides = [1, 1]} : vector<2x256xf32> to vector<2x64xf32>
    %50 = math.tanh %49 : vector<2x64xf32>
    %51 = vector.extract_strided_slice %48 {offsets = [0, 0], sizes = [2, 64], strides = [1, 1]} : vector<2x192xf32> to vector<2x64xf32>
    %52 = vector.extract_strided_slice %48 {offsets = [0, 64], sizes = [2, 64], strides = [1, 1]} : vector<2x192xf32> to vector<2x64xf32>
    %53 = vector.extract_strided_slice %48 {offsets = [0, 128], sizes = [2, 64], strides = [1, 1]} : vector<2x192xf32> to vector<2x64xf32>
    %54 = arith.mulf %52, %34 : vector<2x64xf32>
    %55 = arith.mulf %51, %50 : vector<2x64xf32>
    %56 = arith.addf %54, %55 : vector<2x64xf32>
    %57 = math.tanh %56 : vector<2x64xf32>
    %58 = arith.mulf %53, %57 : vector<2x64xf32>
    %c2_21 = arith.constant 2 : index
    %c0_22 = arith.constant 0 : index
    %59 = vector.load %arg1[%c2_21, %c0_22] : memref<16x64xf32, #tpu.memory_space<vmem>>, vector<2x64xf32>
    %cst_23 = arith.constant 1.000000e+00 : f32
    %60 = vector.broadcast %cst_23 : f32 to vector<2x64xf32>
    %61 = arith.subf %60, %59 : vector<2x64xf32>
    %62 = arith.mulf %59, %58 : vector<2x64xf32>
    %63 = arith.mulf %59, %56 : vector<2x64xf32>
    %64 = arith.mulf %61, %34 : vector<2x64xf32>
    %65 = arith.addf %63, %64 : vector<2x64xf32>
    %66 = arith.mulf %61, %36 : vector<2x64xf32>
    %67 = arith.addf %62, %66 : vector<2x64xf32>
    %c2_24 = arith.constant 2 : index
    %c0_25 = arith.constant 0 : index
    %68 = vector.load %arg14[%c2_24, %c0_25] : memref<16x128xf32, #tpu.memory_space<vmem>>, vector<2x64xf32>
    tpu.vector_store %arg14[%c2_24, %c0_25], %62 {strides = array<i32>} : memref<16x128xf32, #tpu.memory_space<vmem>>, vector<2x64xf32>,
    %c12 = arith.constant 12 : index
    %c64_26 = arith.constant 64 : index
    %69 = vector.load %arg14[%c12, %c64_26] : memref<16x128xf32, #tpu.memory_space<vmem>>, vector<2x64xf32>
    tpu.vector_store %arg14[%c12, %c64_26], %62 {strides = array<i32>} : memref<16x128xf32, #tpu.memory_space<vmem>>, vector<2x64xf32>,
    %c4 = arith.constant 4 : index
    %c0_27 = arith.constant 0 : index
    %70 = vector.load %arg13[%c4, %c0_27] : memref<16x256xf32, #tpu.memory_space<vmem>>, vector<2x256xf32>
    %71 = arith.truncf %67 : vector<2x64xf32> to vector<2x64xbf16>
    %cst_28 = arith.constant dense<0.000000e+00> : vector<2x256xf32>
    %72 = tpu.matmul %71, %5, %cst_28 {dimension_numbers = #tpu.dot_dimension_numbers<[1], [0], [0], [1], [0, 0, 1, 1], [], []>} : vector<2x64xbf16>, vector<64x256xbf16>, vector<2x256xf32> -> vector<2x256xf32>
    %73 = arith.addf %70, %72 : vector<2x256xf32>
    %74 = vector.extract_strided_slice %73 {offsets = [0, 0], sizes = [2, 192], strides = [1, 1]} : vector<2x256xf32> to vector<2x192xf32>
    %75 = arith.negf %74 : vector<2x192xf32>
    %76 = math.exp %75 : vector<2x192xf32>
    %cst_29 = arith.constant 1.000000e+00 : f32
    %77 = vector.broadcast %cst_29 : f32 to vector<2x192xf32>
    %78 = arith.addf %77, %76 : vector<2x192xf32>
    %79 = arith.divf %77, %78 : vector<2x192xf32>
    %80 = vector.extract_strided_slice %73 {offsets = [0, 192], sizes = [2, 64], strides = [1, 1]} : vector<2x256xf32> to vector<2x64xf32>
    %81 = math.tanh %80 : vector<2x64xf32>
    %82 = vector.extract_strided_slice %79 {offsets = [0, 0], sizes = [2, 64], strides = [1, 1]} : vector<2x192xf32> to vector<2x64xf32>
    %83 = vector.extract_strided_slice %79 {offsets = [0, 64], sizes = [2, 64], strides = [1, 1]} : vector<2x192xf32> to vector<2x64xf32>
    %84 = vector.extract_strided_slice %79 {offsets = [0, 128], sizes = [2, 64], strides = [1, 1]} : vector<2x192xf32> to vector<2x64xf32>
    %85 = arith.mulf %83, %65 : vector<2x64xf32>
    %86 = arith.mulf %82, %81 : vector<2x64xf32>
    %87 = arith.addf %85, %86 : vector<2x64xf32>
    %88 = math.tanh %87 : vector<2x64xf32>
    %89 = arith.mulf %84, %88 : vector<2x64xf32>
    %c4_30 = arith.constant 4 : index
    %c0_31 = arith.constant 0 : index
    %90 = vector.load %arg1[%c4_30, %c0_31] : memref<16x64xf32, #tpu.memory_space<vmem>>, vector<2x64xf32>
    %cst_32 = arith.constant 1.000000e+00 : f32
    %91 = vector.broadcast %cst_32 : f32 to vector<2x64xf32>
    %92 = arith.subf %91, %90 : vector<2x64xf32>
    %93 = arith.mulf %90, %89 : vector<2x64xf32>
    %94 = arith.mulf %90, %87 : vector<2x64xf32>
    %95 = arith.mulf %92, %65 : vector<2x64xf32>
    %96 = arith.addf %94, %95 : vector<2x64xf32>
    %97 = arith.mulf %92, %67 : vector<2x64xf32>
    %98 = arith.addf %93, %97 : vector<2x64xf32>
    %c4_33 = arith.constant 4 : index
    %c0_34 = arith.constant 0 : index
    %99 = vector.load %arg14[%c4_33, %c0_34] : memref<16x128xf32, #tpu.memory_space<vmem>>, vector<2x64xf32>
    tpu.vector_store %arg14[%c4_33, %c0_34], %93 {strides = array<i32>} : memref<16x128xf32, #tpu.memory_space<vmem>>, vector<2x64xf32>,
    %c10 = arith.constant 10 : index
    %c64_35 = arith.constant 64 : index
    %100 = vector.load %arg14[%c10, %c64_35] : memref<16x128xf32, #tpu.memory_space<vmem>>, vector<2x64xf32>
    tpu.vector_store %arg14[%c10, %c64_35], %93 {strides = array<i32>} : memref<16x128xf32, #tpu.memory_space<vmem>>, vector<2x64xf32>,
    %c6 = arith.constant 6 : index
    %c0_36 = arith.constant 0 : index
    %101 = vector.load %arg13[%c6, %c0_36] : memref<16x256xf32, #tpu.memory_space<vmem>>, vector<2x256xf32>
    %102 = arith.truncf %98 : vector<2x64xf32> to vector<2x64xbf16>
    %cst_37 = arith.constant dense<0.000000e+00> : vector<2x256xf32>
    %103 = tpu.matmul %102, %5, %cst_37 {dimension_numbers = #tpu.dot_dimension_numbers<[1], [0], [0], [1], [0, 0, 1, 1], [], []>} : vector<2x64xbf16>, vector<64x256xbf16>, vector<2x256xf32> -> vector<2x256xf32>
    %104 = arith.addf %101, %103 : vector<2x256xf32>
    %105 = vector.extract_strided_slice %104 {offsets = [0, 0], sizes = [2, 192], strides = [1, 1]} : vector<2x256xf32> to vector<2x192xf32>
    %106 = arith.negf %105 : vector<2x192xf32>
    %107 = math.exp %106 : vector<2x192xf32>
    %cst_38 = arith.constant 1.000000e+00 : f32
    %108 = vector.broadcast %cst_38 : f32 to vector<2x192xf32>
    %109 = arith.addf %108, %107 : vector<2x192xf32>
    %110 = arith.divf %108, %109 : vector<2x192xf32>
    %111 = vector.extract_strided_slice %104 {offsets = [0, 192], sizes = [2, 64], strides = [1, 1]} : vector<2x256xf32> to vector<2x64xf32>
    %112 = math.tanh %111 : vector<2x64xf32>
    %113 = vector.extract_strided_slice %110 {offsets = [0, 0], sizes = [2, 64], strides = [1, 1]} : vector<2x192xf32> to vector<2x64xf32>
    %114 = vector.extract_strided_slice %110 {offsets = [0, 64], sizes = [2, 64], strides = [1, 1]} : vector<2x192xf32> to vector<2x64xf32>
    %115 = vector.extract_strided_slice %110 {offsets = [0, 128], sizes = [2, 64], strides = [1, 1]} : vector<2x192xf32> to vector<2x64xf32>
    %116 = arith.mulf %114, %96 : vector<2x64xf32>
    %117 = arith.mulf %113, %112 : vector<2x64xf32>
    %118 = arith.addf %116, %117 : vector<2x64xf32>
    %119 = math.tanh %118 : vector<2x64xf32>
    %120 = arith.mulf %115, %119 : vector<2x64xf32>
    %c6_39 = arith.constant 6 : index
    %c0_40 = arith.constant 0 : index
    %121 = vector.load %arg1[%c6_39, %c0_40] : memref<16x64xf32, #tpu.memory_space<vmem>>, vector<2x64xf32>
    %cst_41 = arith.constant 1.000000e+00 : f32
    %122 = vector.broadcast %cst_41 : f32 to vector<2x64xf32>
    %123 = arith.subf %122, %121 : vector<2x64xf32>
    %124 = arith.mulf %121, %120 : vector<2x64xf32>
    %125 = arith.mulf %121, %118 : vector<2x64xf32>
    %126 = arith.mulf %123, %96 : vector<2x64xf32>
    %127 = arith.addf %125, %126 : vector<2x64xf32>
    %128 = arith.mulf %123, %98 : vector<2x64xf32>
    %129 = arith.addf %124, %128 : vector<2x64xf32>
    %c6_42 = arith.constant 6 : index
    %c0_43 = arith.constant 0 : index
    %130 = vector.load %arg14[%c6_42, %c0_43] : memref<16x128xf32, #tpu.memory_space<vmem>>, vector<2x64xf32>
    tpu.vector_store %arg14[%c6_42, %c0_43], %124 {strides = array<i32>} : memref<16x128xf32, #tpu.memory_space<vmem>>, vector<2x64xf32>,
    %c8 = arith.constant 8 : index
    %c64_44 = arith.constant 64 : index
    %131 = vector.load %arg14[%c8, %c64_44] : memref<16x128xf32, #tpu.memory_space<vmem>>, vector<2x64xf32>
    tpu.vector_store %arg14[%c8, %c64_44], %124 {strides = array<i32>} : memref<16x128xf32, #tpu.memory_space<vmem>>, vector<2x64xf32>,
    %c8_45 = arith.constant 8 : index
    %c0_46 = arith.constant 0 : index
    %132 = vector.load %arg13[%c8_45, %c0_46] : memref<16x256xf32, #tpu.memory_space<vmem>>, vector<2x256xf32>
    %133 = arith.truncf %129 : vector<2x64xf32> to vector<2x64xbf16>
    %cst_47 = arith.constant dense<0.000000e+00> : vector<2x256xf32>
    %134 = tpu.matmul %133, %5, %cst_47 {dimension_numbers = #tpu.dot_dimension_numbers<[1], [0], [0], [1], [0, 0, 1, 1], [], []>} : vector<2x64xbf16>, vector<64x256xbf16>, vector<2x256xf32> -> vector<2x256xf32>
    %135 = arith.addf %132, %134 : vector<2x256xf32>
    %136 = vector.extract_strided_slice %135 {offsets = [0, 0], sizes = [2, 192], strides = [1, 1]} : vector<2x256xf32> to vector<2x192xf32>
    %137 = arith.negf %136 : vector<2x192xf32>
    %138 = math.exp %137 : vector<2x192xf32>
    %cst_48 = arith.constant 1.000000e+00 : f32
    %139 = vector.broadcast %cst_48 : f32 to vector<2x192xf32>
    %140 = arith.addf %139, %138 : vector<2x192xf32>
    %141 = arith.divf %139, %140 : vector<2x192xf32>
    %142 = vector.extract_strided_slice %135 {offsets = [0, 192], sizes = [2, 64], strides = [1, 1]} : vector<2x256xf32> to vector<2x64xf32>
    %143 = math.tanh %142 : vector<2x64xf32>
    %144 = vector.extract_strided_slice %141 {offsets = [0, 0], sizes = [2, 64], strides = [1, 1]} : vector<2x192xf32> to vector<2x64xf32>
    %145 = vector.extract_strided_slice %141 {offsets = [0, 64], sizes = [2, 64], strides = [1, 1]} : vector<2x192xf32> to vector<2x64xf32>
    %146 = vector.extract_strided_slice %141 {offsets = [0, 128], sizes = [2, 64], strides = [1, 1]} : vector<2x192xf32> to vector<2x64xf32>
    %147 = arith.mulf %145, %127 : vector<2x64xf32>
    %148 = arith.mulf %144, %143 : vector<2x64xf32>
    %149 = arith.addf %147, %148 : vector<2x64xf32>
    %150 = math.tanh %149 : vector<2x64xf32>
    %151 = arith.mulf %146, %150 : vector<2x64xf32>
    %c8_49 = arith.constant 8 : index
    %c0_50 = arith.constant 0 : index
    %152 = vector.load %arg1[%c8_49, %c0_50] : memref<16x64xf32, #tpu.memory_space<vmem>>, vector<2x64xf32>
    %cst_51 = arith.constant 1.000000e+00 : f32
    %153 = vector.broadcast %cst_51 : f32 to vector<2x64xf32>
    %154 = arith.subf %153, %152 : vector<2x64xf32>
    %155 = arith.mulf %152, %151 : vector<2x64xf32>
    %156 = arith.mulf %152, %149 : vector<2x64xf32>
    %157 = arith.mulf %154, %127 : vector<2x64xf32>
    %158 = arith.addf %156, %157 : vector<2x64xf32>
    %159 = arith.mulf %154, %129 : vector<2x64xf32>
    %160 = arith.addf %155, %159 : vector<2x64xf32>
    %c8_52 = arith.constant 8 : index
    %c0_53 = arith.constant 0 : index
    %161 = vector.load %arg14[%c8_52, %c0_53] : memref<16x128xf32, #tpu.memory_space<vmem>>, vector<2x64xf32>
    tpu.vector_store %arg14[%c8_52, %c0_53], %155 {strides = array<i32>} : memref<16x128xf32, #tpu.memory_space<vmem>>, vector<2x64xf32>,
    %c6_54 = arith.constant 6 : index
    %c64_55 = arith.constant 64 : index
    %162 = vector.load %arg14[%c6_54, %c64_55] : memref<16x128xf32, #tpu.memory_space<vmem>>, vector<2x64xf32>
    tpu.vector_store %arg14[%c6_54, %c64_55], %155 {strides = array<i32>} : memref<16x128xf32, #tpu.memory_space<vmem>>, vector<2x64xf32>,
    %c10_56 = arith.constant 10 : index
    %c0_57 = arith.constant 0 : index
    %163 = vector.load %arg13[%c10_56, %c0_57] : memref<16x256xf32, #tpu.memory_space<vmem>>, vector<2x256xf32>
    %164 = arith.truncf %160 : vector<2x64xf32> to vector<2x64xbf16>
    %cst_58 = arith.constant dense<0.000000e+00> : vector<2x256xf32>
    %165 = tpu.matmul %164, %5, %cst_58 {dimension_numbers = #tpu.dot_dimension_numbers<[1], [0], [0], [1], [0, 0, 1, 1], [], []>} : vector<2x64xbf16>, vector<64x256xbf16>, vector<2x256xf32> -> vector<2x256xf32>
    %166 = arith.addf %163, %165 : vector<2x256xf32>
    %167 = vector.extract_strided_slice %166 {offsets = [0, 0], sizes = [2, 192], strides = [1, 1]} : vector<2x256xf32> to vector<2x192xf32>
    %168 = arith.negf %167 : vector<2x192xf32>
    %169 = math.exp %168 : vector<2x192xf32>
    %cst_59 = arith.constant 1.000000e+00 : f32
    %170 = vector.broadcast %cst_59 : f32 to vector<2x192xf32>
    %171 = arith.addf %170, %169 : vector<2x192xf32>
    %172 = arith.divf %170, %171 : vector<2x192xf32>
    %173 = vector.extract_strided_slice %166 {offsets = [0, 192], sizes = [2, 64], strides = [1, 1]} : vector<2x256xf32> to vector<2x64xf32>
    %174 = math.tanh %173 : vector<2x64xf32>
    %175 = vector.extract_strided_slice %172 {offsets = [0, 0], sizes = [2, 64], strides = [1, 1]} : vector<2x192xf32> to vector<2x64xf32>
    %176 = vector.extract_strided_slice %172 {offsets = [0, 64], sizes = [2, 64], strides = [1, 1]} : vector<2x192xf32> to vector<2x64xf32>
    %177 = vector.extract_strided_slice %172 {offsets = [0, 128], sizes = [2, 64], strides = [1, 1]} : vector<2x192xf32> to vector<2x64xf32>
    %178 = arith.mulf %176, %158 : vector<2x64xf32>
    %179 = arith.mulf %175, %174 : vector<2x64xf32>
    %180 = arith.addf %178, %179 : vector<2x64xf32>
    %181 = math.tanh %180 : vector<2x64xf32>
    %182 = arith.mulf %177, %181 : vector<2x64xf32>
    %c10_60 = arith.constant 10 : index
    %c0_61 = arith.constant 0 : index
    %183 = vector.load %arg1[%c10_60, %c0_61] : memref<16x64xf32, #tpu.memory_space<vmem>>, vector<2x64xf32>
    %cst_62 = arith.constant 1.000000e+00 : f32
    %184 = vector.broadcast %cst_62 : f32 to vector<2x64xf32>
    %185 = arith.subf %184, %183 : vector<2x64xf32>
    %186 = arith.mulf %183, %182 : vector<2x64xf32>
    %187 = arith.mulf %183, %180 : vector<2x64xf32>
    %188 = arith.mulf %185, %158 : vector<2x64xf32>
    %189 = arith.addf %187, %188 : vector<2x64xf32>
    %190 = arith.mulf %185, %160 : vector<2x64xf32>
    %191 = arith.addf %186, %190 : vector<2x64xf32>
    %c10_63 = arith.constant 10 : index
    %c0_64 = arith.constant 0 : index
    %192 = vector.load %arg14[%c10_63, %c0_64] : memref<16x128xf32, #tpu.memory_space<vmem>>, vector<2x64xf32>
    tpu.vector_store %arg14[%c10_63, %c0_64], %186 {strides = array<i32>} : memref<16x128xf32, #tpu.memory_space<vmem>>, vector<2x64xf32>,
    %c4_65 = arith.constant 4 : index
    %c64_66 = arith.constant 64 : index
    %193 = vector.load %arg14[%c4_65, %c64_66] : memref<16x128xf32, #tpu.memory_space<vmem>>, vector<2x64xf32>
    tpu.vector_store %arg14[%c4_65, %c64_66], %186 {strides = array<i32>} : memref<16x128xf32, #tpu.memory_space<vmem>>, vector<2x64xf32>,
    %c12_67 = arith.constant 12 : index
    %c0_68 = arith.constant 0 : index
    %194 = vector.load %arg13[%c12_67, %c0_68] : memref<16x256xf32, #tpu.memory_space<vmem>>, vector<2x256xf32>
    %195 = arith.truncf %191 : vector<2x64xf32> to vector<2x64xbf16>
    %cst_69 = arith.constant dense<0.000000e+00> : vector<2x256xf32>
    %196 = tpu.matmul %195, %5, %cst_69 {dimension_numbers = #tpu.dot_dimension_numbers<[1], [0], [0], [1], [0, 0, 1, 1], [], []>} : vector<2x64xbf16>, vector<64x256xbf16>, vector<2x256xf32> -> vector<2x256xf32>
    %197 = arith.addf %194, %196 : vector<2x256xf32>
    %198 = vector.extract_strided_slice %197 {offsets = [0, 0], sizes = [2, 192], strides = [1, 1]} : vector<2x256xf32> to vector<2x192xf32>
    %199 = arith.negf %198 : vector<2x192xf32>
    %200 = math.exp %199 : vector<2x192xf32>
    %cst_70 = arith.constant 1.000000e+00 : f32
    %201 = vector.broadcast %cst_70 : f32 to vector<2x192xf32>
    %202 = arith.addf %201, %200 : vector<2x192xf32>
    %203 = arith.divf %201, %202 : vector<2x192xf32>
    %204 = vector.extract_strided_slice %197 {offsets = [0, 192], sizes = [2, 64], strides = [1, 1]} : vector<2x256xf32> to vector<2x64xf32>
    %205 = math.tanh %204 : vector<2x64xf32>
    %206 = vector.extract_strided_slice %203 {offsets = [0, 0], sizes = [2, 64], strides = [1, 1]} : vector<2x192xf32> to vector<2x64xf32>
    %207 = vector.extract_strided_slice %203 {offsets = [0, 64], sizes = [2, 64], strides = [1, 1]} : vector<2x192xf32> to vector<2x64xf32>
    %208 = vector.extract_strided_slice %203 {offsets = [0, 128], sizes = [2, 64], strides = [1, 1]} : vector<2x192xf32> to vector<2x64xf32>
    %209 = arith.mulf %207, %189 : vector<2x64xf32>
    %210 = arith.mulf %206, %205 : vector<2x64xf32>
    %211 = arith.addf %209, %210 : vector<2x64xf32>
    %212 = math.tanh %211 : vector<2x64xf32>
    %213 = arith.mulf %208, %212 : vector<2x64xf32>
    %c12_71 = arith.constant 12 : index
    %c0_72 = arith.constant 0 : index
    %214 = vector.load %arg1[%c12_71, %c0_72] : memref<16x64xf32, #tpu.memory_space<vmem>>, vector<2x64xf32>
    %cst_73 = arith.constant 1.000000e+00 : f32
    %215 = vector.broadcast %cst_73 : f32 to vector<2x64xf32>
    %216 = arith.subf %215, %214 : vector<2x64xf32>
    %217 = arith.mulf %214, %213 : vector<2x64xf32>
    %218 = arith.mulf %214, %211 : vector<2x64xf32>
    %219 = arith.mulf %216, %189 : vector<2x64xf32>
    %220 = arith.addf %218, %219 : vector<2x64xf32>
    %221 = arith.mulf %216, %191 : vector<2x64xf32>
    %222 = arith.addf %217, %221 : vector<2x64xf32>
    %c12_74 = arith.constant 12 : index
    %c0_75 = arith.constant 0 : index
    %223 = vector.load %arg14[%c12_74, %c0_75] : memref<16x128xf32, #tpu.memory_space<vmem>>, vector<2x64xf32>
    tpu.vector_store %arg14[%c12_74, %c0_75], %217 {strides = array<i32>} : memref<16x128xf32, #tpu.memory_space<vmem>>, vector<2x64xf32>,
    %c2_76 = arith.constant 2 : index
    %c64_77 = arith.constant 64 : index
    %224 = vector.load %arg14[%c2_76, %c64_77] : memref<16x128xf32, #tpu.memory_space<vmem>>, vector<2x64xf32>
    tpu.vector_store %arg14[%c2_76, %c64_77], %217 {strides = array<i32>} : memref<16x128xf32, #tpu.memory_space<vmem>>, vector<2x64xf32>,
    %c14_78 = arith.constant 14 : index
    %c0_79 = arith.constant 0 : index
    %225 = vector.load %arg13[%c14_78, %c0_79] : memref<16x256xf32, #tpu.memory_space<vmem>>, vector<2x256xf32>
    %226 = arith.truncf %222 : vector<2x64xf32> to vector<2x64xbf16>
    %cst_80 = arith.constant dense<0.000000e+00> : vector<2x256xf32>
    %227 = tpu.matmul %226, %5, %cst_80 {dimension_numbers = #tpu.dot_dimension_numbers<[1], [0], [0], [1], [0, 0, 1, 1], [], []>} : vector<2x64xbf16>, vector<64x256xbf16>, vector<2x256xf32> -> vector<2x256xf32>
    %228 = arith.addf %225, %227 : vector<2x256xf32>
    %229 = vector.extract_strided_slice %228 {offsets = [0, 0], sizes = [2, 192], strides = [1, 1]} : vector<2x256xf32> to vector<2x192xf32>
    %230 = arith.negf %229 : vector<2x192xf32>
    %231 = math.exp %230 : vector<2x192xf32>
    %cst_81 = arith.constant 1.000000e+00 : f32
    %232 = vector.broadcast %cst_81 : f32 to vector<2x192xf32>
    %233 = arith.addf %232, %231 : vector<2x192xf32>
    %234 = arith.divf %232, %233 : vector<2x192xf32>
    %235 = vector.extract_strided_slice %228 {offsets = [0, 192], sizes = [2, 64], strides = [1, 1]} : vector<2x256xf32> to vector<2x64xf32>
    %236 = math.tanh %235 : vector<2x64xf32>
    %237 = vector.extract_strided_slice %234 {offsets = [0, 0], sizes = [2, 64], strides = [1, 1]} : vector<2x192xf32> to vector<2x64xf32>
    %238 = vector.extract_strided_slice %234 {offsets = [0, 64], sizes = [2, 64], strides = [1, 1]} : vector<2x192xf32> to vector<2x64xf32>
    %239 = vector.extract_strided_slice %234 {offsets = [0, 128], sizes = [2, 64], strides = [1, 1]} : vector<2x192xf32> to vector<2x64xf32>
    %240 = arith.mulf %238, %220 : vector<2x64xf32>
    %241 = arith.mulf %237, %236 : vector<2x64xf32>
    %242 = arith.addf %240, %241 : vector<2x64xf32>
    %243 = math.tanh %242 : vector<2x64xf32>
    %244 = arith.mulf %239, %243 : vector<2x64xf32>
    %c14_82 = arith.constant 14 : index
    %c0_83 = arith.constant 0 : index
    %245 = vector.load %arg1[%c14_82, %c0_83] : memref<16x64xf32, #tpu.memory_space<vmem>>, vector<2x64xf32>
    %246 = arith.mulf %245, %244 : vector<2x64xf32>
    %c14_84 = arith.constant 14 : index
    %c0_85 = arith.constant 0 : index
    %247 = vector.load %arg14[%c14_84, %c0_85] : memref<16x128xf32, #tpu.memory_space<vmem>>, vector<2x64xf32>
    tpu.vector_store %arg14[%c14_84, %c0_85], %246 {strides = array<i32>} : memref<16x128xf32, #tpu.memory_space<vmem>>, vector<2x64xf32>,
    %c0_86 = arith.constant 0 : index
    %c64_87 = arith.constant 64 : index
    %248 = vector.load %arg14[%c0_86, %c64_87] : memref<16x128xf32, #tpu.memory_space<vmem>>, vector<2x64xf32>
    tpu.vector_store %arg14[%c0_86, %c64_87], %246 {strides = array<i32>} : memref<16x128xf32, #tpu.memory_space<vmem>>, vector<2x64xf32>,
    %c0_88 = arith.constant 0 : index
    %c0_89 = arith.constant 0 : index
    %249 = vector.load %arg14[%c0_88, %c0_89] : memref<16x128xf32, #tpu.memory_space<vmem>>, vector<16x128xf32>
    %250 = arith.truncf %249 : vector<16x128xf32> to vector<16x128xbf16>
    %c0_90 = arith.constant 0 : index
    %c0_91 = arith.constant 0 : index
    %251 = vector.load %arg4[%c0_90, %c0_91] : memref<128x256xbf16, #tpu.memory_space<vmem>>, vector<128x256xbf16>
    %cst_92 = arith.constant dense<0.000000e+00> : vector<16x256xf32>
    %252 = tpu.matmul %250, %251, %cst_92 {dimension_numbers = #tpu.dot_dimension_numbers<[1], [0], [0], [1], [0, 0, 1, 1], [], []>} : vector<16x128xbf16>, vector<128x256xbf16>, vector<16x256xf32> -> vector<16x256xf32>
    %c0_93 = arith.constant 0 : index
    %c0_94 = arith.constant 0 : index
    %253 = vector.load %arg5[%c0_93, %c0_94] : memref<1x256xf32, #tpu.memory_space<vmem>>, vector<1x256xf32>
    %254 = vector.broadcast %253 : vector<1x256xf32> to vector<16x256xf32>
    %255 = arith.addf %252, %254 : vector<16x256xf32>
    %c0_95 = arith.constant 0 : index
    %c0_96 = arith.constant 0 : index
    %256 = vector.load %arg13[%c0_95, %c0_96] : memref<16x256xf32, #tpu.memory_space<vmem>>, vector<16x256xf32>
    tpu.vector_store %arg13[%c0_95, %c0_96], %255 {strides = array<i32>} : memref<16x256xf32, #tpu.memory_space<vmem>>, vector<16x256xf32>,
    %c0_97 = arith.constant 0 : index
    %c0_98 = arith.constant 0 : index
    %257 = vector.load %arg6[%c0_97, %c0_98] : memref<64x256xbf16, #tpu.memory_space<vmem>>, vector<64x256xbf16>
    %cst_99 = arith.constant 0.000000e+00 : f32
    %258 = vector.broadcast %cst_99 : f32 to vector<2x64xf32>
    %cst_100 = arith.constant 0.000000e+00 : f32
    %259 = vector.broadcast %cst_100 : f32 to vector<2x64xf32>
    %c0_101 = arith.constant 0 : index
    %c0_102 = arith.constant 0 : index
    %260 = vector.load %arg13[%c0_101, %c0_102] : memref<16x256xf32, #tpu.memory_space<vmem>>, vector<2x256xf32>
    %261 = arith.truncf %258 : vector<2x64xf32> to vector<2x64xbf16>
    %cst_103 = arith.constant dense<0.000000e+00> : vector<2x256xf32>
    %262 = tpu.matmul %261, %257, %cst_103 {dimension_numbers = #tpu.dot_dimension_numbers<[1], [0], [0], [1], [0, 0, 1, 1], [], []>} : vector<2x64xbf16>, vector<64x256xbf16>, vector<2x256xf32> -> vector<2x256xf32>
    %263 = arith.addf %260, %262 : vector<2x256xf32>
    %264 = vector.extract_strided_slice %263 {offsets = [0, 0], sizes = [2, 192], strides = [1, 1]} : vector<2x256xf32> to vector<2x192xf32>
    %265 = arith.negf %264 : vector<2x192xf32>
    %266 = math.exp %265 : vector<2x192xf32>
    %cst_104 = arith.constant 1.000000e+00 : f32
    %267 = vector.broadcast %cst_104 : f32 to vector<2x192xf32>
    %268 = arith.addf %267, %266 : vector<2x192xf32>
    %269 = arith.divf %267, %268 : vector<2x192xf32>
    %270 = vector.extract_strided_slice %263 {offsets = [0, 192], sizes = [2, 64], strides = [1, 1]} : vector<2x256xf32> to vector<2x64xf32>
    %271 = math.tanh %270 : vector<2x64xf32>
    %272 = vector.extract_strided_slice %269 {offsets = [0, 0], sizes = [2, 64], strides = [1, 1]} : vector<2x192xf32> to vector<2x64xf32>
    %273 = vector.extract_strided_slice %269 {offsets = [0, 64], sizes = [2, 64], strides = [1, 1]} : vector<2x192xf32> to vector<2x64xf32>
    %274 = vector.extract_strided_slice %269 {offsets = [0, 128], sizes = [2, 64], strides = [1, 1]} : vector<2x192xf32> to vector<2x64xf32>
    %275 = arith.mulf %273, %259 : vector<2x64xf32>
    %276 = arith.mulf %272, %271 : vector<2x64xf32>
    %277 = arith.addf %275, %276 : vector<2x64xf32>
    %278 = math.tanh %277 : vector<2x64xf32>
    %279 = arith.mulf %274, %278 : vector<2x64xf32>
    %c0_105 = arith.constant 0 : index
    %c0_106 = arith.constant 0 : index
    %280 = vector.load %arg1[%c0_105, %c0_106] : memref<16x64xf32, #tpu.memory_space<vmem>>, vector<2x64xf32>
    %cst_107 = arith.constant 1.000000e+00 : f32
    %281 = vector.broadcast %cst_107 : f32 to vector<2x64xf32>
    %282 = arith.subf %281, %280 : vector<2x64xf32>
    %283 = arith.mulf %280, %279 : vector<2x64xf32>
    %284 = arith.mulf %280, %277 : vector<2x64xf32>
    %285 = arith.mulf %282, %259 : vector<2x64xf32>
    %286 = arith.addf %284, %285 : vector<2x64xf32>
    %287 = arith.mulf %282, %258 : vector<2x64xf32>
    %288 = arith.addf %283, %287 : vector<2x64xf32>
    %c0_108 = arith.constant 0 : index
    %c0_109 = arith.constant 0 : index
    %289 = vector.load %arg14[%c0_108, %c0_109] : memref<16x128xf32, #tpu.memory_space<vmem>>, vector<2x64xf32>
    tpu.vector_store %arg14[%c0_108, %c0_109], %283 {strides = array<i32>} : memref<16x128xf32, #tpu.memory_space<vmem>>, vector<2x64xf32>,
    %c14_110 = arith.constant 14 : index
    %c64_111 = arith.constant 64 : index
    %290 = vector.load %arg14[%c14_110, %c64_111] : memref<16x128xf32, #tpu.memory_space<vmem>>, vector<2x64xf32>
    tpu.vector_store %arg14[%c14_110, %c64_111], %283 {strides = array<i32>} : memref<16x128xf32, #tpu.memory_space<vmem>>, vector<2x64xf32>,
    %c2_112 = arith.constant 2 : index
    %c0_113 = arith.constant 0 : index
    %291 = vector.load %arg13[%c2_112, %c0_113] : memref<16x256xf32, #tpu.memory_space<vmem>>, vector<2x256xf32>
    %292 = arith.truncf %288 : vector<2x64xf32> to vector<2x64xbf16>
    %cst_114 = arith.constant dense<0.000000e+00> : vector<2x256xf32>
    %293 = tpu.matmul %292, %257, %cst_114 {dimension_numbers = #tpu.dot_dimension_numbers<[1], [0], [0], [1], [0, 0, 1, 1], [], []>} : vector<2x64xbf16>, vector<64x256xbf16>, vector<2x256xf32> -> vector<2x256xf32>
    %294 = arith.addf %291, %293 : vector<2x256xf32>
    %295 = vector.extract_strided_slice %294 {offsets = [0, 0], sizes = [2, 192], strides = [1, 1]} : vector<2x256xf32> to vector<2x192xf32>
    %296 = arith.negf %295 : vector<2x192xf32>
    %297 = math.exp %296 : vector<2x192xf32>
    %cst_115 = arith.constant 1.000000e+00 : f32
    %298 = vector.broadcast %cst_115 : f32 to vector<2x192xf32>
    %299 = arith.addf %298, %297 : vector<2x192xf32>
    %300 = arith.divf %298, %299 : vector<2x192xf32>
    %301 = vector.extract_strided_slice %294 {offsets = [0, 192], sizes = [2, 64], strides = [1, 1]} : vector<2x256xf32> to vector<2x64xf32>
    %302 = math.tanh %301 : vector<2x64xf32>
    %303 = vector.extract_strided_slice %300 {offsets = [0, 0], sizes = [2, 64], strides = [1, 1]} : vector<2x192xf32> to vector<2x64xf32>
    %304 = vector.extract_strided_slice %300 {offsets = [0, 64], sizes = [2, 64], strides = [1, 1]} : vector<2x192xf32> to vector<2x64xf32>
    %305 = vector.extract_strided_slice %300 {offsets = [0, 128], sizes = [2, 64], strides = [1, 1]} : vector<2x192xf32> to vector<2x64xf32>
    %306 = arith.mulf %304, %286 : vector<2x64xf32>
    %307 = arith.mulf %303, %302 : vector<2x64xf32>
    %308 = arith.addf %306, %307 : vector<2x64xf32>
    %309 = math.tanh %308 : vector<2x64xf32>
    %310 = arith.mulf %305, %309 : vector<2x64xf32>
    %c2_116 = arith.constant 2 : index
    %c0_117 = arith.constant 0 : index
    %311 = vector.load %arg1[%c2_116, %c0_117] : memref<16x64xf32, #tpu.memory_space<vmem>>, vector<2x64xf32>
    %cst_118 = arith.constant 1.000000e+00 : f32
    %312 = vector.broadcast %cst_118 : f32 to vector<2x64xf32>
    %313 = arith.subf %312, %311 : vector<2x64xf32>
    %314 = arith.mulf %311, %310 : vector<2x64xf32>
    %315 = arith.mulf %311, %308 : vector<2x64xf32>
    %316 = arith.mulf %313, %286 : vector<2x64xf32>
    %317 = arith.addf %315, %316 : vector<2x64xf32>
    %318 = arith.mulf %313, %288 : vector<2x64xf32>
    %319 = arith.addf %314, %318 : vector<2x64xf32>
    %c2_119 = arith.constant 2 : index
    %c0_120 = arith.constant 0 : index
    %320 = vector.load %arg14[%c2_119, %c0_120] : memref<16x128xf32, #tpu.memory_space<vmem>>, vector<2x64xf32>
    tpu.vector_store %arg14[%c2_119, %c0_120], %314 {strides = array<i32>} : memref<16x128xf32, #tpu.memory_space<vmem>>, vector<2x64xf32>,
    %c12_121 = arith.constant 12 : index
    %c64_122 = arith.constant 64 : index
    %321 = vector.load %arg14[%c12_121, %c64_122] : memref<16x128xf32, #tpu.memory_space<vmem>>, vector<2x64xf32>
    tpu.vector_store %arg14[%c12_121, %c64_122], %314 {strides = array<i32>} : memref<16x128xf32, #tpu.memory_space<vmem>>, vector<2x64xf32>,
    %c4_123 = arith.constant 4 : index
    %c0_124 = arith.constant 0 : index
    %322 = vector.load %arg13[%c4_123, %c0_124] : memref<16x256xf32, #tpu.memory_space<vmem>>, vector<2x256xf32>
    %323 = arith.truncf %319 : vector<2x64xf32> to vector<2x64xbf16>
    %cst_125 = arith.constant dense<0.000000e+00> : vector<2x256xf32>
    %324 = tpu.matmul %323, %257, %cst_125 {dimension_numbers = #tpu.dot_dimension_numbers<[1], [0], [0], [1], [0, 0, 1, 1], [], []>} : vector<2x64xbf16>, vector<64x256xbf16>, vector<2x256xf32> -> vector<2x256xf32>
    %325 = arith.addf %322, %324 : vector<2x256xf32>
    %326 = vector.extract_strided_slice %325 {offsets = [0, 0], sizes = [2, 192], strides = [1, 1]} : vector<2x256xf32> to vector<2x192xf32>
    %327 = arith.negf %326 : vector<2x192xf32>
    %328 = math.exp %327 : vector<2x192xf32>
    %cst_126 = arith.constant 1.000000e+00 : f32
    %329 = vector.broadcast %cst_126 : f32 to vector<2x192xf32>
    %330 = arith.addf %329, %328 : vector<2x192xf32>
    %331 = arith.divf %329, %330 : vector<2x192xf32>
    %332 = vector.extract_strided_slice %325 {offsets = [0, 192], sizes = [2, 64], strides = [1, 1]} : vector<2x256xf32> to vector<2x64xf32>
    %333 = math.tanh %332 : vector<2x64xf32>
    %334 = vector.extract_strided_slice %331 {offsets = [0, 0], sizes = [2, 64], strides = [1, 1]} : vector<2x192xf32> to vector<2x64xf32>
    %335 = vector.extract_strided_slice %331 {offsets = [0, 64], sizes = [2, 64], strides = [1, 1]} : vector<2x192xf32> to vector<2x64xf32>
    %336 = vector.extract_strided_slice %331 {offsets = [0, 128], sizes = [2, 64], strides = [1, 1]} : vector<2x192xf32> to vector<2x64xf32>
    %337 = arith.mulf %335, %317 : vector<2x64xf32>
    %338 = arith.mulf %334, %333 : vector<2x64xf32>
    %339 = arith.addf %337, %338 : vector<2x64xf32>
    %340 = math.tanh %339 : vector<2x64xf32>
    %341 = arith.mulf %336, %340 : vector<2x64xf32>
    %c4_127 = arith.constant 4 : index
    %c0_128 = arith.constant 0 : index
    %342 = vector.load %arg1[%c4_127, %c0_128] : memref<16x64xf32, #tpu.memory_space<vmem>>, vector<2x64xf32>
    %cst_129 = arith.constant 1.000000e+00 : f32
    %343 = vector.broadcast %cst_129 : f32 to vector<2x64xf32>
    %344 = arith.subf %343, %342 : vector<2x64xf32>
    %345 = arith.mulf %342, %341 : vector<2x64xf32>
    %346 = arith.mulf %342, %339 : vector<2x64xf32>
    %347 = arith.mulf %344, %317 : vector<2x64xf32>
    %348 = arith.addf %346, %347 : vector<2x64xf32>
    %349 = arith.mulf %344, %319 : vector<2x64xf32>
    %350 = arith.addf %345, %349 : vector<2x64xf32>
    %c4_130 = arith.constant 4 : index
    %c0_131 = arith.constant 0 : index
    %351 = vector.load %arg14[%c4_130, %c0_131] : memref<16x128xf32, #tpu.memory_space<vmem>>, vector<2x64xf32>
    tpu.vector_store %arg14[%c4_130, %c0_131], %345 {strides = array<i32>} : memref<16x128xf32, #tpu.memory_space<vmem>>, vector<2x64xf32>,
    %c10_132 = arith.constant 10 : index
    %c64_133 = arith.constant 64 : index
    %352 = vector.load %arg14[%c10_132, %c64_133] : memref<16x128xf32, #tpu.memory_space<vmem>>, vector<2x64xf32>
    tpu.vector_store %arg14[%c10_132, %c64_133], %345 {strides = array<i32>} : memref<16x128xf32, #tpu.memory_space<vmem>>, vector<2x64xf32>,
    %c6_134 = arith.constant 6 : index
    %c0_135 = arith.constant 0 : index
    %353 = vector.load %arg13[%c6_134, %c0_135] : memref<16x256xf32, #tpu.memory_space<vmem>>, vector<2x256xf32>
    %354 = arith.truncf %350 : vector<2x64xf32> to vector<2x64xbf16>
    %cst_136 = arith.constant dense<0.000000e+00> : vector<2x256xf32>
    %355 = tpu.matmul %354, %257, %cst_136 {dimension_numbers = #tpu.dot_dimension_numbers<[1], [0], [0], [1], [0, 0, 1, 1], [], []>} : vector<2x64xbf16>, vector<64x256xbf16>, vector<2x256xf32> -> vector<2x256xf32>
    %356 = arith.addf %353, %355 : vector<2x256xf32>
    %357 = vector.extract_strided_slice %356 {offsets = [0, 0], sizes = [2, 192], strides = [1, 1]} : vector<2x256xf32> to vector<2x192xf32>
    %358 = arith.negf %357 : vector<2x192xf32>
    %359 = math.exp %358 : vector<2x192xf32>
    %cst_137 = arith.constant 1.000000e+00 : f32
    %360 = vector.broadcast %cst_137 : f32 to vector<2x192xf32>
    %361 = arith.addf %360, %359 : vector<2x192xf32>
    %362 = arith.divf %360, %361 : vector<2x192xf32>
    %363 = vector.extract_strided_slice %356 {offsets = [0, 192], sizes = [2, 64], strides = [1, 1]} : vector<2x256xf32> to vector<2x64xf32>
    %364 = math.tanh %363 : vector<2x64xf32>
    %365 = vector.extract_strided_slice %362 {offsets = [0, 0], sizes = [2, 64], strides = [1, 1]} : vector<2x192xf32> to vector<2x64xf32>
    %366 = vector.extract_strided_slice %362 {offsets = [0, 64], sizes = [2, 64], strides = [1, 1]} : vector<2x192xf32> to vector<2x64xf32>
    %367 = vector.extract_strided_slice %362 {offsets = [0, 128], sizes = [2, 64], strides = [1, 1]} : vector<2x192xf32> to vector<2x64xf32>
    %368 = arith.mulf %366, %348 : vector<2x64xf32>
    %369 = arith.mulf %365, %364 : vector<2x64xf32>
    %370 = arith.addf %368, %369 : vector<2x64xf32>
    %371 = math.tanh %370 : vector<2x64xf32>
    %372 = arith.mulf %367, %371 : vector<2x64xf32>
    %c6_138 = arith.constant 6 : index
    %c0_139 = arith.constant 0 : index
    %373 = vector.load %arg1[%c6_138, %c0_139] : memref<16x64xf32, #tpu.memory_space<vmem>>, vector<2x64xf32>
    %cst_140 = arith.constant 1.000000e+00 : f32
    %374 = vector.broadcast %cst_140 : f32 to vector<2x64xf32>
    %375 = arith.subf %374, %373 : vector<2x64xf32>
    %376 = arith.mulf %373, %372 : vector<2x64xf32>
    %377 = arith.mulf %373, %370 : vector<2x64xf32>
    %378 = arith.mulf %375, %348 : vector<2x64xf32>
    %379 = arith.addf %377, %378 : vector<2x64xf32>
    %380 = arith.mulf %375, %350 : vector<2x64xf32>
    %381 = arith.addf %376, %380 : vector<2x64xf32>
    %c6_141 = arith.constant 6 : index
    %c0_142 = arith.constant 0 : index
    %382 = vector.load %arg14[%c6_141, %c0_142] : memref<16x128xf32, #tpu.memory_space<vmem>>, vector<2x64xf32>
    tpu.vector_store %arg14[%c6_141, %c0_142], %376 {strides = array<i32>} : memref<16x128xf32, #tpu.memory_space<vmem>>, vector<2x64xf32>,
    %c8_143 = arith.constant 8 : index
    %c64_144 = arith.constant 64 : index
    %383 = vector.load %arg14[%c8_143, %c64_144] : memref<16x128xf32, #tpu.memory_space<vmem>>, vector<2x64xf32>
    tpu.vector_store %arg14[%c8_143, %c64_144], %376 {strides = array<i32>} : memref<16x128xf32, #tpu.memory_space<vmem>>, vector<2x64xf32>,
    %c8_145 = arith.constant 8 : index
    %c0_146 = arith.constant 0 : index
    %384 = vector.load %arg13[%c8_145, %c0_146] : memref<16x256xf32, #tpu.memory_space<vmem>>, vector<2x256xf32>
    %385 = arith.truncf %381 : vector<2x64xf32> to vector<2x64xbf16>
    %cst_147 = arith.constant dense<0.000000e+00> : vector<2x256xf32>
    %386 = tpu.matmul %385, %257, %cst_147 {dimension_numbers = #tpu.dot_dimension_numbers<[1], [0], [0], [1], [0, 0, 1, 1], [], []>} : vector<2x64xbf16>, vector<64x256xbf16>, vector<2x256xf32> -> vector<2x256xf32>
    %387 = arith.addf %384, %386 : vector<2x256xf32>
    %388 = vector.extract_strided_slice %387 {offsets = [0, 0], sizes = [2, 192], strides = [1, 1]} : vector<2x256xf32> to vector<2x192xf32>
    %389 = arith.negf %388 : vector<2x192xf32>
    %390 = math.exp %389 : vector<2x192xf32>
    %cst_148 = arith.constant 1.000000e+00 : f32
    %391 = vector.broadcast %cst_148 : f32 to vector<2x192xf32>
    %392 = arith.addf %391, %390 : vector<2x192xf32>
    %393 = arith.divf %391, %392 : vector<2x192xf32>
    %394 = vector.extract_strided_slice %387 {offsets = [0, 192], sizes = [2, 64], strides = [1, 1]} : vector<2x256xf32> to vector<2x64xf32>
    %395 = math.tanh %394 : vector<2x64xf32>
    %396 = vector.extract_strided_slice %393 {offsets = [0, 0], sizes = [2, 64], strides = [1, 1]} : vector<2x192xf32> to vector<2x64xf32>
    %397 = vector.extract_strided_slice %393 {offsets = [0, 64], sizes = [2, 64], strides = [1, 1]} : vector<2x192xf32> to vector<2x64xf32>
    %398 = vector.extract_strided_slice %393 {offsets = [0, 128], sizes = [2, 64], strides = [1, 1]} : vector<2x192xf32> to vector<2x64xf32>
    %399 = arith.mulf %397, %379 : vector<2x64xf32>
    %400 = arith.mulf %396, %395 : vector<2x64xf32>
    %401 = arith.addf %399, %400 : vector<2x64xf32>
    %402 = math.tanh %401 : vector<2x64xf32>
    %403 = arith.mulf %398, %402 : vector<2x64xf32>
    %c8_149 = arith.constant 8 : index
    %c0_150 = arith.constant 0 : index
    %404 = vector.load %arg1[%c8_149, %c0_150] : memref<16x64xf32, #tpu.memory_space<vmem>>, vector<2x64xf32>
    %cst_151 = arith.constant 1.000000e+00 : f32
    %405 = vector.broadcast %cst_151 : f32 to vector<2x64xf32>
    %406 = arith.subf %405, %404 : vector<2x64xf32>
    %407 = arith.mulf %404, %403 : vector<2x64xf32>
    %408 = arith.mulf %404, %401 : vector<2x64xf32>
    %409 = arith.mulf %406, %379 : vector<2x64xf32>
    %410 = arith.addf %408, %409 : vector<2x64xf32>
    %411 = arith.mulf %406, %381 : vector<2x64xf32>
    %412 = arith.addf %407, %411 : vector<2x64xf32>
    %c8_152 = arith.constant 8 : index
    %c0_153 = arith.constant 0 : index
    %413 = vector.load %arg14[%c8_152, %c0_153] : memref<16x128xf32, #tpu.memory_space<vmem>>, vector<2x64xf32>
    tpu.vector_store %arg14[%c8_152, %c0_153], %407 {strides = array<i32>} : memref<16x128xf32, #tpu.memory_space<vmem>>, vector<2x64xf32>,
    %c6_154 = arith.constant 6 : index
    %c64_155 = arith.constant 64 : index
    %414 = vector.load %arg14[%c6_154, %c64_155] : memref<16x128xf32, #tpu.memory_space<vmem>>, vector<2x64xf32>
    tpu.vector_store %arg14[%c6_154, %c64_155], %407 {strides = array<i32>} : memref<16x128xf32, #tpu.memory_space<vmem>>, vector<2x64xf32>,
    %c10_156 = arith.constant 10 : index
    %c0_157 = arith.constant 0 : index
    %415 = vector.load %arg13[%c10_156, %c0_157] : memref<16x256xf32, #tpu.memory_space<vmem>>, vector<2x256xf32>
    %416 = arith.truncf %412 : vector<2x64xf32> to vector<2x64xbf16>
    %cst_158 = arith.constant dense<0.000000e+00> : vector<2x256xf32>
    %417 = tpu.matmul %416, %257, %cst_158 {dimension_numbers = #tpu.dot_dimension_numbers<[1], [0], [0], [1], [0, 0, 1, 1], [], []>} : vector<2x64xbf16>, vector<64x256xbf16>, vector<2x256xf32> -> vector<2x256xf32>
    %418 = arith.addf %415, %417 : vector<2x256xf32>
    %419 = vector.extract_strided_slice %418 {offsets = [0, 0], sizes = [2, 192], strides = [1, 1]} : vector<2x256xf32> to vector<2x192xf32>
    %420 = arith.negf %419 : vector<2x192xf32>
    %421 = math.exp %420 : vector<2x192xf32>
    %cst_159 = arith.constant 1.000000e+00 : f32
    %422 = vector.broadcast %cst_159 : f32 to vector<2x192xf32>
    %423 = arith.addf %422, %421 : vector<2x192xf32>
    %424 = arith.divf %422, %423 : vector<2x192xf32>
    %425 = vector.extract_strided_slice %418 {offsets = [0, 192], sizes = [2, 64], strides = [1, 1]} : vector<2x256xf32> to vector<2x64xf32>
    %426 = math.tanh %425 : vector<2x64xf32>
    %427 = vector.extract_strided_slice %424 {offsets = [0, 0], sizes = [2, 64], strides = [1, 1]} : vector<2x192xf32> to vector<2x64xf32>
    %428 = vector.extract_strided_slice %424 {offsets = [0, 64], sizes = [2, 64], strides = [1, 1]} : vector<2x192xf32> to vector<2x64xf32>
    %429 = vector.extract_strided_slice %424 {offsets = [0, 128], sizes = [2, 64], strides = [1, 1]} : vector<2x192xf32> to vector<2x64xf32>
    %430 = arith.mulf %428, %410 : vector<2x64xf32>
    %431 = arith.mulf %427, %426 : vector<2x64xf32>
    %432 = arith.addf %430, %431 : vector<2x64xf32>
    %433 = math.tanh %432 : vector<2x64xf32>
    %434 = arith.mulf %429, %433 : vector<2x64xf32>
    %c10_160 = arith.constant 10 : index
    %c0_161 = arith.constant 0 : index
    %435 = vector.load %arg1[%c10_160, %c0_161] : memref<16x64xf32, #tpu.memory_space<vmem>>, vector<2x64xf32>
    %cst_162 = arith.constant 1.000000e+00 : f32
    %436 = vector.broadcast %cst_162 : f32 to vector<2x64xf32>
    %437 = arith.subf %436, %435 : vector<2x64xf32>
    %438 = arith.mulf %435, %434 : vector<2x64xf32>
    %439 = arith.mulf %435, %432 : vector<2x64xf32>
    %440 = arith.mulf %437, %410 : vector<2x64xf32>
    %441 = arith.addf %439, %440 : vector<2x64xf32>
    %442 = arith.mulf %437, %412 : vector<2x64xf32>
    %443 = arith.addf %438, %442 : vector<2x64xf32>
    %c10_163 = arith.constant 10 : index
    %c0_164 = arith.constant 0 : index
    %444 = vector.load %arg14[%c10_163, %c0_164] : memref<16x128xf32, #tpu.memory_space<vmem>>, vector<2x64xf32>
    tpu.vector_store %arg14[%c10_163, %c0_164], %438 {strides = array<i32>} : memref<16x128xf32, #tpu.memory_space<vmem>>, vector<2x64xf32>,
    %c4_165 = arith.constant 4 : index
    %c64_166 = arith.constant 64 : index
    %445 = vector.load %arg14[%c4_165, %c64_166] : memref<16x128xf32, #tpu.memory_space<vmem>>, vector<2x64xf32>
    tpu.vector_store %arg14[%c4_165, %c64_166], %438 {strides = array<i32>} : memref<16x128xf32, #tpu.memory_space<vmem>>, vector<2x64xf32>,
    %c12_167 = arith.constant 12 : index
    %c0_168 = arith.constant 0 : index
    %446 = vector.load %arg13[%c12_167, %c0_168] : memref<16x256xf32, #tpu.memory_space<vmem>>, vector<2x256xf32>
    %447 = arith.truncf %443 : vector<2x64xf32> to vector<2x64xbf16>
    %cst_169 = arith.constant dense<0.000000e+00> : vector<2x256xf32>
    %448 = tpu.matmul %447, %257, %cst_169 {dimension_numbers = #tpu.dot_dimension_numbers<[1], [0], [0], [1], [0, 0, 1, 1], [], []>} : vector<2x64xbf16>, vector<64x256xbf16>, vector<2x256xf32> -> vector<2x256xf32>
    %449 = arith.addf %446, %448 : vector<2x256xf32>
    %450 = vector.extract_strided_slice %449 {offsets = [0, 0], sizes = [2, 192], strides = [1, 1]} : vector<2x256xf32> to vector<2x192xf32>
    %451 = arith.negf %450 : vector<2x192xf32>
    %452 = math.exp %451 : vector<2x192xf32>
    %cst_170 = arith.constant 1.000000e+00 : f32
    %453 = vector.broadcast %cst_170 : f32 to vector<2x192xf32>
    %454 = arith.addf %453, %452 : vector<2x192xf32>
    %455 = arith.divf %453, %454 : vector<2x192xf32>
    %456 = vector.extract_strided_slice %449 {offsets = [0, 192], sizes = [2, 64], strides = [1, 1]} : vector<2x256xf32> to vector<2x64xf32>
    %457 = math.tanh %456 : vector<2x64xf32>
    %458 = vector.extract_strided_slice %455 {offsets = [0, 0], sizes = [2, 64], strides = [1, 1]} : vector<2x192xf32> to vector<2x64xf32>
    %459 = vector.extract_strided_slice %455 {offsets = [0, 64], sizes = [2, 64], strides = [1, 1]} : vector<2x192xf32> to vector<2x64xf32>
    %460 = vector.extract_strided_slice %455 {offsets = [0, 128], sizes = [2, 64], strides = [1, 1]} : vector<2x192xf32> to vector<2x64xf32>
    %461 = arith.mulf %459, %441 : vector<2x64xf32>
    %462 = arith.mulf %458, %457 : vector<2x64xf32>
    %463 = arith.addf %461, %462 : vector<2x64xf32>
    %464 = math.tanh %463 : vector<2x64xf32>
    %465 = arith.mulf %460, %464 : vector<2x64xf32>
    %c12_171 = arith.constant 12 : index
    %c0_172 = arith.constant 0 : index
    %466 = vector.load %arg1[%c12_171, %c0_172] : memref<16x64xf32, #tpu.memory_space<vmem>>, vector<2x64xf32>
    %cst_173 = arith.constant 1.000000e+00 : f32
    %467 = vector.broadcast %cst_173 : f32 to vector<2x64xf32>
    %468 = arith.subf %467, %466 : vector<2x64xf32>
    %469 = arith.mulf %466, %465 : vector<2x64xf32>
    %470 = arith.mulf %466, %463 : vector<2x64xf32>
    %471 = arith.mulf %468, %441 : vector<2x64xf32>
    %472 = arith.addf %470, %471 : vector<2x64xf32>
    %473 = arith.mulf %468, %443 : vector<2x64xf32>
    %474 = arith.addf %469, %473 : vector<2x64xf32>
    %c12_174 = arith.constant 12 : index
    %c0_175 = arith.constant 0 : index
    %475 = vector.load %arg14[%c12_174, %c0_175] : memref<16x128xf32, #tpu.memory_space<vmem>>, vector<2x64xf32>
    tpu.vector_store %arg14[%c12_174, %c0_175], %469 {strides = array<i32>} : memref<16x128xf32, #tpu.memory_space<vmem>>, vector<2x64xf32>,
    %c2_176 = arith.constant 2 : index
    %c64_177 = arith.constant 64 : index
    %476 = vector.load %arg14[%c2_176, %c64_177] : memref<16x128xf32, #tpu.memory_space<vmem>>, vector<2x64xf32>
    tpu.vector_store %arg14[%c2_176, %c64_177], %469 {strides = array<i32>} : memref<16x128xf32, #tpu.memory_space<vmem>>, vector<2x64xf32>,
    %c14_178 = arith.constant 14 : index
    %c0_179 = arith.constant 0 : index
    %477 = vector.load %arg13[%c14_178, %c0_179] : memref<16x256xf32, #tpu.memory_space<vmem>>, vector<2x256xf32>
    %478 = arith.truncf %474 : vector<2x64xf32> to vector<2x64xbf16>
    %cst_180 = arith.constant dense<0.000000e+00> : vector<2x256xf32>
    %479 = tpu.matmul %478, %257, %cst_180 {dimension_numbers = #tpu.dot_dimension_numbers<[1], [0], [0], [1], [0, 0, 1, 1], [], []>} : vector<2x64xbf16>, vector<64x256xbf16>, vector<2x256xf32> -> vector<2x256xf32>
    %480 = arith.addf %477, %479 : vector<2x256xf32>
    %481 = vector.extract_strided_slice %480 {offsets = [0, 0], sizes = [2, 192], strides = [1, 1]} : vector<2x256xf32> to vector<2x192xf32>
    %482 = arith.negf %481 : vector<2x192xf32>
    %483 = math.exp %482 : vector<2x192xf32>
    %cst_181 = arith.constant 1.000000e+00 : f32
    %484 = vector.broadcast %cst_181 : f32 to vector<2x192xf32>
    %485 = arith.addf %484, %483 : vector<2x192xf32>
    %486 = arith.divf %484, %485 : vector<2x192xf32>
    %487 = vector.extract_strided_slice %480 {offsets = [0, 192], sizes = [2, 64], strides = [1, 1]} : vector<2x256xf32> to vector<2x64xf32>
    %488 = math.tanh %487 : vector<2x64xf32>
    %489 = vector.extract_strided_slice %486 {offsets = [0, 0], sizes = [2, 64], strides = [1, 1]} : vector<2x192xf32> to vector<2x64xf32>
    %490 = vector.extract_strided_slice %486 {offsets = [0, 64], sizes = [2, 64], strides = [1, 1]} : vector<2x192xf32> to vector<2x64xf32>
    %491 = vector.extract_strided_slice %486 {offsets = [0, 128], sizes = [2, 64], strides = [1, 1]} : vector<2x192xf32> to vector<2x64xf32>
    %492 = arith.mulf %490, %472 : vector<2x64xf32>
    %493 = arith.mulf %489, %488 : vector<2x64xf32>
    %494 = arith.addf %492, %493 : vector<2x64xf32>
    %495 = math.tanh %494 : vector<2x64xf32>
    %496 = arith.mulf %491, %495 : vector<2x64xf32>
    %c14_182 = arith.constant 14 : index
    %c0_183 = arith.constant 0 : index
    %497 = vector.load %arg1[%c14_182, %c0_183] : memref<16x64xf32, #tpu.memory_space<vmem>>, vector<2x64xf32>
    %498 = arith.mulf %497, %496 : vector<2x64xf32>
    %c14_184 = arith.constant 14 : index
    %c0_185 = arith.constant 0 : index
    %499 = vector.load %arg14[%c14_184, %c0_185] : memref<16x128xf32, #tpu.memory_space<vmem>>, vector<2x64xf32>
    tpu.vector_store %arg14[%c14_184, %c0_185], %498 {strides = array<i32>} : memref<16x128xf32, #tpu.memory_space<vmem>>, vector<2x64xf32>,
    %c0_186 = arith.constant 0 : index
    %c64_187 = arith.constant 64 : index
    %500 = vector.load %arg14[%c0_186, %c64_187] : memref<16x128xf32, #tpu.memory_space<vmem>>, vector<2x64xf32>
    tpu.vector_store %arg14[%c0_186, %c64_187], %498 {strides = array<i32>} : memref<16x128xf32, #tpu.memory_space<vmem>>, vector<2x64xf32>,
    %c0_188 = arith.constant 0 : index
    %c0_189 = arith.constant 0 : index
    %501 = vector.load %arg14[%c0_188, %c0_189] : memref<16x128xf32, #tpu.memory_space<vmem>>, vector<16x128xf32>
    %502 = arith.truncf %501 : vector<16x128xf32> to vector<16x128xbf16>
    %c0_190 = arith.constant 0 : index
    %c0_191 = arith.constant 0 : index
    %503 = vector.load %arg7[%c0_190, %c0_191] : memref<128x256xbf16, #tpu.memory_space<vmem>>, vector<128x256xbf16>
    %cst_192 = arith.constant dense<0.000000e+00> : vector<16x256xf32>
    %504 = tpu.matmul %502, %503, %cst_192 {dimension_numbers = #tpu.dot_dimension_numbers<[1], [0], [0], [1], [0, 0, 1, 1], [], []>} : vector<16x128xbf16>, vector<128x256xbf16>, vector<16x256xf32> -> vector<16x256xf32>
    %c0_193 = arith.constant 0 : index
    %c0_194 = arith.constant 0 : index
    %505 = vector.load %arg8[%c0_193, %c0_194] : memref<1x256xf32, #tpu.memory_space<vmem>>, vector<1x256xf32>
    %506 = vector.broadcast %505 : vector<1x256xf32> to vector<16x256xf32>
    %507 = arith.addf %504, %506 : vector<16x256xf32>
    %c0_195 = arith.constant 0 : index
    %c0_196 = arith.constant 0 : index
    %508 = vector.load %arg13[%c0_195, %c0_196] : memref<16x256xf32, #tpu.memory_space<vmem>>, vector<16x256xf32>
    tpu.vector_store %arg13[%c0_195, %c0_196], %507 {strides = array<i32>} : memref<16x256xf32, #tpu.memory_space<vmem>>, vector<16x256xf32>,
    %c0_197 = arith.constant 0 : index
    %c0_198 = arith.constant 0 : index
    %509 = vector.load %arg9[%c0_197, %c0_198] : memref<64x256xbf16, #tpu.memory_space<vmem>>, vector<64x256xbf16>
    %cst_199 = arith.constant 0.000000e+00 : f32
    %510 = vector.broadcast %cst_199 : f32 to vector<2x64xf32>
    %cst_200 = arith.constant 0.000000e+00 : f32
    %511 = vector.broadcast %cst_200 : f32 to vector<2x64xf32>
    %c0_201 = arith.constant 0 : index
    %c0_202 = arith.constant 0 : index
    %512 = vector.load %arg13[%c0_201, %c0_202] : memref<16x256xf32, #tpu.memory_space<vmem>>, vector<2x256xf32>
    %513 = arith.truncf %510 : vector<2x64xf32> to vector<2x64xbf16>
    %cst_203 = arith.constant dense<0.000000e+00> : vector<2x256xf32>
    %514 = tpu.matmul %513, %509, %cst_203 {dimension_numbers = #tpu.dot_dimension_numbers<[1], [0], [0], [1], [0, 0, 1, 1], [], []>} : vector<2x64xbf16>, vector<64x256xbf16>, vector<2x256xf32> -> vector<2x256xf32>
    %515 = arith.addf %512, %514 : vector<2x256xf32>
    %516 = vector.extract_strided_slice %515 {offsets = [0, 0], sizes = [2, 192], strides = [1, 1]} : vector<2x256xf32> to vector<2x192xf32>
    %517 = arith.negf %516 : vector<2x192xf32>
    %518 = math.exp %517 : vector<2x192xf32>
    %cst_204 = arith.constant 1.000000e+00 : f32
    %519 = vector.broadcast %cst_204 : f32 to vector<2x192xf32>
    %520 = arith.addf %519, %518 : vector<2x192xf32>
    %521 = arith.divf %519, %520 : vector<2x192xf32>
    %522 = vector.extract_strided_slice %515 {offsets = [0, 192], sizes = [2, 64], strides = [1, 1]} : vector<2x256xf32> to vector<2x64xf32>
    %523 = math.tanh %522 : vector<2x64xf32>
    %524 = vector.extract_strided_slice %521 {offsets = [0, 0], sizes = [2, 64], strides = [1, 1]} : vector<2x192xf32> to vector<2x64xf32>
    %525 = vector.extract_strided_slice %521 {offsets = [0, 64], sizes = [2, 64], strides = [1, 1]} : vector<2x192xf32> to vector<2x64xf32>
    %526 = vector.extract_strided_slice %521 {offsets = [0, 128], sizes = [2, 64], strides = [1, 1]} : vector<2x192xf32> to vector<2x64xf32>
    %527 = arith.mulf %525, %511 : vector<2x64xf32>
    %528 = arith.mulf %524, %523 : vector<2x64xf32>
    %529 = arith.addf %527, %528 : vector<2x64xf32>
    %530 = math.tanh %529 : vector<2x64xf32>
    %531 = arith.mulf %526, %530 : vector<2x64xf32>
    %c0_205 = arith.constant 0 : index
    %c0_206 = arith.constant 0 : index
    %532 = vector.load %arg1[%c0_205, %c0_206] : memref<16x64xf32, #tpu.memory_space<vmem>>, vector<2x64xf32>
    %cst_207 = arith.constant 1.000000e+00 : f32
    %533 = vector.broadcast %cst_207 : f32 to vector<2x64xf32>
    %534 = arith.subf %533, %532 : vector<2x64xf32>
    %535 = arith.mulf %532, %531 : vector<2x64xf32>
    %536 = arith.mulf %532, %529 : vector<2x64xf32>
    %537 = arith.mulf %534, %511 : vector<2x64xf32>
    %538 = arith.addf %536, %537 : vector<2x64xf32>
    %539 = arith.mulf %534, %510 : vector<2x64xf32>
    %540 = arith.addf %535, %539 : vector<2x64xf32>
    %c0_208 = arith.constant 0 : index
    %c0_209 = arith.constant 0 : index
    %541 = vector.load %arg14[%c0_208, %c0_209] : memref<16x128xf32, #tpu.memory_space<vmem>>, vector<2x64xf32>
    tpu.vector_store %arg14[%c0_208, %c0_209], %535 {strides = array<i32>} : memref<16x128xf32, #tpu.memory_space<vmem>>, vector<2x64xf32>,
    %c14_210 = arith.constant 14 : index
    %c64_211 = arith.constant 64 : index
    %542 = vector.load %arg14[%c14_210, %c64_211] : memref<16x128xf32, #tpu.memory_space<vmem>>, vector<2x64xf32>
    tpu.vector_store %arg14[%c14_210, %c64_211], %535 {strides = array<i32>} : memref<16x128xf32, #tpu.memory_space<vmem>>, vector<2x64xf32>,
    %c2_212 = arith.constant 2 : index
    %c0_213 = arith.constant 0 : index
    %543 = vector.load %arg13[%c2_212, %c0_213] : memref<16x256xf32, #tpu.memory_space<vmem>>, vector<2x256xf32>
    %544 = arith.truncf %540 : vector<2x64xf32> to vector<2x64xbf16>
    %cst_214 = arith.constant dense<0.000000e+00> : vector<2x256xf32>
    %545 = tpu.matmul %544, %509, %cst_214 {dimension_numbers = #tpu.dot_dimension_numbers<[1], [0], [0], [1], [0, 0, 1, 1], [], []>} : vector<2x64xbf16>, vector<64x256xbf16>, vector<2x256xf32> -> vector<2x256xf32>
    %546 = arith.addf %543, %545 : vector<2x256xf32>
    %547 = vector.extract_strided_slice %546 {offsets = [0, 0], sizes = [2, 192], strides = [1, 1]} : vector<2x256xf32> to vector<2x192xf32>
    %548 = arith.negf %547 : vector<2x192xf32>
    %549 = math.exp %548 : vector<2x192xf32>
    %cst_215 = arith.constant 1.000000e+00 : f32
    %550 = vector.broadcast %cst_215 : f32 to vector<2x192xf32>
    %551 = arith.addf %550, %549 : vector<2x192xf32>
    %552 = arith.divf %550, %551 : vector<2x192xf32>
    %553 = vector.extract_strided_slice %546 {offsets = [0, 192], sizes = [2, 64], strides = [1, 1]} : vector<2x256xf32> to vector<2x64xf32>
    %554 = math.tanh %553 : vector<2x64xf32>
    %555 = vector.extract_strided_slice %552 {offsets = [0, 0], sizes = [2, 64], strides = [1, 1]} : vector<2x192xf32> to vector<2x64xf32>
    %556 = vector.extract_strided_slice %552 {offsets = [0, 64], sizes = [2, 64], strides = [1, 1]} : vector<2x192xf32> to vector<2x64xf32>
    %557 = vector.extract_strided_slice %552 {offsets = [0, 128], sizes = [2, 64], strides = [1, 1]} : vector<2x192xf32> to vector<2x64xf32>
    %558 = arith.mulf %556, %538 : vector<2x64xf32>
    %559 = arith.mulf %555, %554 : vector<2x64xf32>
    %560 = arith.addf %558, %559 : vector<2x64xf32>
    %561 = math.tanh %560 : vector<2x64xf32>
    %562 = arith.mulf %557, %561 : vector<2x64xf32>
    %c2_216 = arith.constant 2 : index
    %c0_217 = arith.constant 0 : index
    %563 = vector.load %arg1[%c2_216, %c0_217] : memref<16x64xf32, #tpu.memory_space<vmem>>, vector<2x64xf32>
    %cst_218 = arith.constant 1.000000e+00 : f32
    %564 = vector.broadcast %cst_218 : f32 to vector<2x64xf32>
    %565 = arith.subf %564, %563 : vector<2x64xf32>
    %566 = arith.mulf %563, %562 : vector<2x64xf32>
    %567 = arith.mulf %563, %560 : vector<2x64xf32>
    %568 = arith.mulf %565, %538 : vector<2x64xf32>
    %569 = arith.addf %567, %568 : vector<2x64xf32>
    %570 = arith.mulf %565, %540 : vector<2x64xf32>
    %571 = arith.addf %566, %570 : vector<2x64xf32>
    %c2_219 = arith.constant 2 : index
    %c0_220 = arith.constant 0 : index
    %572 = vector.load %arg14[%c2_219, %c0_220] : memref<16x128xf32, #tpu.memory_space<vmem>>, vector<2x64xf32>
    tpu.vector_store %arg14[%c2_219, %c0_220], %566 {strides = array<i32>} : memref<16x128xf32, #tpu.memory_space<vmem>>, vector<2x64xf32>,
    %c12_221 = arith.constant 12 : index
    %c64_222 = arith.constant 64 : index
    %573 = vector.load %arg14[%c12_221, %c64_222] : memref<16x128xf32, #tpu.memory_space<vmem>>, vector<2x64xf32>
    tpu.vector_store %arg14[%c12_221, %c64_222], %566 {strides = array<i32>} : memref<16x128xf32, #tpu.memory_space<vmem>>, vector<2x64xf32>,
    %c4_223 = arith.constant 4 : index
    %c0_224 = arith.constant 0 : index
    %574 = vector.load %arg13[%c4_223, %c0_224] : memref<16x256xf32, #tpu.memory_space<vmem>>, vector<2x256xf32>
    %575 = arith.truncf %571 : vector<2x64xf32> to vector<2x64xbf16>
    %cst_225 = arith.constant dense<0.000000e+00> : vector<2x256xf32>
    %576 = tpu.matmul %575, %509, %cst_225 {dimension_numbers = #tpu.dot_dimension_numbers<[1], [0], [0], [1], [0, 0, 1, 1], [], []>} : vector<2x64xbf16>, vector<64x256xbf16>, vector<2x256xf32> -> vector<2x256xf32>
    %577 = arith.addf %574, %576 : vector<2x256xf32>
    %578 = vector.extract_strided_slice %577 {offsets = [0, 0], sizes = [2, 192], strides = [1, 1]} : vector<2x256xf32> to vector<2x192xf32>
    %579 = arith.negf %578 : vector<2x192xf32>
    %580 = math.exp %579 : vector<2x192xf32>
    %cst_226 = arith.constant 1.000000e+00 : f32
    %581 = vector.broadcast %cst_226 : f32 to vector<2x192xf32>
    %582 = arith.addf %581, %580 : vector<2x192xf32>
    %583 = arith.divf %581, %582 : vector<2x192xf32>
    %584 = vector.extract_strided_slice %577 {offsets = [0, 192], sizes = [2, 64], strides = [1, 1]} : vector<2x256xf32> to vector<2x64xf32>
    %585 = math.tanh %584 : vector<2x64xf32>
    %586 = vector.extract_strided_slice %583 {offsets = [0, 0], sizes = [2, 64], strides = [1, 1]} : vector<2x192xf32> to vector<2x64xf32>
    %587 = vector.extract_strided_slice %583 {offsets = [0, 64], sizes = [2, 64], strides = [1, 1]} : vector<2x192xf32> to vector<2x64xf32>
    %588 = vector.extract_strided_slice %583 {offsets = [0, 128], sizes = [2, 64], strides = [1, 1]} : vector<2x192xf32> to vector<2x64xf32>
    %589 = arith.mulf %587, %569 : vector<2x64xf32>
    %590 = arith.mulf %586, %585 : vector<2x64xf32>
    %591 = arith.addf %589, %590 : vector<2x64xf32>
    %592 = math.tanh %591 : vector<2x64xf32>
    %593 = arith.mulf %588, %592 : vector<2x64xf32>
    %c4_227 = arith.constant 4 : index
    %c0_228 = arith.constant 0 : index
    %594 = vector.load %arg1[%c4_227, %c0_228] : memref<16x64xf32, #tpu.memory_space<vmem>>, vector<2x64xf32>
    %cst_229 = arith.constant 1.000000e+00 : f32
    %595 = vector.broadcast %cst_229 : f32 to vector<2x64xf32>
    %596 = arith.subf %595, %594 : vector<2x64xf32>
    %597 = arith.mulf %594, %593 : vector<2x64xf32>
    %598 = arith.mulf %594, %591 : vector<2x64xf32>
    %599 = arith.mulf %596, %569 : vector<2x64xf32>
    %600 = arith.addf %598, %599 : vector<2x64xf32>
    %601 = arith.mulf %596, %571 : vector<2x64xf32>
    %602 = arith.addf %597, %601 : vector<2x64xf32>
    %c4_230 = arith.constant 4 : index
    %c0_231 = arith.constant 0 : index
    %603 = vector.load %arg14[%c4_230, %c0_231] : memref<16x128xf32, #tpu.memory_space<vmem>>, vector<2x64xf32>
    tpu.vector_store %arg14[%c4_230, %c0_231], %597 {strides = array<i32>} : memref<16x128xf32, #tpu.memory_space<vmem>>, vector<2x64xf32>,
    %c10_232 = arith.constant 10 : index
    %c64_233 = arith.constant 64 : index
    %604 = vector.load %arg14[%c10_232, %c64_233] : memref<16x128xf32, #tpu.memory_space<vmem>>, vector<2x64xf32>
    tpu.vector_store %arg14[%c10_232, %c64_233], %597 {strides = array<i32>} : memref<16x128xf32, #tpu.memory_space<vmem>>, vector<2x64xf32>,
    %c6_234 = arith.constant 6 : index
    %c0_235 = arith.constant 0 : index
    %605 = vector.load %arg13[%c6_234, %c0_235] : memref<16x256xf32, #tpu.memory_space<vmem>>, vector<2x256xf32>
    %606 = arith.truncf %602 : vector<2x64xf32> to vector<2x64xbf16>
    %cst_236 = arith.constant dense<0.000000e+00> : vector<2x256xf32>
    %607 = tpu.matmul %606, %509, %cst_236 {dimension_numbers = #tpu.dot_dimension_numbers<[1], [0], [0], [1], [0, 0, 1, 1], [], []>} : vector<2x64xbf16>, vector<64x256xbf16>, vector<2x256xf32> -> vector<2x256xf32>
    %608 = arith.addf %605, %607 : vector<2x256xf32>
    %609 = vector.extract_strided_slice %608 {offsets = [0, 0], sizes = [2, 192], strides = [1, 1]} : vector<2x256xf32> to vector<2x192xf32>
    %610 = arith.negf %609 : vector<2x192xf32>
    %611 = math.exp %610 : vector<2x192xf32>
    %cst_237 = arith.constant 1.000000e+00 : f32
    %612 = vector.broadcast %cst_237 : f32 to vector<2x192xf32>
    %613 = arith.addf %612, %611 : vector<2x192xf32>
    %614 = arith.divf %612, %613 : vector<2x192xf32>
    %615 = vector.extract_strided_slice %608 {offsets = [0, 192], sizes = [2, 64], strides = [1, 1]} : vector<2x256xf32> to vector<2x64xf32>
    %616 = math.tanh %615 : vector<2x64xf32>
    %617 = vector.extract_strided_slice %614 {offsets = [0, 0], sizes = [2, 64], strides = [1, 1]} : vector<2x192xf32> to vector<2x64xf32>
    %618 = vector.extract_strided_slice %614 {offsets = [0, 64], sizes = [2, 64], strides = [1, 1]} : vector<2x192xf32> to vector<2x64xf32>
    %619 = vector.extract_strided_slice %614 {offsets = [0, 128], sizes = [2, 64], strides = [1, 1]} : vector<2x192xf32> to vector<2x64xf32>
    %620 = arith.mulf %618, %600 : vector<2x64xf32>
    %621 = arith.mulf %617, %616 : vector<2x64xf32>
    %622 = arith.addf %620, %621 : vector<2x64xf32>
    %623 = math.tanh %622 : vector<2x64xf32>
    %624 = arith.mulf %619, %623 : vector<2x64xf32>
    %c6_238 = arith.constant 6 : index
    %c0_239 = arith.constant 0 : index
    %625 = vector.load %arg1[%c6_238, %c0_239] : memref<16x64xf32, #tpu.memory_space<vmem>>, vector<2x64xf32>
    %cst_240 = arith.constant 1.000000e+00 : f32
    %626 = vector.broadcast %cst_240 : f32 to vector<2x64xf32>
    %627 = arith.subf %626, %625 : vector<2x64xf32>
    %628 = arith.mulf %625, %624 : vector<2x64xf32>
    %629 = arith.mulf %625, %622 : vector<2x64xf32>
    %630 = arith.mulf %627, %600 : vector<2x64xf32>
    %631 = arith.addf %629, %630 : vector<2x64xf32>
    %632 = arith.mulf %627, %602 : vector<2x64xf32>
    %633 = arith.addf %628, %632 : vector<2x64xf32>
    %c6_241 = arith.constant 6 : index
    %c0_242 = arith.constant 0 : index
    %634 = vector.load %arg14[%c6_241, %c0_242] : memref<16x128xf32, #tpu.memory_space<vmem>>, vector<2x64xf32>
    tpu.vector_store %arg14[%c6_241, %c0_242], %628 {strides = array<i32>} : memref<16x128xf32, #tpu.memory_space<vmem>>, vector<2x64xf32>,
    %c8_243 = arith.constant 8 : index
    %c64_244 = arith.constant 64 : index
    %635 = vector.load %arg14[%c8_243, %c64_244] : memref<16x128xf32, #tpu.memory_space<vmem>>, vector<2x64xf32>
    tpu.vector_store %arg14[%c8_243, %c64_244], %628 {strides = array<i32>} : memref<16x128xf32, #tpu.memory_space<vmem>>, vector<2x64xf32>,
    %c8_245 = arith.constant 8 : index
    %c0_246 = arith.constant 0 : index
    %636 = vector.load %arg13[%c8_245, %c0_246] : memref<16x256xf32, #tpu.memory_space<vmem>>, vector<2x256xf32>
    %637 = arith.truncf %633 : vector<2x64xf32> to vector<2x64xbf16>
    %cst_247 = arith.constant dense<0.000000e+00> : vector<2x256xf32>
    %638 = tpu.matmul %637, %509, %cst_247 {dimension_numbers = #tpu.dot_dimension_numbers<[1], [0], [0], [1], [0, 0, 1, 1], [], []>} : vector<2x64xbf16>, vector<64x256xbf16>, vector<2x256xf32> -> vector<2x256xf32>
    %639 = arith.addf %636, %638 : vector<2x256xf32>
    %640 = vector.extract_strided_slice %639 {offsets = [0, 0], sizes = [2, 192], strides = [1, 1]} : vector<2x256xf32> to vector<2x192xf32>
    %641 = arith.negf %640 : vector<2x192xf32>
    %642 = math.exp %641 : vector<2x192xf32>
    %cst_248 = arith.constant 1.000000e+00 : f32
    %643 = vector.broadcast %cst_248 : f32 to vector<2x192xf32>
    %644 = arith.addf %643, %642 : vector<2x192xf32>
    %645 = arith.divf %643, %644 : vector<2x192xf32>
    %646 = vector.extract_strided_slice %639 {offsets = [0, 192], sizes = [2, 64], strides = [1, 1]} : vector<2x256xf32> to vector<2x64xf32>
    %647 = math.tanh %646 : vector<2x64xf32>
    %648 = vector.extract_strided_slice %645 {offsets = [0, 0], sizes = [2, 64], strides = [1, 1]} : vector<2x192xf32> to vector<2x64xf32>
    %649 = vector.extract_strided_slice %645 {offsets = [0, 64], sizes = [2, 64], strides = [1, 1]} : vector<2x192xf32> to vector<2x64xf32>
    %650 = vector.extract_strided_slice %645 {offsets = [0, 128], sizes = [2, 64], strides = [1, 1]} : vector<2x192xf32> to vector<2x64xf32>
    %651 = arith.mulf %649, %631 : vector<2x64xf32>
    %652 = arith.mulf %648, %647 : vector<2x64xf32>
    %653 = arith.addf %651, %652 : vector<2x64xf32>
    %654 = math.tanh %653 : vector<2x64xf32>
    %655 = arith.mulf %650, %654 : vector<2x64xf32>
    %c8_249 = arith.constant 8 : index
    %c0_250 = arith.constant 0 : index
    %656 = vector.load %arg1[%c8_249, %c0_250] : memref<16x64xf32, #tpu.memory_space<vmem>>, vector<2x64xf32>
    %cst_251 = arith.constant 1.000000e+00 : f32
    %657 = vector.broadcast %cst_251 : f32 to vector<2x64xf32>
    %658 = arith.subf %657, %656 : vector<2x64xf32>
    %659 = arith.mulf %656, %655 : vector<2x64xf32>
    %660 = arith.mulf %656, %653 : vector<2x64xf32>
    %661 = arith.mulf %658, %631 : vector<2x64xf32>
    %662 = arith.addf %660, %661 : vector<2x64xf32>
    %663 = arith.mulf %658, %633 : vector<2x64xf32>
    %664 = arith.addf %659, %663 : vector<2x64xf32>
    %c8_252 = arith.constant 8 : index
    %c0_253 = arith.constant 0 : index
    %665 = vector.load %arg14[%c8_252, %c0_253] : memref<16x128xf32, #tpu.memory_space<vmem>>, vector<2x64xf32>
    tpu.vector_store %arg14[%c8_252, %c0_253], %659 {strides = array<i32>} : memref<16x128xf32, #tpu.memory_space<vmem>>, vector<2x64xf32>,
    %c6_254 = arith.constant 6 : index
    %c64_255 = arith.constant 64 : index
    %666 = vector.load %arg14[%c6_254, %c64_255] : memref<16x128xf32, #tpu.memory_space<vmem>>, vector<2x64xf32>
    tpu.vector_store %arg14[%c6_254, %c64_255], %659 {strides = array<i32>} : memref<16x128xf32, #tpu.memory_space<vmem>>, vector<2x64xf32>,
    %c10_256 = arith.constant 10 : index
    %c0_257 = arith.constant 0 : index
    %667 = vector.load %arg13[%c10_256, %c0_257] : memref<16x256xf32, #tpu.memory_space<vmem>>, vector<2x256xf32>
    %668 = arith.truncf %664 : vector<2x64xf32> to vector<2x64xbf16>
    %cst_258 = arith.constant dense<0.000000e+00> : vector<2x256xf32>
    %669 = tpu.matmul %668, %509, %cst_258 {dimension_numbers = #tpu.dot_dimension_numbers<[1], [0], [0], [1], [0, 0, 1, 1], [], []>} : vector<2x64xbf16>, vector<64x256xbf16>, vector<2x256xf32> -> vector<2x256xf32>
    %670 = arith.addf %667, %669 : vector<2x256xf32>
    %671 = vector.extract_strided_slice %670 {offsets = [0, 0], sizes = [2, 192], strides = [1, 1]} : vector<2x256xf32> to vector<2x192xf32>
    %672 = arith.negf %671 : vector<2x192xf32>
    %673 = math.exp %672 : vector<2x192xf32>
    %cst_259 = arith.constant 1.000000e+00 : f32
    %674 = vector.broadcast %cst_259 : f32 to vector<2x192xf32>
    %675 = arith.addf %674, %673 : vector<2x192xf32>
    %676 = arith.divf %674, %675 : vector<2x192xf32>
    %677 = vector.extract_strided_slice %670 {offsets = [0, 192], sizes = [2, 64], strides = [1, 1]} : vector<2x256xf32> to vector<2x64xf32>
    %678 = math.tanh %677 : vector<2x64xf32>
    %679 = vector.extract_strided_slice %676 {offsets = [0, 0], sizes = [2, 64], strides = [1, 1]} : vector<2x192xf32> to vector<2x64xf32>
    %680 = vector.extract_strided_slice %676 {offsets = [0, 64], sizes = [2, 64], strides = [1, 1]} : vector<2x192xf32> to vector<2x64xf32>
    %681 = vector.extract_strided_slice %676 {offsets = [0, 128], sizes = [2, 64], strides = [1, 1]} : vector<2x192xf32> to vector<2x64xf32>
    %682 = arith.mulf %680, %662 : vector<2x64xf32>
    %683 = arith.mulf %679, %678 : vector<2x64xf32>
    %684 = arith.addf %682, %683 : vector<2x64xf32>
    %685 = math.tanh %684 : vector<2x64xf32>
    %686 = arith.mulf %681, %685 : vector<2x64xf32>
    %c10_260 = arith.constant 10 : index
    %c0_261 = arith.constant 0 : index
    %687 = vector.load %arg1[%c10_260, %c0_261] : memref<16x64xf32, #tpu.memory_space<vmem>>, vector<2x64xf32>
    %cst_262 = arith.constant 1.000000e+00 : f32
    %688 = vector.broadcast %cst_262 : f32 to vector<2x64xf32>
    %689 = arith.subf %688, %687 : vector<2x64xf32>
    %690 = arith.mulf %687, %686 : vector<2x64xf32>
    %691 = arith.mulf %687, %684 : vector<2x64xf32>
    %692 = arith.mulf %689, %662 : vector<2x64xf32>
    %693 = arith.addf %691, %692 : vector<2x64xf32>
    %694 = arith.mulf %689, %664 : vector<2x64xf32>
    %695 = arith.addf %690, %694 : vector<2x64xf32>
    %c10_263 = arith.constant 10 : index
    %c0_264 = arith.constant 0 : index
    %696 = vector.load %arg14[%c10_263, %c0_264] : memref<16x128xf32, #tpu.memory_space<vmem>>, vector<2x64xf32>
    tpu.vector_store %arg14[%c10_263, %c0_264], %690 {strides = array<i32>} : memref<16x128xf32, #tpu.memory_space<vmem>>, vector<2x64xf32>,
    %c4_265 = arith.constant 4 : index
    %c64_266 = arith.constant 64 : index
    %697 = vector.load %arg14[%c4_265, %c64_266] : memref<16x128xf32, #tpu.memory_space<vmem>>, vector<2x64xf32>
    tpu.vector_store %arg14[%c4_265, %c64_266], %690 {strides = array<i32>} : memref<16x128xf32, #tpu.memory_space<vmem>>, vector<2x64xf32>,
    %c12_267 = arith.constant 12 : index
    %c0_268 = arith.constant 0 : index
    %698 = vector.load %arg13[%c12_267, %c0_268] : memref<16x256xf32, #tpu.memory_space<vmem>>, vector<2x256xf32>
    %699 = arith.truncf %695 : vector<2x64xf32> to vector<2x64xbf16>
    %cst_269 = arith.constant dense<0.000000e+00> : vector<2x256xf32>
    %700 = tpu.matmul %699, %509, %cst_269 {dimension_numbers = #tpu.dot_dimension_numbers<[1], [0], [0], [1], [0, 0, 1, 1], [], []>} : vector<2x64xbf16>, vector<64x256xbf16>, vector<2x256xf32> -> vector<2x256xf32>
    %701 = arith.addf %698, %700 : vector<2x256xf32>
    %702 = vector.extract_strided_slice %701 {offsets = [0, 0], sizes = [2, 192], strides = [1, 1]} : vector<2x256xf32> to vector<2x192xf32>
    %703 = arith.negf %702 : vector<2x192xf32>
    %704 = math.exp %703 : vector<2x192xf32>
    %cst_270 = arith.constant 1.000000e+00 : f32
    %705 = vector.broadcast %cst_270 : f32 to vector<2x192xf32>
    %706 = arith.addf %705, %704 : vector<2x192xf32>
    %707 = arith.divf %705, %706 : vector<2x192xf32>
    %708 = vector.extract_strided_slice %701 {offsets = [0, 192], sizes = [2, 64], strides = [1, 1]} : vector<2x256xf32> to vector<2x64xf32>
    %709 = math.tanh %708 : vector<2x64xf32>
    %710 = vector.extract_strided_slice %707 {offsets = [0, 0], sizes = [2, 64], strides = [1, 1]} : vector<2x192xf32> to vector<2x64xf32>
    %711 = vector.extract_strided_slice %707 {offsets = [0, 64], sizes = [2, 64], strides = [1, 1]} : vector<2x192xf32> to vector<2x64xf32>
    %712 = vector.extract_strided_slice %707 {offsets = [0, 128], sizes = [2, 64], strides = [1, 1]} : vector<2x192xf32> to vector<2x64xf32>
    %713 = arith.mulf %711, %693 : vector<2x64xf32>
    %714 = arith.mulf %710, %709 : vector<2x64xf32>
    %715 = arith.addf %713, %714 : vector<2x64xf32>
    %716 = math.tanh %715 : vector<2x64xf32>
    %717 = arith.mulf %712, %716 : vector<2x64xf32>
    %c12_271 = arith.constant 12 : index
    %c0_272 = arith.constant 0 : index
    %718 = vector.load %arg1[%c12_271, %c0_272] : memref<16x64xf32, #tpu.memory_space<vmem>>, vector<2x64xf32>
    %cst_273 = arith.constant 1.000000e+00 : f32
    %719 = vector.broadcast %cst_273 : f32 to vector<2x64xf32>
    %720 = arith.subf %719, %718 : vector<2x64xf32>
    %721 = arith.mulf %718, %717 : vector<2x64xf32>
    %722 = arith.mulf %718, %715 : vector<2x64xf32>
    %723 = arith.mulf %720, %693 : vector<2x64xf32>
    %724 = arith.addf %722, %723 : vector<2x64xf32>
    %725 = arith.mulf %720, %695 : vector<2x64xf32>
    %726 = arith.addf %721, %725 : vector<2x64xf32>
    %c12_274 = arith.constant 12 : index
    %c0_275 = arith.constant 0 : index
    %727 = vector.load %arg14[%c12_274, %c0_275] : memref<16x128xf32, #tpu.memory_space<vmem>>, vector<2x64xf32>
    tpu.vector_store %arg14[%c12_274, %c0_275], %721 {strides = array<i32>} : memref<16x128xf32, #tpu.memory_space<vmem>>, vector<2x64xf32>,
    %c2_276 = arith.constant 2 : index
    %c64_277 = arith.constant 64 : index
    %728 = vector.load %arg14[%c2_276, %c64_277] : memref<16x128xf32, #tpu.memory_space<vmem>>, vector<2x64xf32>
    tpu.vector_store %arg14[%c2_276, %c64_277], %721 {strides = array<i32>} : memref<16x128xf32, #tpu.memory_space<vmem>>, vector<2x64xf32>,
    %c14_278 = arith.constant 14 : index
    %c0_279 = arith.constant 0 : index
    %729 = vector.load %arg13[%c14_278, %c0_279] : memref<16x256xf32, #tpu.memory_space<vmem>>, vector<2x256xf32>
    %730 = arith.truncf %726 : vector<2x64xf32> to vector<2x64xbf16>
    %cst_280 = arith.constant dense<0.000000e+00> : vector<2x256xf32>
    %731 = tpu.matmul %730, %509, %cst_280 {dimension_numbers = #tpu.dot_dimension_numbers<[1], [0], [0], [1], [0, 0, 1, 1], [], []>} : vector<2x64xbf16>, vector<64x256xbf16>, vector<2x256xf32> -> vector<2x256xf32>
    %732 = arith.addf %729, %731 : vector<2x256xf32>
    %733 = vector.extract_strided_slice %732 {offsets = [0, 0], sizes = [2, 192], strides = [1, 1]} : vector<2x256xf32> to vector<2x192xf32>
    %734 = arith.negf %733 : vector<2x192xf32>
    %735 = math.exp %734 : vector<2x192xf32>
    %cst_281 = arith.constant 1.000000e+00 : f32
    %736 = vector.broadcast %cst_281 : f32 to vector<2x192xf32>
    %737 = arith.addf %736, %735 : vector<2x192xf32>
    %738 = arith.divf %736, %737 : vector<2x192xf32>
    %739 = vector.extract_strided_slice %732 {offsets = [0, 192], sizes = [2, 64], strides = [1, 1]} : vector<2x256xf32> to vector<2x64xf32>
    %740 = math.tanh %739 : vector<2x64xf32>
    %741 = vector.extract_strided_slice %738 {offsets = [0, 0], sizes = [2, 64], strides = [1, 1]} : vector<2x192xf32> to vector<2x64xf32>
    %742 = vector.extract_strided_slice %738 {offsets = [0, 64], sizes = [2, 64], strides = [1, 1]} : vector<2x192xf32> to vector<2x64xf32>
    %743 = vector.extract_strided_slice %738 {offsets = [0, 128], sizes = [2, 64], strides = [1, 1]} : vector<2x192xf32> to vector<2x64xf32>
    %744 = arith.mulf %742, %724 : vector<2x64xf32>
    %745 = arith.mulf %741, %740 : vector<2x64xf32>
    %746 = arith.addf %744, %745 : vector<2x64xf32>
    %747 = math.tanh %746 : vector<2x64xf32>
    %748 = arith.mulf %743, %747 : vector<2x64xf32>
    %c14_282 = arith.constant 14 : index
    %c0_283 = arith.constant 0 : index
    %749 = vector.load %arg1[%c14_282, %c0_283] : memref<16x64xf32, #tpu.memory_space<vmem>>, vector<2x64xf32>
    %750 = arith.mulf %749, %748 : vector<2x64xf32>
    %c14_284 = arith.constant 14 : index
    %c0_285 = arith.constant 0 : index
    %751 = vector.load %arg14[%c14_284, %c0_285] : memref<16x128xf32, #tpu.memory_space<vmem>>, vector<2x64xf32>
    tpu.vector_store %arg14[%c14_284, %c0_285], %750 {strides = array<i32>} : memref<16x128xf32, #tpu.memory_space<vmem>>, vector<2x64xf32>,
    %c0_286 = arith.constant 0 : index
    %c64_287 = arith.constant 64 : index
    %752 = vector.load %arg14[%c0_286, %c64_287] : memref<16x128xf32, #tpu.memory_space<vmem>>, vector<2x64xf32>
    tpu.vector_store %arg14[%c0_286, %c64_287], %750 {strides = array<i32>} : memref<16x128xf32, #tpu.memory_space<vmem>>, vector<2x64xf32>,
    %c0_288 = arith.constant 0 : index
    %c0_289 = arith.constant 0 : index
    %753 = vector.load %arg14[%c0_288, %c0_289] : memref<16x128xf32, #tpu.memory_space<vmem>>, vector<16x128xf32>
    %c0_290 = arith.constant 0 : index
    %c0_291 = arith.constant 0 : index
    %754 = vector.load %arg10[%c0_290, %c0_291] : memref<128x16xf32, #tpu.memory_space<vmem>>, vector<128x16xf32>
    %cst_292 = arith.constant dense<0.000000e+00> : vector<16x16xf32>
    %755 = tpu.matmul %753, %754, %cst_292 {dimension_numbers = #tpu.dot_dimension_numbers<[1], [0], [0], [1], [0, 0, 1, 1], [], []>} : vector<16x128xf32>, vector<128x16xf32>, vector<16x16xf32> -> vector<16x16xf32>
    %c0_293 = arith.constant 0 : index
    %c0_294 = arith.constant 0 : index
    %756 = vector.load %arg11[%c0_293, %c0_294] : memref<1x16xf32, #tpu.memory_space<vmem>>, vector<1x16xf32>
    %757 = vector.broadcast %756 : vector<1x16xf32> to vector<16x16xf32>
    %758 = arith.addf %755, %757 : vector<16x16xf32>
    %c0_295 = arith.constant 0 : index
    %c0_296 = arith.constant 0 : index
    %759 = vector.load %arg1[%c0_295, %c0_296] : memref<16x64xf32, #tpu.memory_space<vmem>>, vector<16x1xf32>
    %760 = vector.broadcast %759 : vector<16x1xf32> to vector<16x16xf32>
    %761 = arith.mulf %758, %760 : vector<16x16xf32>
    %cst_297 = arith.constant dense<0xFF800000> : vector<16xf32>
    %762 = vector.multi_reduction <maximumf>, %761, %cst_297 [1] : vector<16x16xf32> to vector<16xf32>
    %763 = vector.shape_cast %762 : vector<16xf32> to vector<16x1xf32>
    %764 = vector.broadcast %763 : vector<16x1xf32> to vector<16x16xf32>
    %765 = arith.subf %761, %764 : vector<16x16xf32>
    %766 = math.exp %765 : vector<16x16xf32>
    %cst_298 = arith.constant dense<0.000000e+00> : vector<16xf32>
    %767 = vector.multi_reduction <add>, %766, %cst_298 [1] : vector<16x16xf32> to vector<16xf32>
    %768 = vector.shape_cast %767 : vector<16xf32> to vector<16x1xf32>
    %769 = math.log %768 : vector<16x1xf32>
    %770 = vector.broadcast %769 : vector<16x1xf32> to vector<16x16xf32>
    %771 = arith.subf %765, %770 : vector<16x16xf32>
    %c0_299 = arith.constant 0 : index
    %c0_300 = arith.constant 0 : index
    %772 = vector.load %arg12[%c0_299, %c0_300] : memref<16x16xf32, #tpu.memory_space<vmem>>, vector<16x16xf32>
    tpu.vector_store %arg12[%c0_299, %c0_300], %771 {strides = array<i32>} : memref<16x16xf32, #tpu.memory_space<vmem>>, vector<16x16xf32>,
    return
  }
}

</mosaic_0001>

<llo_original>
// kernel: tpu_custom_call.1
$region0: #{tpu_custom_call.1}
  #allocation0 [shape = 'u32[]', space=smem, size = 0x4, offset = 0x4, fixed_abs, tag = 'smem constant byte address 0x4 - core index']
  #allocation1 [shape = 'u32[72,128]{1,0:T(1,128)}', space=vmem, size = 0x9000, scoped, tag = 'internal scratch']
  #allocation2 [shape = 'f32[16,256]{1,0:T(8,128)}', space=vmem, size = 0x4000, scoped, tag = 'scratch operand']
  #allocation3 [shape = 'f32[16,128]{1,0:T(8,128)}', space=vmem, size = 0x2000, scoped, tag = 'scratch operand']
  %s0 = inlined_call_operand.vmem [shape: f32[16,16], index: 0, kind: input, shape index: {}]
  %s1 = inlined_call_operand.hbm [shape: f32[16,64], index: 1, kind: input, shape index: {}]
  %s2 = inlined_call_operand.hbm [shape: bf16[16,256], index: 2, kind: input, shape index: {}]
  %s3 = inlined_call_operand.hbm [shape: bf16[64,256], index: 3, kind: input, shape index: {}]
  %s4 = inlined_call_operand.vmem [shape: bf16[128,256], index: 4, kind: input, shape index: {}]
  %s5 = inlined_call_operand.vmem [shape: f32[1,256], index: 5, kind: input, shape index: {}]
  %s6 = inlined_call_operand.hbm [shape: bf16[64,256], index: 6, kind: input, shape index: {}]
  %s7 = inlined_call_operand.hbm [shape: bf16[128,256], index: 7, kind: input, shape index: {}]
  %s8 = inlined_call_operand.vmem [shape: f32[1,256], index: 8, kind: input, shape index: {}]
  %s9 = inlined_call_operand.hbm [shape: bf16[64,256], index: 9, kind: input, shape index: {}]
  %s10 = inlined_call_operand.vmem [shape: f32[128,16], index: 10, kind: input, shape index: {}]
  %s11 = inlined_call_operand.vmem [shape: f32[1,16], index: 11, kind: input, shape index: {}]
  %s12 = inlined_call_operand.hbm [shape: f32[16,16], index: 12, kind: output, shape index: {}]
  %s13 = sld [smem:[#allocation0]]
  $region82: #{tpu_custom_call.1} parent=0
    _
  %s15 = ssub.s32 1, %s13
  %s16 = scalar_select 0, %s15, %s13
  $region1: #{tpu_custom_call.1} parent=0
    #allocation4 [shape = 'u8[8192]{0}', space=vmem, size = 0x2000, scoped, tag = 'input window, operand 1, single buffered']
    #allocation5 [shape = 's32[1]{0}', space=sflag, size = 0x4, scoped, tag = 'scoped memory for tpu_custom_call.1']
    #allocation6 [shape = 's32[1]{0}', space=sflag, size = 0x4, scoped, tag = 'scoped memory for tpu_custom_call.1']
    #allocation7 [shape = 'u8[8192]{0}', space=vmem, size = 0x2000, scoped, tag = 'input window, operand 2, single buffered']
    #allocation8 [shape = 's32[1]{0}', space=sflag, size = 0x4, scoped, tag = 'scoped memory for tpu_custom_call.1']
    #allocation9 [shape = 'u8[32768]{0}', space=vmem, size = 0x8000, scoped, tag = 'input window, operand 3, single buffered']
    #allocation10 [shape = 'u8[32768]{0}', space=vmem, size = 0x8000, scoped, tag = 'input window, operand 6, single buffered']
    #allocation11 [shape = 's32[1]{0}', space=sflag, size = 0x4, scoped, tag = 'scoped memory for tpu_custom_call.1']
    #allocation12 [shape = 'u8[65536]{0}', space=vmem, size = 0x10000, scoped, tag = 'input window, operand 7, single buffered']
    #allocation13 [shape = 'u8[32768]{0}', space=vmem, size = 0x8000, scoped, tag = 'input window, operand 9, single buffered']
    #allocation14 [shape = 's32[1]{0}', space=sflag, size = 0x4, scoped, tag = 'scoped memory for tpu_custom_call.1']
    #allocation15 [shape = 'u8[8192]{0}', space=vmem, size = 0x2000, scoped, tag = 'output window, operand 0, single buffered']
    %17 = vsyncpa [#allocation5], 0
    %18 = vsyncpa [#allocation8], 0
    %19 = vsyncpa [#allocation11], 0
    %20 = vsyncpa [#allocation14], 0
    %21 = vsyncpa [#allocation6], 0
    // Predicated region
    $region2: #{tpu_custom_call.1} parent=1 // pred_check
      _
    $region3: #{tpu_custom_call.1} parent=1 // pred_check_branch
      %23 = sbr.rel (0) target = $region5
    $region4: #{tpu_custom_call.1} parent=1 // pred_region
      _
    $region5: #{tpu_custom_call.1} parent=1 // pred_fallthru
      _
    // Predicated region
    $region6: #{tpu_custom_call.1} parent=1 // pred_check
      _
    $region7: #{tpu_custom_call.1} parent=1 // pred_check_branch
      %25 = sbr.rel (0) target = $region9
    $region8: #{tpu_custom_call.1} parent=1 // pred_region
      %27 = vsyncadd [#allocation5], 0
      %s28 = sshll.u32 %s1, 4
      %s29 = int_to_ptr.hbm [resolvable:$true] %s28
      %s30 = sshll.u32 [#allocation4], 4
      %s31 = int_to_ptr.vmem [resolvable:$true] %s30
      %36 = dma.hbm_to_vmem [thread:$0]  %s29, 256, %s31, [#allocation5], 128, 128, 8
    $region9: #{tpu_custom_call.1} parent=1 // pred_fallthru
      _
    // Predicated region
    $region10: #{tpu_custom_call.1} parent=1 // pred_check
      _
    $region11: #{tpu_custom_call.1} parent=1 // pred_check_branch
      %38 = sbr.rel (0) target = $region13
    $region12: #{tpu_custom_call.1} parent=1 // pred_region
      %40 = vsyncadd [#allocation8], 0
      %s41 = sshll.u32 %s2, 4
      %s42 = int_to_ptr.hbm [resolvable:$true] %s41
      %s43 = sshll.u32 [#allocation7], 4
      %s44 = int_to_ptr.vmem [resolvable:$true] %s43
      %49 = dma.hbm_to_vmem [thread:$0]  %s42, 256, %s44, [#allocation8], 128, 128, 8
    $region13: #{tpu_custom_call.1} parent=1 // pred_fallthru
      _
    // Predicated region
    $region14: #{tpu_custom_call.1} parent=1 // pred_check
      _
    $region15: #{tpu_custom_call.1} parent=1 // pred_check_branch
      %51 = sbr.rel (0) target = $region17
    $region16: #{tpu_custom_call.1} parent=1 // pred_region
      %53 = vsyncadd [#allocation8], 0
      %s54 = sshll.u32 %s3, 4
      %s55 = int_to_ptr.hbm [resolvable:$true] %s54
      %s56 = sshll.u32 [#allocation9], 4
      %s57 = int_to_ptr.vmem [resolvable:$true] %s56
      %62 = dma.hbm_to_vmem [thread:$0]  %s55, 1024, %s57, [#allocation8], 128, 128, 8
    $region17: #{tpu_custom_call.1} parent=1 // pred_fallthru
      _
    // Predicated region
    $region18: #{tpu_custom_call.1} parent=1 // pred_check
      _
    $region19: #{tpu_custom_call.1} parent=1 // pred_check_branch
      %64 = sbr.rel (0) target = $region21
    $region20: #{tpu_custom_call.1} parent=1 // pred_region
      _
    $region21: #{tpu_custom_call.1} parent=1 // pred_fallthru
      _
    // Predicated region
    $region22: #{tpu_custom_call.1} parent=1 // pred_check
      _
    $region23: #{tpu_custom_call.1} parent=1 // pred_check_branch
      %66 = sbr.rel (0) target = $region25
    $region24: #{tpu_custom_call.1} parent=1 // pred_region
      _
    $region25: #{tpu_custom_call.1} parent=1 // pred_fallthru
      _
    // Predicated region
    $region26: #{tpu_custom_call.1} parent=1 // pred_check
      _
    $region27: #{tpu_custom_call.1} parent=1 // pred_check_branch
      %68 = sbr.rel (0) target = $region29
    $region28: #{tpu_custom_call.1} parent=1 // pred_region
      %70 = vsyncadd [#allocation11], 0
      %s71 = sshll.u32 %s6, 4
      %s72 = int_to_ptr.hbm [resolvable:$true] %s71
      %s73 = sshll.u32 [#allocation10], 4
      %s74 = int_to_ptr.vmem [resolvable:$true] %s73
      %79 = dma.hbm_to_vmem [thread:$0]  %s72, 1024, %s74, [#allocation11], 128, 128, 8
    $region29: #{tpu_custom_call.1} parent=1 // pred_fallthru
      _
    // Predicated region
    $region30: #{tpu_custom_call.1} parent=1 // pred_check
      _
    $region31: #{tpu_custom_call.1} parent=1 // pred_check_branch
      %81 = sbr.rel (0) target = $region33
    $region32: #{tpu_custom_call.1} parent=1 // pred_region
      %83 = vsyncadd [#allocation11], 0
      %s84 = sshll.u32 %s7, 4
      %s85 = int_to_ptr.hbm [resolvable:$true] %s84
      %s86 = sshll.u32 [#allocation12], 4
      %s87 = int_to_ptr.vmem [resolvable:$true] %s86
      %92 = dma.hbm_to_vmem [thread:$0]  %s85, 2048, %s87, [#allocation11], 128, 128, 8
    $region33: #{tpu_custom_call.1} parent=1 // pred_fallthru
      _
    // Predicated region
    $region34: #{tpu_custom_call.1} parent=1 // pred_check
      _
    $region35: #{tpu_custom_call.1} parent=1 // pred_check_branch
      %94 = sbr.rel (0) target = $region37
    $region36: #{tpu_custom_call.1} parent=1 // pred_region
      _
    $region37: #{tpu_custom_call.1} parent=1 // pred_fallthru
      _
    // Predicated region
    $region38: #{tpu_custom_call.1} parent=1 // pred_check
      _
    $region39: #{tpu_custom_call.1} parent=1 // pred_check_branch
      %96 = sbr.rel (0) target = $region41
    $region40: #{tpu_custom_call.1} parent=1 // pred_region
      %98 = vsyncadd [#allocation14], 0
      %s99 = sshll.u32 %s9, 4
      %s100 = int_to_ptr.hbm [resolvable:$true] %s99
      %s101 = sshll.u32 [#allocation13], 4
      %s102 = int_to_ptr.vmem [resolvable:$true] %s101
      %107 = dma.hbm_to_vmem [thread:$0]  %s100, 1024, %s102, [#allocation14], 128, 128, 8
    $region41: #{tpu_custom_call.1} parent=1 // pred_fallthru
      _
    // Predicated region
    $region42: #{tpu_custom_call.1} parent=1 // pred_check
      _
    $region43: #{tpu_custom_call.1} parent=1 // pred_check_branch
      %109 = sbr.rel (0) target = $region45
    $region44: #{tpu_custom_call.1} parent=1 // pred_region
      _
    $region45: #{tpu_custom_call.1} parent=1 // pred_fallthru
      _
    // Predicated region
    $region46: #{tpu_custom_call.1} parent=1 // pred_check
      _
    $region47: #{tpu_custom_call.1} parent=1 // pred_check_branch
      %111 = sbr.rel (0) target = $region49
    $region48: #{tpu_custom_call.1} parent=1 // pred_region
      _
    $region49: #{tpu_custom_call.1} parent=1 // pred_fallthru
      _
    // Predicated region
    $region50: #{tpu_custom_call.1} parent=1 // pred_check
      _
    $region51: #{tpu_custom_call.1} parent=1 // pred_check_branch
      %113 = sbr.rel (0) target = $region53
    $region52: #{tpu_custom_call.1} parent=1 // pred_region
      %115 = dma.done [#allocation5], 256
    $region53: #{tpu_custom_call.1} parent=1 // pred_fallthru
      _
    // Predicated region
    $region54: #{tpu_custom_call.1} parent=1 // pred_check
      _
    $region55: #{tpu_custom_call.1} parent=1 // pred_check_branch
      %117 = sbr.rel (0) target = $region57
    $region56: #{tpu_custom_call.1} parent=1 // pred_region
      %119 = dma.done [#allocation8], 256
    $region57: #{tpu_custom_call.1} parent=1 // pred_fallthru
      _
    // Predicated region
    $region58: #{tpu_custom_call.1} parent=1 // pred_check
      _
    $region59: #{tpu_custom_call.1} parent=1 // pred_check_branch
      %121 = sbr.rel (0) target = $region61
    $region60: #{tpu_custom_call.1} parent=1 // pred_region
      %123 = dma.done [#allocation8], 1024
    $region61: #{tpu_custom_call.1} parent=1 // pred_fallthru
      _
    // Predicated region
    $region62: #{tpu_custom_call.1} parent=1 // pred_check
      _
    $region63: #{tpu_custom_call.1} parent=1 // pred_check_branch
      %125 = sbr.rel (0) target = $region65
    $region64: #{tpu_custom_call.1} parent=1 // pred_region
      %127 = dma.done [#allocation11], 1024
    $region65: #{tpu_custom_call.1} parent=1 // pred_fallthru
      _
    // Predicated region
    $region66: #{tpu_custom_call.1} parent=1 // pred_check
      _
    $region67: #{tpu_custom_call.1} parent=1 // pred_check_branch
      %129 = sbr.rel (0) target = $region69
    $region68: #{tpu_custom_call.1} parent=1 // pred_region
      %131 = dma.done [#allocation11], 2048
    $region69: #{tpu_custom_call.1} parent=1 // pred_fallthru
      _
    // Predicated region
    $region70: #{tpu_custom_call.1} parent=1 // pred_check
      _
    $region71: #{tpu_custom_call.1} parent=1 // pred_check_branch
      %133 = sbr.rel (0) target = $region73
    $region72: #{tpu_custom_call.1} parent=1 // pred_region
      %135 = dma.done [#allocation14], 1024
    $region73: #{tpu_custom_call.1} parent=1 // pred_fallthru
      _
    %v137 = vld [vmem:[%s0] sm:$0xff]
    %v138 = vld [vmem:[%s0 + $0x8] sm:$0xff]
    %v139 = vpack.c.bf16 %v138, %v137
    %v140 = vld [vmem:[#allocation7] sm:$0xff]
    %v141 = vld [vmem:[#allocation7 + $0x8] sm:$0xff]
    %v144 = vunpack.c.l.b16 %v140
    %v145 = vunpack.c.h.b16 %v140
    %v146 = vunpack.c.l.b16 %v141
    %v147 = vunpack.c.h.b16 %v141
    %v148 = vpack.c.b16 %v146, %v144
    %v149 = vpack.c.b16 %v147, %v145
    %vm152 = vcmask 130048
    %v154 = vsel %vm152, %v139, 0
    %156 = vmatpush.bf16.msra.mxu0 0
    %157 = vmatpush.bf16.msra.mxu0 0
    %158 = vmatpush.bf16.msra.mxu0 0
    %159 = vmatpush.bf16.msra.mxu0 0
    %160 = vmatpush.bf16.msra.mxu0 0
    %161 = vmatpush.bf16.msra.mxu0 0
    %162 = vmatpush.bf16.msra.mxu0 0
    %163 = vmatpush.bf16.msra.mxu0 %v148
    %164 = vmatmul.bf16.gmra.mxu0 %v154
    %v165 = vpop.f32.mrf.mxu0
    %v166 = vadd.f32 0.0, %v165
    %v167 = vpop.f32.mrf.mxu0
    %v168 = vadd.f32 0.0, %v167
    %169 = vdwg.mxu0
    %170 = vmatpush.bf16.msra.mxu0 0
    %171 = vmatpush.bf16.msra.mxu0 0
    %172 = vmatpush.bf16.msra.mxu0 0
    %173 = vmatpush.bf16.msra.mxu0 0
    %174 = vmatpush.bf16.msra.mxu0 0
    %175 = vmatpush.bf16.msra.mxu0 0
    %176 = vmatpush.bf16.msra.mxu0 0
    %177 = vmatpush.bf16.msra.mxu0 %v149
    %178 = vmatmul.bf16.gmra.mxu0 %v154
    %v179 = vpop.f32.mrf.mxu0
    %v180 = vadd.f32 0.0, %v179
    %v181 = vpop.f32.mrf.mxu0
    %v182 = vadd.f32 0.0, %v181
    %183 = vdwg.mxu0
    %184 = vst [vmem:[#allocation2] sm:$0xff] %v166
    %185 = vst [vmem:[#allocation2 + $0x8] sm:$0xff] %v180
    %186 = vst [vmem:[#allocation2 + $0x10] sm:$0xff] %v168
    %187 = vst [vmem:[#allocation2 + $0x18] sm:$0xff] %v182
    %v188 = vld [vmem:[#allocation9] sm:$0xff]
    %v189 = vld [vmem:[#allocation9 + $0x8] sm:$0xff]
    %v190 = vld [vmem:[#allocation9 + $0x10] sm:$0xff]
    %v191 = vld [vmem:[#allocation9 + $0x18] sm:$0xff]
    %v192 = vld [vmem:[#allocation9 + $0x20] sm:$0xff]
    %v193 = vld [vmem:[#allocation9 + $0x28] sm:$0xff]
    %v194 = vld [vmem:[#allocation9 + $0x30] sm:$0xff]
    %v195 = vld [vmem:[#allocation9 + $0x38] sm:$0xff]
    %v196 = vld [vmem:[#allocation2] sm:$0x3]
    %v197 = vld [vmem:[#allocation2 + $0x8] sm:$0x3]
    %v206 = vunpack.c.l.b16 %v188
    %v207 = vunpack.c.h.b16 %v188
    %v208 = vunpack.c.l.b16 %v189
    %v209 = vunpack.c.h.b16 %v189
    %v210 = vunpack.c.l.b16 %v190
    %v211 = vunpack.c.h.b16 %v190
    %v212 = vunpack.c.l.b16 %v191
    %v213 = vunpack.c.h.b16 %v191
    %v214 = vunpack.c.l.b16 %v192
    %v215 = vunpack.c.h.b16 %v192
    %v216 = vunpack.c.l.b16 %v193
    %v217 = vunpack.c.h.b16 %v193
    %v218 = vunpack.c.l.b16 %v194
    %v219 = vunpack.c.h.b16 %v194
    %v220 = vunpack.c.l.b16 %v195
    %v221 = vunpack.c.h.b16 %v195
    %v222 = vpack.c.b16 %v208, %v206
    %v223 = vpack.c.b16 %v209, %v207
    %v224 = vpack.c.b16 %v212, %v210
    %v225 = vpack.c.b16 %v213, %v211
    %v226 = vpack.c.b16 %v216, %v214
    %v227 = vpack.c.b16 %v217, %v215
    %v228 = vpack.c.b16 %v220, %v218
    %v229 = vpack.c.b16 %v221, %v219
    %vm238 = vcmask 523264
    %v240 = vsel %vm238, 0, 0
    %242 = vmatpush.bf16.msra.mxu0 0
    %243 = vmatpush.bf16.msra.mxu0 0
    %244 = vmatpush.bf16.msra.mxu0 0
    %245 = vmatpush.bf16.msra.mxu0 0
    %246 = vmatpush.bf16.msra.mxu0 %v228
    %247 = vmatpush.bf16.msra.mxu0 %v226
    %248 = vmatpush.bf16.msra.mxu0 %v224
    %249 = vmatpush.bf16.msra.mxu0 %v222
    %250 = vmatmul.bf16.gmra.mxu0 %v240
    %v251 = vpop.f32.mrf.mxu0
    %v252 = vadd.f32 0.0, %v251
    %v253 = vpop.f32.mrf.mxu0
    %254 = vdwg.mxu0
    %255 = vmatpush.bf16.msra.mxu0 0
    %256 = vmatpush.bf16.msra.mxu0 0
    %257 = vmatpush.bf16.msra.mxu0 0
    %258 = vmatpush.bf16.msra.mxu0 0
    %259 = vmatpush.bf16.msra.mxu0 %v229
    %260 = vmatpush.bf16.msra.mxu0 %v227
    %261 = vmatpush.bf16.msra.mxu0 %v225
    %262 = vmatpush.bf16.msra.mxu0 %v223
    %263 = vmatmul.bf16.gmra.mxu0 %v240
    %v264 = vpop.f32.mrf.mxu0
    %v265 = vadd.f32 0.0, %v264
    %v266 = vpop.f32.mrf.mxu0
    %267 = vdwg.mxu0
    %v268 = vadd.f32 %v196, %v252
    %v269 = vadd.f32 %v197, %v265
    %v270 = vxor.u32 %v268, 2147483648
    %v271 = vxor.u32 %v269, 2147483648
    %v272 = vmul.f32 %v270, 1.442695
    %v273 = vpow.pop %v272
    %v274 = vmul.f32 %v271, 1.442695
    %v275 = vpow.pop %v274
    %v276 = vadd.f32 %v273, 1.0
    %v277 = vadd.f32 %v275, 1.0
    %v278 = vrcp.pop %v276
    %v279 = vmul.f32 %v276, %v278
    %v280 = vsub.f32 1.0, %v279
    %v281 = vmul.f32 %v278, %v280
    %v282 = vadd.f32 %v278, %v281
    %vm283 = vweird.f32 %v276
    %vm284 = vweird.f32 %v278
    %vm285 = vmor %vm283, %vm284
    %v286 = vsel %vm285, %v278, %v282
    %v287 = vand.u32 2147483647, %v276
    %vm288 = vcmp.eq.f32.partialorder %v287, 8.507059e+37
    %v289 = vand.u32 %v276, 2147483648
    %v290 = vor.u32 1.1754944e-38, %v289
    %v291 = vsel %vm288, %v290, %v286
    %v292 = vmul.f32 1.0, %v291
    %v293 = vrcp.pop %v277
    %v294 = vmul.f32 %v277, %v293
    %v295 = vsub.f32 1.0, %v294
    %v296 = vmul.f32 %v293, %v295
    %v297 = vadd.f32 %v293, %v296
    %vm298 = vweird.f32 %v277
    %vm299 = vweird.f32 %v293
    %vm300 = vmor %vm298, %vm299
    %v301 = vsel %vm300, %v293, %v297
    %v302 = vand.u32 2147483647, %v277
    %vm303 = vcmp.eq.f32.partialorder %v302, 8.507059e+37
    %v304 = vand.u32 %v277, 2147483648
    %v305 = vor.u32 1.1754944e-38, %v304
    %v306 = vsel %vm303, %v305, %v301
    %v307 = vmul.f32 1.0, %v306
    %v308 = vtanh.pop %v269
    %v309 = vmul.f32 %v292, 0.0
    %311 = vrot.lane.b32.xlu0 %v308, 64
    %v312 = vpop.permute.xlu0 %311
    %v314 = vmul.f32 %v292, %v312
    %316 = vrot.lane.b32.xlu0 %v314, 64
    %v317 = vpop.permute.xlu0 %316
    %v319 = vadd.f32 %v309, %v317
    %v320 = vtanh.pop %v319
    %322 = vrot.lane.b32.xlu0 %v320, 64
    %v323 = vpop.permute.xlu0 %322
    %v325 = vmul.f32 %v307, %v323
    %v326 = vld [vmem:[#allocation4] sm:$0x3]
    %v327 = vsub.f32 1.0, %v326
    %v328 = vmul.f32 %v326, %v325
    %330 = vrot.lane.b32.xlu0 %v319, 64
    %v331 = vpop.permute.xlu0 %330
    %v333 = vmul.f32 %v326, %v331
    %v334 = vmul.f32 %v327, 0.0
    %v335 = vadd.f32 %v333, %v334
    %v336 = vadd.f32 %v328, %v334
    %vm337 = vcmask 517120
    %338 = vst.msk [vmem:[#allocation3] sm:$0x3] %vm337, %v328
    %340 = vrot.lane.b32.xlu0 %v328, 64
    %v341 = vpop.permute.xlu0 %340
    %vm343 = vcmask 1041920
    %344 = vst.msk [vmem:[#allocation3 + $0xe] sm:$0x3] %vm343, %v341
    %v345 = vld [vmem:[#allocation2] sm:$0xc]
    %v346 = vld [vmem:[#allocation2 + $0x8] sm:$0xc]
    %v347 = vpack.c.bf16 %v336, %v336
    %v349 = vsel %vm238, %v347, 0
    %351 = vmatpush.bf16.msra.mxu0 0
    %352 = vmatpush.bf16.msra.mxu0 0
    %353 = vmatpush.bf16.msra.mxu0 0
    %354 = vmatpush.bf16.msra.mxu0 0
    %355 = vmatpush.bf16.msra.mxu0 %v228
    %356 = vmatpush.bf16.msra.mxu0 %v226
    %357 = vmatpush.bf16.msra.mxu0 %v224
    %358 = vmatpush.bf16.msra.mxu0 %v222
    %359 = vmatmul.bf16.gmra.mxu0 %v349
    %v360 = vpop.f32.mrf.mxu0
    %v361 = vadd.f32 0.0, %v360
    %v362 = vpop.f32.mrf.mxu0
    %363 = vdwg.mxu0
    %364 = vmatpush.bf16.msra.mxu0 0
    %365 = vmatpush.bf16.msra.mxu0 0
    %366 = vmatpush.bf16.msra.mxu0 0
    %367 = vmatpush.bf16.msra.mxu0 0
    %368 = vmatpush.bf16.msra.mxu0 %v229
    %369 = vmatpush.bf16.msra.mxu0 %v227
    %370 = vmatpush.bf16.msra.mxu0 %v225
    %371 = vmatpush.bf16.msra.mxu0 %v223
    %372 = vmatmul.bf16.gmra.mxu0 %v349
    %v373 = vpop.f32.mrf.mxu0
    %v374 = vadd.f32 0.0, %v373
    %v375 = vpop.f32.mrf.mxu0
    %376 = vdwg.mxu0
    %v379 = vrot.slane %v361, 6
    %v380 = vrot.slane %v374, 6
    %v383 = vadd.f32 %v345, %v379
    %v384 = vadd.f32 %v346, %v380
    %v385 = vxor.u32 %v383, 2147483648
    %v386 = vxor.u32 %v384, 2147483648
    %v387 = vmul.f32 %v385, 1.442695
    %v388 = vpow.pop %v387
    %v389 = vmul.f32 %v386, 1.442695
    %v390 = vpow.pop %v389
    %v391 = vadd.f32 %v388, 1.0
    %v392 = vadd.f32 %v390, 1.0
    %v393 = vrcp.pop %v391
    %v394 = vmul.f32 %v391, %v393
    %v395 = vsub.f32 1.0, %v394
    %v396 = vmul.f32 %v393, %v395
    %v397 = vadd.f32 %v393, %v396
    %vm398 = vweird.f32 %v391
    %vm399 = vweird.f32 %v393
    %vm400 = vmor %vm398, %vm399
    %v401 = vsel %vm400, %v393, %v397
    %v402 = vand.u32 2147483647, %v391
    %vm403 = vcmp.eq.f32.partialorder %v402, 8.507059e+37
    %v404 = vand.u32 %v391, 2147483648
    %v405 = vor.u32 1.1754944e-38, %v404
    %v406 = vsel %vm403, %v405, %v401
    %v407 = vmul.f32 1.0, %v406
    %v408 = vrcp.pop %v392
    %v409 = vmul.f32 %v392, %v408
    %v410 = vsub.f32 1.0, %v409
    %v411 = vmul.f32 %v408, %v410
    %v412 = vadd.f32 %v408, %v411
    %vm413 = vweird.f32 %v392
    %vm414 = vweird.f32 %v408
    %vm415 = vmor %vm413, %vm414
    %v416 = vsel %vm415, %v408, %v412
    %v417 = vand.u32 2147483647, %v392
    %vm418 = vcmp.eq.f32.partialorder %v417, 8.507059e+37
    %v419 = vand.u32 %v392, 2147483648
    %v420 = vor.u32 1.1754944e-38, %v419
    %v421 = vsel %vm418, %v420, %v416
    %v422 = vmul.f32 1.0, %v421
    %v423 = vtanh.pop %v384
    %v425 = vrot.slane %v335, 6
    %426 = vrot.lane.b32.xlu0 %v425, 64
    %v427 = vpop.permute.xlu0 %426
    %v429 = vmul.f32 %v407, %v427
    %431 = vrot.lane.b32.xlu0 %v423, 64
    %v432 = vpop.permute.xlu0 %431
    %v434 = vmul.f32 %v407, %v432
    %436 = vrot.lane.b32.xlu0 %v434, 64
    %v437 = vpop.permute.xlu0 %436
    %v439 = vadd.f32 %v429, %v437
    %v440 = vtanh.pop %v439
    %442 = vrot.lane.b32.xlu0 %v440, 64
    %v443 = vpop.permute.xlu0 %442
    %v445 = vmul.f32 %v422, %v443
    %v446 = vld [vmem:[#allocation4 + $0x2] sm:$0x3]
    %v447 = vsub.f32 1.0, %v446
    %v449 = vrot.slane %v445, 2
    %v451 = vmul.f32 %v446, %v449
    %v453 = vrot.slane %v439, 2
    %454 = vrot.lane.b32.xlu0 %v453, 64
    %v455 = vpop.permute.xlu0 %454
    %v457 = vmul.f32 %v446, %v455
    %v458 = vmul.f32 %v447, %v335
    %v459 = vadd.f32 %v457, %v458
    %v460 = vmul.f32 %v447, %v336
    %v461 = vadd.f32 %v451, %v460
    %462 = vst.msk [vmem:[#allocation3 + $0x2] sm:$0x3] %vm337, %v451
    %464 = vrot.lane.b32.xlu0 %v451, 64
    %v465 = vpop.permute.xlu0 %464
    %467 = vst.msk [vmem:[#allocation3 + $0xc] sm:$0x3] %vm343, %v465
    %v468 = vld [vmem:[#allocation2] sm:$0x30]
    %v469 = vld [vmem:[#allocation2 + $0x8] sm:$0x30]
    %v470 = vpack.c.bf16 %v461, %v461
    %v472 = vsel %vm238, %v470, 0
    %474 = vmatpush.bf16.msra.mxu0 0
    %475 = vmatpush.bf16.msra.mxu0 0
    %476 = vmatpush.bf16.msra.mxu0 0
    %477 = vmatpush.bf16.msra.mxu0 0
    %478 = vmatpush.bf16.msra.mxu0 %v228
    %479 = vmatpush.bf16.msra.mxu0 %v226
    %480 = vmatpush.bf16.msra.mxu0 %v224
    %481 = vmatpush.bf16.msra.mxu0 %v222
    %482 = vmatmul.bf16.gmra.mxu0 %v472
    %v483 = vpop.f32.mrf.mxu0
    %v484 = vadd.f32 0.0, %v483
    %v485 = vpop.f32.mrf.mxu0
    %486 = vdwg.mxu0
    %487 = vmatpush.bf16.msra.mxu0 0
    %488 = vmatpush.bf16.msra.mxu0 0
    %489 = vmatpush.bf16.msra.mxu0 0
    %490 = vmatpush.bf16.msra.mxu0 0
    %491 = vmatpush.bf16.msra.mxu0 %v229
    %492 = vmatpush.bf16.msra.mxu0 %v227
    %493 = vmatpush.bf16.msra.mxu0 %v225
    %494 = vmatpush.bf16.msra.mxu0 %v223
    %495 = vmatmul.bf16.gmra.mxu0 %v472
    %v496 = vpop.f32.mrf.mxu0
    %v497 = vadd.f32 0.0, %v496
    %v498 = vpop.f32.mrf.mxu0
    %499 = vdwg.mxu0
    %v502 = vrot.slane %v484, 4
    %v503 = vrot.slane %v497, 4
    %v506 = vadd.f32 %v468, %v502
    %v507 = vadd.f32 %v469, %v503
    %v508 = vxor.u32 %v506, 2147483648
    %v509 = vxor.u32 %v507, 2147483648
    %v510 = vmul.f32 %v508, 1.442695
    %v511 = vpow.pop %v510
    %v512 = vmul.f32 %v509, 1.442695
    %v513 = vpow.pop %v512
    %v514 = vadd.f32 %v511, 1.0
    %v515 = vadd.f32 %v513, 1.0
    %v516 = vrcp.pop %v514
    %v517 = vmul.f32 %v514, %v516
    %v518 = vsub.f32 1.0, %v517
    %v519 = vmul.f32 %v516, %v518
    %v520 = vadd.f32 %v516, %v519
    %vm521 = vweird.f32 %v514
    %vm522 = vweird.f32 %v516
    %vm523 = vmor %vm521, %vm522
    %v524 = vsel %vm523, %v516, %v520
    %v525 = vand.u32 2147483647, %v514
    %vm526 = vcmp.eq.f32.partialorder %v525, 8.507059e+37
    %v527 = vand.u32 %v514, 2147483648
    %v528 = vor.u32 1.1754944e-38, %v527
    %v529 = vsel %vm526, %v528, %v524
    %v530 = vmul.f32 1.0, %v529
    %v531 = vrcp.pop %v515
    %v532 = vmul.f32 %v515, %v531
    %v533 = vsub.f32 1.0, %v532
    %v534 = vmul.f32 %v531, %v533
    %v535 = vadd.f32 %v531, %v534
    %vm536 = vweird.f32 %v515
    %vm537 = vweird.f32 %v531
    %vm538 = vmor %vm536, %vm537
    %v539 = vsel %vm538, %v531, %v535
    %v540 = vand.u32 2147483647, %v515
    %vm541 = vcmp.eq.f32.partialorder %v540, 8.507059e+37
    %v542 = vand.u32 %v515, 2147483648
    %v543 = vor.u32 1.1754944e-38, %v542
    %v544 = vsel %vm541, %v543, %v539
    %v545 = vmul.f32 1.0, %v544
    %v546 = vtanh.pop %v507
    %v548 = vrot.slane %v459, 4
    %549 = vrot.lane.b32.xlu0 %v548, 64
    %v550 = vpop.permute.xlu0 %549
    %v552 = vmul.f32 %v530, %v550
    %554 = vrot.lane.b32.xlu0 %v546, 64
    %v555 = vpop.permute.xlu0 %554
    %v557 = vmul.f32 %v530, %v555
    %559 = vrot.lane.b32.xlu0 %v557, 64
    %v560 = vpop.permute.xlu0 %559
    %v562 = vadd.f32 %v552, %v560
    %v563 = vtanh.pop %v562
    %565 = vrot.lane.b32.xlu0 %v563, 64
    %v566 = vpop.permute.xlu0 %565
    %v568 = vmul.f32 %v545, %v566
    %v569 = vld [vmem:[#allocation4 + $0x4] sm:$0x3]
    %v570 = vsub.f32 1.0, %v569
    %v572 = vrot.slane %v568, 4
    %v574 = vmul.f32 %v569, %v572
    %v576 = vrot.slane %v562, 4
    %577 = vrot.lane.b32.xlu0 %v576, 64
    %v578 = vpop.permute.xlu0 %577
    %v580 = vmul.f32 %v569, %v578
    %v581 = vmul.f32 %v570, %v459
    %v582 = vadd.f32 %v580, %v581
    %v583 = vmul.f32 %v570, %v461
    %v584 = vadd.f32 %v574, %v583
    %585 = vst.msk [vmem:[#allocation3 + $0x4] sm:$0x3] %vm337, %v574
    %587 = vrot.lane.b32.xlu0 %v574, 64
    %v588 = vpop.permute.xlu0 %587
    %590 = vst.msk [vmem:[#allocation3 + $0xa] sm:$0x3] %vm343, %v588
    %v591 = vld [vmem:[#allocation2] sm:$0xc0]
    %v592 = vld [vmem:[#allocation2 + $0x8] sm:$0xc0]
    %v593 = vpack.c.bf16 %v584, %v584
    %v595 = vsel %vm238, %v593, 0
    %597 = vmatpush.bf16.msra.mxu0 0
    %598 = vmatpush.bf16.msra.mxu0 0
    %599 = vmatpush.bf16.msra.mxu0 0
    %600 = vmatpush.bf16.msra.mxu0 0
    %601 = vmatpush.bf16.msra.mxu0 %v228
    %602 = vmatpush.bf16.msra.mxu0 %v226
    %603 = vmatpush.bf16.msra.mxu0 %v224
    %604 = vmatpush.bf16.msra.mxu0 %v222
    %605 = vmatmul.bf16.gmra.mxu0 %v595
    %v606 = vpop.f32.mrf.mxu0
    %v607 = vadd.f32 0.0, %v606
    %v608 = vpop.f32.mrf.mxu0
    %609 = vdwg.mxu0
    %610 = vmatpush.bf16.msra.mxu0 0
    %611 = vmatpush.bf16.msra.mxu0 0
    %612 = vmatpush.bf16.msra.mxu0 0
    %613 = vmatpush.bf16.msra.mxu0 0
    %614 = vmatpush.bf16.msra.mxu0 %v229
    %615 = vmatpush.bf16.msra.mxu0 %v227
    %616 = vmatpush.bf16.msra.mxu0 %v225
    %617 = vmatpush.bf16.msra.mxu0 %v223
    %618 = vmatmul.bf16.gmra.mxu0 %v595
    %v619 = vpop.f32.mrf.mxu0
    %v620 = vadd.f32 0.0, %v619
    %v621 = vpop.f32.mrf.mxu0
    %622 = vdwg.mxu0
    %v625 = vrot.slane %v607, 2
    %v626 = vrot.slane %v620, 2
    %v629 = vadd.f32 %v591, %v625
    %v630 = vadd.f32 %v592, %v626
    %v631 = vxor.u32 %v629, 2147483648
    %v632 = vxor.u32 %v630, 2147483648
    %v633 = vmul.f32 %v631, 1.442695
    %v634 = vpow.pop %v633
    %v635 = vmul.f32 %v632, 1.442695
    %v636 = vpow.pop %v635
    %v637 = vadd.f32 %v634, 1.0
    %v638 = vadd.f32 %v636, 1.0
    %v639 = vrcp.pop %v637
    %v640 = vmul.f32 %v637, %v639
    %v641 = vsub.f32 1.0, %v640
    %v642 = vmul.f32 %v639, %v641
    %v643 = vadd.f32 %v639, %v642
    %vm644 = vweird.f32 %v637
    %vm645 = vweird.f32 %v639
    %vm646 = vmor %vm644, %vm645
    %v647 = vsel %vm646, %v639, %v643
    %v648 = vand.u32 2147483647, %v637
    %vm649 = vcmp.eq.f32.partialorder %v648, 8.507059e+37
    %v650 = vand.u32 %v637, 2147483648
    %v651 = vor.u32 1.1754944e-38, %v650
    %v652 = vsel %vm649, %v651, %v647
    %v653 = vmul.f32 1.0, %v652
    %v654 = vrcp.pop %v638
    %v655 = vmul.f32 %v638, %v654
    %v656 = vsub.f32 1.0, %v655
    %v657 = vmul.f32 %v654, %v656
    %v658 = vadd.f32 %v654, %v657
    %vm659 = vweird.f32 %v638
    %vm660 = vweird.f32 %v654
    %vm661 = vmor %vm659, %vm660
    %v662 = vsel %vm661, %v654, %v658
    %v663 = vand.u32 2147483647, %v638
    %vm664 = vcmp.eq.f32.partialorder %v663, 8.507059e+37
    %v665 = vand.u32 %v638, 2147483648
    %v666 = vor.u32 1.1754944e-38, %v665
    %v667 = vsel %vm664, %v666, %v662
    %v668 = vmul.f32 1.0, %v667
    %v669 = vtanh.pop %v630
    %v671 = vrot.slane %v582, 2
    %672 = vrot.lane.b32.xlu0 %v671, 64
    %v673 = vpop.permute.xlu0 %672
    %v675 = vmul.f32 %v653, %v673
    %677 = vrot.lane.b32.xlu0 %v669, 64
    %v678 = vpop.permute.xlu0 %677
    %v680 = vmul.f32 %v653, %v678
    %682 = vrot.lane.b32.xlu0 %v680, 64
    %v683 = vpop.permute.xlu0 %682
    %v685 = vadd.f32 %v675, %v683
    %v686 = vtanh.pop %v685
    %688 = vrot.lane.b32.xlu0 %v686, 64
    %v689 = vpop.permute.xlu0 %688
    %v691 = vmul.f32 %v668, %v689
    %v692 = vld [vmem:[#allocation4 + $0x6] sm:$0x3]
    %v693 = vsub.f32 1.0, %v692
    %v695 = vrot.slane %v691, 6
    %v697 = vmul.f32 %v692, %v695
    %v699 = vrot.slane %v685, 6
    %700 = vrot.lane.b32.xlu0 %v699, 64
    %v701 = vpop.permute.xlu0 %700
    %v703 = vmul.f32 %v692, %v701
    %v704 = vmul.f32 %v693, %v582
    %v705 = vadd.f32 %v703, %v704
    %v706 = vmul.f32 %v693, %v584
    %v707 = vadd.f32 %v697, %v706
    %708 = vst.msk [vmem:[#allocation3 + $0x6] sm:$0x3] %vm337, %v697
    %710 = vrot.lane.b32.xlu0 %v697, 64
    %v711 = vpop.permute.xlu0 %710
    %713 = vst.msk [vmem:[#allocation3 + $0x8] sm:$0x3] %vm343, %v711
    %v714 = vld [vmem:[#allocation2 + $0x10] sm:$0x3]
    %v715 = vld [vmem:[#allocation2 + $0x18] sm:$0x3]
    %v716 = vpack.c.bf16 %v707, %v707
    %v718 = vsel %vm238, %v716, 0
    %720 = vmatpush.bf16.msra.mxu0 0
    %721 = vmatpush.bf16.msra.mxu0 0
    %722 = vmatpush.bf16.msra.mxu0 0
    %723 = vmatpush.bf16.msra.mxu0 0
    %724 = vmatpush.bf16.msra.mxu0 %v228
    %725 = vmatpush.bf16.msra.mxu0 %v226
    %726 = vmatpush.bf16.msra.mxu0 %v224
    %727 = vmatpush.bf16.msra.mxu0 %v222
    %728 = vmatmul.bf16.gmra.mxu0 %v718
    %v729 = vpop.f32.mrf.mxu0
    %v730 = vadd.f32 0.0, %v729
    %v731 = vpop.f32.mrf.mxu0
    %732 = vdwg.mxu0
    %733 = vmatpush.bf16.msra.mxu0 0
    %734 = vmatpush.bf16.msra.mxu0 0
    %735 = vmatpush.bf16.msra.mxu0 0
    %736 = vmatpush.bf16.msra.mxu0 0
    %737 = vmatpush.bf16.msra.mxu0 %v229
    %738 = vmatpush.bf16.msra.mxu0 %v227
    %739 = vmatpush.bf16.msra.mxu0 %v225
    %740 = vmatpush.bf16.msra.mxu0 %v223
    %741 = vmatmul.bf16.gmra.mxu0 %v718
    %v742 = vpop.f32.mrf.mxu0
    %v743 = vadd.f32 0.0, %v742
    %v744 = vpop.f32.mrf.mxu0
    %745 = vdwg.mxu0
    %v746 = vadd.f32 %v714, %v730
    %v747 = vadd.f32 %v715, %v743
    %v748 = vxor.u32 %v746, 2147483648
    %v749 = vxor.u32 %v747, 2147483648
    %v750 = vmul.f32 %v748, 1.442695
    %v751 = vpow.pop %v750
    %v752 = vmul.f32 %v749, 1.442695
    %v753 = vpow.pop %v752
    %v754 = vadd.f32 %v751, 1.0
    %v755 = vadd.f32 %v753, 1.0
    %v756 = vrcp.pop %v754
    %v757 = vmul.f32 %v754, %v756
    %v758 = vsub.f32 1.0, %v757
    %v759 = vmul.f32 %v756, %v758
    %v760 = vadd.f32 %v756, %v759
    %vm761 = vweird.f32 %v754
    %vm762 = vweird.f32 %v756
    %vm763 = vmor %vm761, %vm762
    %v764 = vsel %vm763, %v756, %v760
    %v765 = vand.u32 2147483647, %v754
    %vm766 = vcmp.eq.f32.partialorder %v765, 8.507059e+37
    %v767 = vand.u32 %v754, 2147483648
    %v768 = vor.u32 1.1754944e-38, %v767
    %v769 = vsel %vm766, %v768, %v764
    %v770 = vmul.f32 1.0, %v769
    %v771 = vrcp.pop %v755
    %v772 = vmul.f32 %v755, %v771
    %v773 = vsub.f32 1.0, %v772
    %v774 = vmul.f32 %v771, %v773
    %v775 = vadd.f32 %v771, %v774
    %vm776 = vweird.f32 %v755
    %vm777 = vweird.f32 %v771
    %vm778 = vmor %vm776, %vm777
    %v779 = vsel %vm778, %v771, %v775
    %v780 = vand.u32 2147483647, %v755
    %vm781 = vcmp.eq.f32.partialorder %v780, 8.507059e+37
    %v782 = vand.u32 %v755, 2147483648
    %v783 = vor.u32 1.1754944e-38, %v782
    %v784 = vsel %vm781, %v783, %v779
    %v785 = vmul.f32 1.0, %v784
    %v786 = vtanh.pop %v747
    %788 = vrot.lane.b32.xlu0 %v705, 64
    %v789 = vpop.permute.xlu0 %788
    %v791 = vmul.f32 %v770, %v789
    %793 = vrot.lane.b32.xlu0 %v786, 64
    %v794 = vpop.permute.xlu0 %793
    %v796 = vmul.f32 %v770, %v794
    %798 = vrot.lane.b32.xlu0 %v796, 64
    %v799 = vpop.permute.xlu0 %798
    %v801 = vadd.f32 %v791, %v799
    %v802 = vtanh.pop %v801
    %804 = vrot.lane.b32.xlu0 %v802, 64
    %v805 = vpop.permute.xlu0 %804
    %v807 = vmul.f32 %v785, %v805
    %v808 = vld [vmem:[#allocation4 + $0x8] sm:$0x3]
    %v809 = vsub.f32 1.0, %v808
    %v810 = vmul.f32 %v808, %v807
    %812 = vrot.lane.b32.xlu0 %v801, 64
    %v813 = vpop.permute.xlu0 %812
    %v815 = vmul.f32 %v808, %v813
    %v816 = vmul.f32 %v809, %v705
    %v817 = vadd.f32 %v815, %v816
    %v818 = vmul.f32 %v809, %v707
    %v819 = vadd.f32 %v810, %v818
    %820 = vst.msk [vmem:[#allocation3 + $0x8] sm:$0x3] %vm337, %v810
    %822 = vrot.lane.b32.xlu0 %v810, 64
    %v823 = vpop.permute.xlu0 %822
    %825 = vst.msk [vmem:[#allocation3 + $0x6] sm:$0x3] %vm343, %v823
    %v826 = vld [vmem:[#allocation2 + $0x10] sm:$0xc]
    %v827 = vld [vmem:[#allocation2 + $0x18] sm:$0xc]
    %v828 = vpack.c.bf16 %v819, %v819
    %v830 = vsel %vm238, %v828, 0
    %832 = vmatpush.bf16.msra.mxu0 0
    %833 = vmatpush.bf16.msra.mxu0 0
    %834 = vmatpush.bf16.msra.mxu0 0
    %835 = vmatpush.bf16.msra.mxu0 0
    %836 = vmatpush.bf16.msra.mxu0 %v228
    %837 = vmatpush.bf16.msra.mxu0 %v226
    %838 = vmatpush.bf16.msra.mxu0 %v224
    %839 = vmatpush.bf16.msra.mxu0 %v222
    %840 = vmatmul.bf16.gmra.mxu0 %v830
    %v841 = vpop.f32.mrf.mxu0
    %v842 = vadd.f32 0.0, %v841
    %v843 = vpop.f32.mrf.mxu0
    %844 = vdwg.mxu0
    %845 = vmatpush.bf16.msra.mxu0 0
    %846 = vmatpush.bf16.msra.mxu0 0
    %847 = vmatpush.bf16.msra.mxu0 0
    %848 = vmatpush.bf16.msra.mxu0 0
    %849 = vmatpush.bf16.msra.mxu0 %v229
    %850 = vmatpush.bf16.msra.mxu0 %v227
    %851 = vmatpush.bf16.msra.mxu0 %v225
    %852 = vmatpush.bf16.msra.mxu0 %v223
    %853 = vmatmul.bf16.gmra.mxu0 %v830
    %v854 = vpop.f32.mrf.mxu0
    %v855 = vadd.f32 0.0, %v854
    %v856 = vpop.f32.mrf.mxu0
    %857 = vdwg.mxu0
    %v860 = vrot.slane %v842, 6
    %v861 = vrot.slane %v855, 6
    %v864 = vadd.f32 %v826, %v860
    %v865 = vadd.f32 %v827, %v861
    %v866 = vxor.u32 %v864, 2147483648
    %v867 = vxor.u32 %v865, 2147483648
    %v868 = vmul.f32 %v866, 1.442695
    %v869 = vpow.pop %v868
    %v870 = vmul.f32 %v867, 1.442695
    %v871 = vpow.pop %v870
    %v872 = vadd.f32 %v869, 1.0
    %v873 = vadd.f32 %v871, 1.0
    %v874 = vrcp.pop %v872
    %v875 = vmul.f32 %v872, %v874
    %v876 = vsub.f32 1.0, %v875
    %v877 = vmul.f32 %v874, %v876
    %v878 = vadd.f32 %v874, %v877
    %vm879 = vweird.f32 %v872
    %vm880 = vweird.f32 %v874
    %vm881 = vmor %vm879, %vm880
    %v882 = vsel %vm881, %v874, %v878
    %v883 = vand.u32 2147483647, %v872
    %vm884 = vcmp.eq.f32.partialorder %v883, 8.507059e+37
    %v885 = vand.u32 %v872, 2147483648
    %v886 = vor.u32 1.1754944e-38, %v885
    %v887 = vsel %vm884, %v886, %v882
    %v888 = vmul.f32 1.0, %v887
    %v889 = vrcp.pop %v873
    %v890 = vmul.f32 %v873, %v889
    %v891 = vsub.f32 1.0, %v890
    %v892 = vmul.f32 %v889, %v891
    %v893 = vadd.f32 %v889, %v892
    %vm894 = vweird.f32 %v873
    %vm895 = vweird.f32 %v889
    %vm896 = vmor %vm894, %vm895
    %v897 = vsel %vm896, %v889, %v893
    %v898 = vand.u32 2147483647, %v873
    %vm899 = vcmp.eq.f32.partialorder %v898, 8.507059e+37
    %v900 = vand.u32 %v873, 2147483648
    %v901 = vor.u32 1.1754944e-38, %v900
    %v902 = vsel %vm899, %v901, %v897
    %v903 = vmul.f32 1.0, %v902
    %v904 = vtanh.pop %v865
    %v906 = vrot.slane %v817, 6
    %907 = vrot.lane.b32.xlu0 %v906, 64
    %v908 = vpop.permute.xlu0 %907
    %v910 = vmul.f32 %v888, %v908
    %912 = vrot.lane.b32.xlu0 %v904, 64
    %v913 = vpop.permute.xlu0 %912
    %v915 = vmul.f32 %v888, %v913
    %917 = vrot.lane.b32.xlu0 %v915, 64
    %v918 = vpop.permute.xlu0 %917
    %v920 = vadd.f32 %v910, %v918
    %v921 = vtanh.pop %v920
    %923 = vrot.lane.b32.xlu0 %v921, 64
    %v924 = vpop.permute.xlu0 %923
    %v926 = vmul.f32 %v903, %v924
    %v927 = vld [vmem:[#allocation4 + $0xa] sm:$0x3]
    %v928 = vsub.f32 1.0, %v927
    %v930 = vrot.slane %v926, 2
    %v932 = vmul.f32 %v927, %v930
    %v934 = vrot.slane %v920, 2
    %935 = vrot.lane.b32.xlu0 %v934, 64
    %v936 = vpop.permute.xlu0 %935
    %v938 = vmul.f32 %v927, %v936
    %v939 = vmul.f32 %v928, %v817
    %v940 = vadd.f32 %v938, %v939
    %v941 = vmul.f32 %v928, %v819
    %v942 = vadd.f32 %v932, %v941
    %943 = vst.msk [vmem:[#allocation3 + $0xa] sm:$0x3] %vm337, %v932
    %945 = vrot.lane.b32.xlu0 %v932, 64
    %v946 = vpop.permute.xlu0 %945
    %948 = vst.msk [vmem:[#allocation3 + $0x4] sm:$0x3] %vm343, %v946
    %v949 = vld [vmem:[#allocation2 + $0x10] sm:$0x30]
    %v950 = vld [vmem:[#allocation2 + $0x18] sm:$0x30]
    %v951 = vpack.c.bf16 %v942, %v942
    %v953 = vsel %vm238, %v951, 0
    %955 = vmatpush.bf16.msra.mxu0 0
    %956 = vmatpush.bf16.msra.mxu0 0
    %957 = vmatpush.bf16.msra.mxu0 0
    %958 = vmatpush.bf16.msra.mxu0 0
    %959 = vmatpush.bf16.msra.mxu0 %v228
    %960 = vmatpush.bf16.msra.mxu0 %v226
    %961 = vmatpush.bf16.msra.mxu0 %v224
    %962 = vmatpush.bf16.msra.mxu0 %v222
    %963 = vmatmul.bf16.gmra.mxu0 %v953
    %v964 = vpop.f32.mrf.mxu0
    %v965 = vadd.f32 0.0, %v964
    %v966 = vpop.f32.mrf.mxu0
    %967 = vdwg.mxu0
    %968 = vmatpush.bf16.msra.mxu0 0
    %969 = vmatpush.bf16.msra.mxu0 0
    %970 = vmatpush.bf16.msra.mxu0 0
    %971 = vmatpush.bf16.msra.mxu0 0
    %972 = vmatpush.bf16.msra.mxu0 %v229
    %973 = vmatpush.bf16.msra.mxu0 %v227
    %974 = vmatpush.bf16.msra.mxu0 %v225
    %975 = vmatpush.bf16.msra.mxu0 %v223
    %976 = vmatmul.bf16.gmra.mxu0 %v953
    %v977 = vpop.f32.mrf.mxu0
    %v978 = vadd.f32 0.0, %v977
    %v979 = vpop.f32.mrf.mxu0
    %980 = vdwg.mxu0
    %v983 = vrot.slane %v965, 4
    %v984 = vrot.slane %v978, 4
    %v987 = vadd.f32 %v949, %v983
    %v988 = vadd.f32 %v950, %v984
    %v989 = vxor.u32 %v987, 2147483648
    %v990 = vxor.u32 %v988, 2147483648
    %v991 = vmul.f32 %v989, 1.442695
    %v992 = vpow.pop %v991
    %v993 = vmul.f32 %v990, 1.442695
    %v994 = vpow.pop %v993
    %v995 = vadd.f32 %v992, 1.0
    %v996 = vadd.f32 %v994, 1.0
    %v997 = vrcp.pop %v995
    %v998 = vmul.f32 %v995, %v997
    %v999 = vsub.f32 1.0, %v998
    %v1000 = vmul.f32 %v997, %v999
    %v1001 = vadd.f32 %v997, %v1000
    %vm1002 = vweird.f32 %v995
    %vm1003 = vweird.f32 %v997
    %vm1004 = vmor %vm1002, %vm1003
    %v1005 = vsel %vm1004, %v997, %v1001
    %v1006 = vand.u32 2147483647, %v995
    %vm1007 = vcmp.eq.f32.partialorder %v1006, 8.507059e+37
    %v1008 = vand.u32 %v995, 2147483648
    %v1009 = vor.u32 1.1754944e-38, %v1008
    %v1010 = vsel %vm1007, %v1009, %v1005
    %v1011 = vmul.f32 1.0, %v1010
    %v1012 = vrcp.pop %v996
    %v1013 = vmul.f32 %v996, %v1012
    %v1014 = vsub.f32 1.0, %v1013
    %v1015 = vmul.f32 %v1012, %v1014
    %v1016 = vadd.f32 %v1012, %v1015
    %vm1017 = vweird.f32 %v996
    %vm1018 = vweird.f32 %v1012
    %vm1019 = vmor %vm1017, %vm1018
    %v1020 = vsel %vm1019, %v1012, %v1016
    %v1021 = vand.u32 2147483647, %v996
    %vm1022 = vcmp.eq.f32.partialorder %v1021, 8.507059e+37
    %v1023 = vand.u32 %v996, 2147483648
    %v1024 = vor.u32 1.1754944e-38, %v1023
    %v1025 = vsel %vm1022, %v1024, %v1020
    %v1026 = vmul.f32 1.0, %v1025
    %v1027 = vtanh.pop %v988
    %v1029 = vrot.slane %v940, 4
    %1030 = vrot.lane.b32.xlu0 %v1029, 64
    %v1031 = vpop.permute.xlu0 %1030
    %v1033 = vmul.f32 %v1011, %v1031
    %1035 = vrot.lane.b32.xlu0 %v1027, 64
    %v1036 = vpop.permute.xlu0 %1035
    %v1038 = vmul.f32 %v1011, %v1036
    %1040 = vrot.lane.b32.xlu0 %v1038, 64
    %v1041 = vpop.permute.xlu0 %1040
    %v1043 = vadd.f32 %v1033, %v1041
    %v1044 = vtanh.pop %v1043
    %1046 = vrot.lane.b32.xlu0 %v1044, 64
    %v1047 = vpop.permute.xlu0 %1046
    %v1049 = vmul.f32 %v1026, %v1047
    %v1050 = vld [vmem:[#allocation4 + $0xc] sm:$0x3]
    %v1051 = vsub.f32 1.0, %v1050
    %v1053 = vrot.slane %v1049, 4
    %v1055 = vmul.f32 %v1050, %v1053
    %v1057 = vrot.slane %v1043, 4
    %1058 = vrot.lane.b32.xlu0 %v1057, 64
    %v1059 = vpop.permute.xlu0 %1058
    %v1061 = vmul.f32 %v1050, %v1059
    %v1062 = vmul.f32 %v1051, %v940
    %v1063 = vadd.f32 %v1061, %v1062
    %v1064 = vmul.f32 %v1051, %v942
    %v1065 = vadd.f32 %v1055, %v1064
    %1066 = vst.msk [vmem:[#allocation3 + $0xc] sm:$0x3] %vm337, %v1055
    %1068 = vrot.lane.b32.xlu0 %v1055, 64
    %v1069 = vpop.permute.xlu0 %1068
    %1071 = vst.msk [vmem:[#allocation3 + $0x2] sm:$0x3] %vm343, %v1069
    %v1072 = vld [vmem:[#allocation2 + $0x10] sm:$0xc0]
    %v1073 = vld [vmem:[#allocation2 + $0x18] sm:$0xc0]
    %v1074 = vpack.c.bf16 %v1065, %v1065
    %v1076 = vsel %vm238, %v1074, 0
    %1078 = vmatpush.bf16.msra.mxu0 0
    %1079 = vmatpush.bf16.msra.mxu0 0
    %1080 = vmatpush.bf16.msra.mxu0 0
    %1081 = vmatpush.bf16.msra.mxu0 0
    %1082 = vmatpush.bf16.msra.mxu0 %v228
    %1083 = vmatpush.bf16.msra.mxu0 %v226
    %1084 = vmatpush.bf16.msra.mxu0 %v224
    %1085 = vmatpush.bf16.msra.mxu0 %v222
    %1086 = vmatmul.bf16.gmra.mxu0 %v1076
    %v1087 = vpop.f32.mrf.mxu0
    %v1088 = vadd.f32 0.0, %v1087
    %v1089 = vpop.f32.mrf.mxu0
    %1090 = vdwg.mxu0
    %1091 = vmatpush.bf16.msra.mxu0 0
    %1092 = vmatpush.bf16.msra.mxu0 0
    %1093 = vmatpush.bf16.msra.mxu0 0
    %1094 = vmatpush.bf16.msra.mxu0 0
    %1095 = vmatpush.bf16.msra.mxu0 %v229
    %1096 = vmatpush.bf16.msra.mxu0 %v227
    %1097 = vmatpush.bf16.msra.mxu0 %v225
    %1098 = vmatpush.bf16.msra.mxu0 %v223
    %1099 = vmatmul.bf16.gmra.mxu0 %v1076
    %v1100 = vpop.f32.mrf.mxu0
    %v1101 = vadd.f32 0.0, %v1100
    %v1102 = vpop.f32.mrf.mxu0
    %1103 = vdwg.mxu0
    %v1106 = vrot.slane %v1088, 2
    %v1107 = vrot.slane %v1101, 2
    %v1110 = vadd.f32 %v1072, %v1106
    %v1111 = vadd.f32 %v1073, %v1107
    %v1112 = vxor.u32 %v1110, 2147483648
    %v1113 = vxor.u32 %v1111, 2147483648
    %v1114 = vmul.f32 %v1112, 1.442695
    %v1115 = vpow.pop %v1114
    %v1116 = vmul.f32 %v1113, 1.442695
    %v1117 = vpow.pop %v1116
    %v1118 = vadd.f32 %v1115, 1.0
    %v1119 = vadd.f32 %v1117, 1.0
    %v1120 = vrcp.pop %v1118
    %v1121 = vmul.f32 %v1118, %v1120
    %v1122 = vsub.f32 1.0, %v1121
    %v1123 = vmul.f32 %v1120, %v1122
    %v1124 = vadd.f32 %v1120, %v1123
    %vm1125 = vweird.f32 %v1118
    %vm1126 = vweird.f32 %v1120
    %vm1127 = vmor %vm1125, %vm1126
    %v1128 = vsel %vm1127, %v1120, %v1124
    %v1129 = vand.u32 2147483647, %v1118
    %vm1130 = vcmp.eq.f32.partialorder %v1129, 8.507059e+37
    %v1131 = vand.u32 %v1118, 2147483648
    %v1132 = vor.u32 1.1754944e-38, %v1131
    %v1133 = vsel %vm1130, %v1132, %v1128
    %v1134 = vmul.f32 1.0, %v1133
    %v1135 = vrcp.pop %v1119
    %v1136 = vmul.f32 %v1119, %v1135
    %v1137 = vsub.f32 1.0, %v1136
    %v1138 = vmul.f32 %v1135, %v1137
    %v1139 = vadd.f32 %v1135, %v1138
    %vm1140 = vweird.f32 %v1119
    %vm1141 = vweird.f32 %v1135
    %vm1142 = vmor %vm1140, %vm1141
    %v1143 = vsel %vm1142, %v1135, %v1139
    %v1144 = vand.u32 2147483647, %v1119
    %vm1145 = vcmp.eq.f32.partialorder %v1144, 8.507059e+37
    %v1146 = vand.u32 %v1119, 2147483648
    %v1147 = vor.u32 1.1754944e-38, %v1146
    %v1148 = vsel %vm1145, %v1147, %v1143
    %v1149 = vmul.f32 1.0, %v1148
    %v1150 = vtanh.pop %v1111
    %v1152 = vrot.slane %v1063, 2
    %1153 = vrot.lane.b32.xlu0 %v1152, 64
    %v1154 = vpop.permute.xlu0 %1153
    %v1156 = vmul.f32 %v1134, %v1154
    %1158 = vrot.lane.b32.xlu0 %v1150, 64
    %v1159 = vpop.permute.xlu0 %1158
    %v1161 = vmul.f32 %v1134, %v1159
    %1163 = vrot.lane.b32.xlu0 %v1161, 64
    %v1164 = vpop.permute.xlu0 %1163
    %v1166 = vadd.f32 %v1156, %v1164
    %v1167 = vtanh.pop %v1166
    %1169 = vrot.lane.b32.xlu0 %v1167, 64
    %v1170 = vpop.permute.xlu0 %1169
    %v1172 = vmul.f32 %v1149, %v1170
    %v1173 = vld [vmem:[#allocation4 + $0xe] sm:$0x3]
    %v1175 = vrot.slane %v1172, 6
    %v1177 = vmul.f32 %v1173, %v1175
    %1178 = vst.msk [vmem:[#allocation3 + $0xe] sm:$0x3] %vm337, %v1177
    %1180 = vrot.lane.b32.xlu0 %v1177, 64
    %v1181 = vpop.permute.xlu0 %1180
    %1183 = vst.msk [vmem:[#allocation3] sm:$0x3] %vm343, %v1181
    %v1184 = vld [vmem:[#allocation3] sm:$0xff]
    %v1185 = vld [vmem:[#allocation3 + $0x8] sm:$0xff]
    %v1186 = vpack.c.bf16 %v1185, %v1184
    %v1187 = vld [vmem:[%s4] sm:$0xff]
    %v1188 = vld [vmem:[%s4 + $0x8] sm:$0xff]
    %v1189 = vld [vmem:[%s4 + $0x10] sm:$0xff]
    %v1190 = vld [vmem:[%s4 + $0x18] sm:$0xff]
    %v1191 = vld [vmem:[%s4 + $0x20] sm:$0xff]
    %v1192 = vld [vmem:[%s4 + $0x28] sm:$0xff]
    %v1193 = vld [vmem:[%s4 + $0x30] sm:$0xff]
    %v1194 = vld [vmem:[%s4 + $0x38] sm:$0xff]
    %v1195 = vld [vmem:[%s4 + $0x40] sm:$0xff]
    %v1196 = vld [vmem:[%s4 + $0x48] sm:$0xff]
    %v1197 = vld [vmem:[%s4 + $0x50] sm:$0xff]
    %v1198 = vld [vmem:[%s4 + $0x58] sm:$0xff]
    %v1199 = vld [vmem:[%s4 + $0x60] sm:$0xff]
    %v1200 = vld [vmem:[%s4 + $0x68] sm:$0xff]
    %v1201 = vld [vmem:[%s4 + $0x70] sm:$0xff]
    %v1202 = vld [vmem:[%s4 + $0x78] sm:$0xff]
    %v1203 = vld [vmem:[%s5] sm:$0x3]
    %v1205 = vperm.slane %v1203, 0
    %v1206 = vperm.slane %v1203, 1
    %v1225 = vunpack.c.l.b16 %v1187
    %v1226 = vunpack.c.h.b16 %v1187
    %v1227 = vunpack.c.l.b16 %v1188
    %v1228 = vunpack.c.h.b16 %v1188
    %v1229 = vunpack.c.l.b16 %v1189
    %v1230 = vunpack.c.h.b16 %v1189
    %v1231 = vunpack.c.l.b16 %v1190
    %v1232 = vunpack.c.h.b16 %v1190
    %v1233 = vunpack.c.l.b16 %v1191
    %v1234 = vunpack.c.h.b16 %v1191
    %v1235 = vunpack.c.l.b16 %v1192
    %v1236 = vunpack.c.h.b16 %v1192
    %v1237 = vunpack.c.l.b16 %v1193
    %v1238 = vunpack.c.h.b16 %v1193
    %v1239 = vunpack.c.l.b16 %v1194
    %v1240 = vunpack.c.h.b16 %v1194
    %v1241 = vunpack.c.l.b16 %v1195
    %v1242 = vunpack.c.h.b16 %v1195
    %v1243 = vunpack.c.l.b16 %v1196
    %v1244 = vunpack.c.h.b16 %v1196
    %v1245 = vunpack.c.l.b16 %v1197
    %v1246 = vunpack.c.h.b16 %v1197
    %v1247 = vunpack.c.l.b16 %v1198
    %v1248 = vunpack.c.h.b16 %v1198
    %v1249 = vunpack.c.l.b16 %v1199
    %v1250 = vunpack.c.h.b16 %v1199
    %v1251 = vunpack.c.l.b16 %v1200
    %v1252 = vunpack.c.h.b16 %v1200
    %v1253 = vunpack.c.l.b16 %v1201
    %v1254 = vunpack.c.h.b16 %v1201
    %v1255 = vunpack.c.l.b16 %v1202
    %v1256 = vunpack.c.h.b16 %v1202
    %v1257 = vpack.c.b16 %v1227, %v1225
    %v1258 = vpack.c.b16 %v1228, %v1226
    %v1259 = vpack.c.b16 %v1231, %v1229
    %v1260 = vpack.c.b16 %v1232, %v1230
    %v1261 = vpack.c.b16 %v1235, %v1233
    %v1262 = vpack.c.b16 %v1236, %v1234
    %v1263 = vpack.c.b16 %v1239, %v1237
    %v1264 = vpack.c.b16 %v1240, %v1238
    %v1265 = vpack.c.b16 %v1243, %v1241
    %v1266 = vpack.c.b16 %v1244, %v1242
    %v1267 = vpack.c.b16 %v1247, %v1245
    %v1268 = vpack.c.b16 %v1248, %v1246
    %v1269 = vpack.c.b16 %v1251, %v1249
    %v1270 = vpack.c.b16 %v1252, %v1250
    %v1271 = vpack.c.b16 %v1255, %v1253
    %v1272 = vpack.c.b16 %v1256, %v1254
    %1289 = vmatpush.bf16.msra.mxu0 %v1271
    %1290 = vmatpush.bf16.msra.mxu0 %v1269
    %1291 = vmatpush.bf16.msra.mxu0 %v1267
    %1292 = vmatpush.bf16.msra.mxu0 %v1265
    %1293 = vmatpush.bf16.msra.mxu0 %v1263
    %1294 = vmatpush.bf16.msra.mxu0 %v1261
    %1295 = vmatpush.bf16.msra.mxu0 %v1259
    %1296 = vmatpush.bf16.msra.mxu0 %v1257
    %1297 = vmatmul.bf16.gmra.mxu0 %v1186
    %v1298 = vpop.f32.mrf.mxu0
    %v1299 = vadd.f32 %v1205, %v1298
    %v1300 = vpop.f32.mrf.mxu0
    %v1301 = vadd.f32 %v1205, %v1300
    %1302 = vdwg.mxu0
    %1303 = vmatpush.bf16.msra.mxu0 %v1272
    %1304 = vmatpush.bf16.msra.mxu0 %v1270
    %1305 = vmatpush.bf16.msra.mxu0 %v1268
    %1306 = vmatpush.bf16.msra.mxu0 %v1266
    %1307 = vmatpush.bf16.msra.mxu0 %v1264
    %1308 = vmatpush.bf16.msra.mxu0 %v1262
    %1309 = vmatpush.bf16.msra.mxu0 %v1260
    %1310 = vmatpush.bf16.msra.mxu0 %v1258
    %1311 = vmatmul.bf16.gmra.mxu0 %v1186
    %v1312 = vpop.f32.mrf.mxu0
    %v1313 = vadd.f32 %v1206, %v1312
    %v1314 = vpop.f32.mrf.mxu0
    %v1315 = vadd.f32 %v1206, %v1314
    %1316 = vdwg.mxu0
    %1317 = vst [vmem:[#allocation2] sm:$0xff] %v1299
    %1318 = vst [vmem:[#allocation2 + $0x8] sm:$0xff] %v1313
    %1319 = vst [vmem:[#allocation2 + $0x10] sm:$0xff] %v1301
    %1320 = vst [vmem:[#allocation2 + $0x18] sm:$0xff] %v1315
    %v1321 = vld [vmem:[#allocation10] sm:$0xff]
    %v1322 = vld [vmem:[#allocation10 + $0x8] sm:$0xff]
    %v1323 = vld [vmem:[#allocation10 + $0x10] sm:$0xff]
    %v1324 = vld [vmem:[#allocation10 + $0x18] sm:$0xff]
    %v1325 = vld [vmem:[#allocation10 + $0x20] sm:$0xff]
    %v1326 = vld [vmem:[#allocation10 + $0x28] sm:$0xff]
    %v1327 = vld [vmem:[#allocation10 + $0x30] sm:$0xff]
    %v1328 = vld [vmem:[#allocation10 + $0x38] sm:$0xff]
    %v1329 = vld [vmem:[#allocation2] sm:$0x3]
    %v1330 = vld [vmem:[#allocation2 + $0x8] sm:$0x3]
    %v1339 = vunpack.c.l.b16 %v1321
    %v1340 = vunpack.c.h.b16 %v1321
    %v1341 = vunpack.c.l.b16 %v1322
    %v1342 = vunpack.c.h.b16 %v1322
    %v1343 = vunpack.c.l.b16 %v1323
    %v1344 = vunpack.c.h.b16 %v1323
    %v1345 = vunpack.c.l.b16 %v1324
    %v1346 = vunpack.c.h.b16 %v1324
    %v1347 = vunpack.c.l.b16 %v1325
    %v1348 = vunpack.c.h.b16 %v1325
    %v1349 = vunpack.c.l.b16 %v1326
    %v1350 = vunpack.c.h.b16 %v1326
    %v1351 = vunpack.c.l.b16 %v1327
    %v1352 = vunpack.c.h.b16 %v1327
    %v1353 = vunpack.c.l.b16 %v1328
    %v1354 = vunpack.c.h.b16 %v1328
    %v1355 = vpack.c.b16 %v1341, %v1339
    %v1356 = vpack.c.b16 %v1342, %v1340
    %v1357 = vpack.c.b16 %v1345, %v1343
    %v1358 = vpack.c.b16 %v1346, %v1344
    %v1359 = vpack.c.b16 %v1349, %v1347
    %v1360 = vpack.c.b16 %v1350, %v1348
    %v1361 = vpack.c.b16 %v1353, %v1351
    %v1362 = vpack.c.b16 %v1354, %v1352
    %1371 = vmatpush.bf16.msra.mxu0 0
    %1372 = vmatpush.bf16.msra.mxu0 0
    %1373 = vmatpush.bf16.msra.mxu0 0
    %1374 = vmatpush.bf16.msra.mxu0 0
    %1375 = vmatpush.bf16.msra.mxu0 %v1361
    %1376 = vmatpush.bf16.msra.mxu0 %v1359
    %1377 = vmatpush.bf16.msra.mxu0 %v1357
    %1378 = vmatpush.bf16.msra.mxu0 %v1355
    %1379 = vmatmul.bf16.gmra.mxu0 %v240
    %v1380 = vpop.f32.mrf.mxu0
    %v1381 = vadd.f32 0.0, %v1380
    %v1382 = vpop.f32.mrf.mxu0
    %1383 = vdwg.mxu0
    %1384 = vmatpush.bf16.msra.mxu0 0
    %1385 = vmatpush.bf16.msra.mxu0 0
    %1386 = vmatpush.bf16.msra.mxu0 0
    %1387 = vmatpush.bf16.msra.mxu0 0
    %1388 = vmatpush.bf16.msra.mxu0 %v1362
    %1389 = vmatpush.bf16.msra.mxu0 %v1360
    %1390 = vmatpush.bf16.msra.mxu0 %v1358
    %1391 = vmatpush.bf16.msra.mxu0 %v1356
    %1392 = vmatmul.bf16.gmra.mxu0 %v240
    %v1393 = vpop.f32.mrf.mxu0
    %v1394 = vadd.f32 0.0, %v1393
    %v1395 = vpop.f32.mrf.mxu0
    %1396 = vdwg.mxu0
    %v1397 = vadd.f32 %v1329, %v1381
    %v1398 = vadd.f32 %v1330, %v1394
    %v1399 = vxor.u32 %v1397, 2147483648
    %v1400 = vxor.u32 %v1398, 2147483648
    %v1401 = vmul.f32 %v1399, 1.442695
    %v1402 = vpow.pop %v1401
    %v1403 = vmul.f32 %v1400, 1.442695
    %v1404 = vpow.pop %v1403
    %v1405 = vadd.f32 %v1402, 1.0
    %v1406 = vadd.f32 %v1404, 1.0
    %v1407 = vrcp.pop %v1405
    %v1408 = vmul.f32 %v1405, %v1407
    %v1409 = vsub.f32 1.0, %v1408
    %v1410 = vmul.f32 %v1407, %v1409
    %v1411 = vadd.f32 %v1407, %v1410
    %vm1412 = vweird.f32 %v1405
    %vm1413 = vweird.f32 %v1407
    %vm1414 = vmor %vm1412, %vm1413
    %v1415 = vsel %vm1414, %v1407, %v1411
    %v1416 = vand.u32 2147483647, %v1405
    %vm1417 = vcmp.eq.f32.partialorder %v1416, 8.507059e+37
    %v1418 = vand.u32 %v1405, 2147483648
    %v1419 = vor.u32 1.1754944e-38, %v1418
    %v1420 = vsel %vm1417, %v1419, %v1415
    %v1421 = vmul.f32 1.0, %v1420
    %v1422 = vrcp.pop %v1406
    %v1423 = vmul.f32 %v1406, %v1422
    %v1424 = vsub.f32 1.0, %v1423
    %v1425 = vmul.f32 %v1422, %v1424
    %v1426 = vadd.f32 %v1422, %v1425
    %vm1427 = vweird.f32 %v1406
    %vm1428 = vweird.f32 %v1422
    %vm1429 = vmor %vm1427, %vm1428
    %v1430 = vsel %vm1429, %v1422, %v1426
    %v1431 = vand.u32 2147483647, %v1406
    %vm1432 = vcmp.eq.f32.partialorder %v1431, 8.507059e+37
    %v1433 = vand.u32 %v1406, 2147483648
    %v1434 = vor.u32 1.1754944e-38, %v1433
    %v1435 = vsel %vm1432, %v1434, %v1430
    %v1436 = vmul.f32 1.0, %v1435
    %v1437 = vtanh.pop %v1398
    %v1438 = vmul.f32 %v1421, 0.0
    %1440 = vrot.lane.b32.xlu0 %v1437, 64
    %v1441 = vpop.permute.xlu0 %1440
    %v1443 = vmul.f32 %v1421, %v1441
    %1445 = vrot.lane.b32.xlu0 %v1443, 64
    %v1446 = vpop.permute.xlu0 %1445
    %v1448 = vadd.f32 %v1438, %v1446
    %v1449 = vtanh.pop %v1448
    %1451 = vrot.lane.b32.xlu0 %v1449, 64
    %v1452 = vpop.permute.xlu0 %1451
    %v1454 = vmul.f32 %v1436, %v1452
    %v1455 = vld [vmem:[#allocation4] sm:$0x3]
    %v1456 = vsub.f32 1.0, %v1455
    %v1457 = vmul.f32 %v1455, %v1454
    %1459 = vrot.lane.b32.xlu0 %v1448, 64
    %v1460 = vpop.permute.xlu0 %1459
    %v1462 = vmul.f32 %v1455, %v1460
    %v1463 = vmul.f32 %v1456, 0.0
    %v1464 = vadd.f32 %v1462, %v1463
    %v1465 = vadd.f32 %v1457, %v1463
    %1466 = vst.msk [vmem:[#allocation3] sm:$0x3] %vm337, %v1457
    %1468 = vrot.lane.b32.xlu0 %v1457, 64
    %v1469 = vpop.permute.xlu0 %1468
    %1471 = vst.msk [vmem:[#allocation3 + $0xe] sm:$0x3] %vm343, %v1469
    %v1472 = vld [vmem:[#allocation2] sm:$0xc]
    %v1473 = vld [vmem:[#allocation2 + $0x8] sm:$0xc]
    %v1474 = vpack.c.bf16 %v1465, %v1465
    %v1476 = vsel %vm238, %v1474, 0
    %1478 = vmatpush.bf16.msra.mxu0 0
    %1479 = vmatpush.bf16.msra.mxu0 0
    %1480 = vmatpush.bf16.msra.mxu0 0
    %1481 = vmatpush.bf16.msra.mxu0 0
    %1482 = vmatpush.bf16.msra.mxu0 %v1361
    %1483 = vmatpush.bf16.msra.mxu0 %v1359
    %1484 = vmatpush.bf16.msra.mxu0 %v1357
    %1485 = vmatpush.bf16.msra.mxu0 %v1355
    %1486 = vmatmul.bf16.gmra.mxu0 %v1476
    %v1487 = vpop.f32.mrf.mxu0
    %v1488 = vadd.f32 0.0, %v1487
    %v1489 = vpop.f32.mrf.mxu0
    %1490 = vdwg.mxu0
    %1491 = vmatpush.bf16.msra.mxu0 0
    %1492 = vmatpush.bf16.msra.mxu0 0
    %1493 = vmatpush.bf16.msra.mxu0 0
    %1494 = vmatpush.bf16.msra.mxu0 0
    %1495 = vmatpush.bf16.msra.mxu0 %v1362
    %1496 = vmatpush.bf16.msra.mxu0 %v1360
    %1497 = vmatpush.bf16.msra.mxu0 %v1358
    %1498 = vmatpush.bf16.msra.mxu0 %v1356
    %1499 = vmatmul.bf16.gmra.mxu0 %v1476
    %v1500 = vpop.f32.mrf.mxu0
    %v1501 = vadd.f32 0.0, %v1500
    %v1502 = vpop.f32.mrf.mxu0
    %1503 = vdwg.mxu0
    %v1506 = vrot.slane %v1488, 6
    %v1507 = vrot.slane %v1501, 6
    %v1510 = vadd.f32 %v1472, %v1506
    %v1511 = vadd.f32 %v1473, %v1507
    %v1512 = vxor.u32 %v1510, 2147483648
    %v1513 = vxor.u32 %v1511, 2147483648
    %v1514 = vmul.f32 %v1512, 1.442695
    %v1515 = vpow.pop %v1514
    %v1516 = vmul.f32 %v1513, 1.442695
    %v1517 = vpow.pop %v1516
    %v1518 = vadd.f32 %v1515, 1.0
    %v1519 = vadd.f32 %v1517, 1.0
    %v1520 = vrcp.pop %v1518
    %v1521 = vmul.f32 %v1518, %v1520
    %v1522 = vsub.f32 1.0, %v1521
    %v1523 = vmul.f32 %v1520, %v1522
    %v1524 = vadd.f32 %v1520, %v1523
    %vm1525 = vweird.f32 %v1518
    %vm1526 = vweird.f32 %v1520
    %vm1527 = vmor %vm1525, %vm1526
    %v1528 = vsel %vm1527, %v1520, %v1524
    %v1529 = vand.u32 2147483647, %v1518
    %vm1530 = vcmp.eq.f32.partialorder %v1529, 8.507059e+37
    %v1531 = vand.u32 %v1518, 2147483648
    %v1532 = vor.u32 1.1754944e-38, %v1531
    %v1533 = vsel %vm1530, %v1532, %v1528
    %v1534 = vmul.f32 1.0, %v1533
    %v1535 = vrcp.pop %v1519
    %v1536 = vmul.f32 %v1519, %v1535
    %v1537 = vsub.f32 1.0, %v1536
    %v1538 = vmul.f32 %v1535, %v1537
    %v1539 = vadd.f32 %v1535, %v1538
    %vm1540 = vweird.f32 %v1519
    %vm1541 = vweird.f32 %v1535
    %vm1542 = vmor %vm1540, %vm1541
    %v1543 = vsel %vm1542, %v1535, %v1539
    %v1544 = vand.u32 2147483647, %v1519
    %vm1545 = vcmp.eq.f32.partialorder %v1544, 8.507059e+37
    %v1546 = vand.u32 %v1519, 2147483648
    %v1547 = vor.u32 1.1754944e-38, %v1546
    %v1548 = vsel %vm1545, %v1547, %v1543
    %v1549 = vmul.f32 1.0, %v1548
    %v1550 = vtanh.pop %v1511
    %v1552 = vrot.slane %v1464, 6
    %1553 = vrot.lane.b32.xlu0 %v1552, 64
    %v1554 = vpop.permute.xlu0 %1553
    %v1556 = vmul.f32 %v1534, %v1554
    %1558 = vrot.lane.b32.xlu0 %v1550, 64
    %v1559 = vpop.permute.xlu0 %1558
    %v1561 = vmul.f32 %v1534, %v1559
    %1563 = vrot.lane.b32.xlu0 %v1561, 64
    %v1564 = vpop.permute.xlu0 %1563
    %v1566 = vadd.f32 %v1556, %v1564
    %v1567 = vtanh.pop %v1566
    %1569 = vrot.lane.b32.xlu0 %v1567, 64
    %v1570 = vpop.permute.xlu0 %1569
    %v1572 = vmul.f32 %v1549, %v1570
    %v1573 = vld [vmem:[#allocation4 + $0x2] sm:$0x3]
    %v1574 = vsub.f32 1.0, %v1573
    %v1576 = vrot.slane %v1572, 2
    %v1578 = vmul.f32 %v1573, %v1576
    %v1580 = vrot.slane %v1566, 2
    %1581 = vrot.lane.b32.xlu0 %v1580, 64
    %v1582 = vpop.permute.xlu0 %1581
    %v1584 = vmul.f32 %v1573, %v1582
    %v1585 = vmul.f32 %v1574, %v1464
    %v1586 = vadd.f32 %v1584, %v1585
    %v1587 = vmul.f32 %v1574, %v1465
    %v1588 = vadd.f32 %v1578, %v1587
    %1589 = vst.msk [vmem:[#allocation3 + $0x2] sm:$0x3] %vm337, %v1578
    %1591 = vrot.lane.b32.xlu0 %v1578, 64
    %v1592 = vpop.permute.xlu0 %1591
    %1594 = vst.msk [vmem:[#allocation3 + $0xc] sm:$0x3] %vm343, %v1592
    %v1595 = vld [vmem:[#allocation2] sm:$0x30]
    %v1596 = vld [vmem:[#allocation2 + $0x8] sm:$0x30]
    %v1597 = vpack.c.bf16 %v1588, %v1588
    %v1599 = vsel %vm238, %v1597, 0
    %1601 = vmatpush.bf16.msra.mxu0 0
    %1602 = vmatpush.bf16.msra.mxu0 0
    %1603 = vmatpush.bf16.msra.mxu0 0
    %1604 = vmatpush.bf16.msra.mxu0 0
    %1605 = vmatpush.bf16.msra.mxu0 %v1361
    %1606 = vmatpush.bf16.msra.mxu0 %v1359
    %1607 = vmatpush.bf16.msra.mxu0 %v1357
    %1608 = vmatpush.bf16.msra.mxu0 %v1355
    %1609 = vmatmul.bf16.gmra.mxu0 %v1599
    %v1610 = vpop.f32.mrf.mxu0
    %v1611 = vadd.f32 0.0, %v1610
    %v1612 = vpop.f32.mrf.mxu0
    %1613 = vdwg.mxu0
    %1614 = vmatpush.bf16.msra.mxu0 0
    %1615 = vmatpush.bf16.msra.mxu0 0
    %1616 = vmatpush.bf16.msra.mxu0 0
    %1617 = vmatpush.bf16.msra.mxu0 0
    %1618 = vmatpush.bf16.msra.mxu0 %v1362
    %1619 = vmatpush.bf16.msra.mxu0 %v1360
    %1620 = vmatpush.bf16.msra.mxu0 %v1358
    %1621 = vmatpush.bf16.msra.mxu0 %v1356
    %1622 = vmatmul.bf16.gmra.mxu0 %v1599
    %v1623 = vpop.f32.mrf.mxu0
    %v1624 = vadd.f32 0.0, %v1623
    %v1625 = vpop.f32.mrf.mxu0
    %1626 = vdwg.mxu0
    %v1629 = vrot.slane %v1611, 4
    %v1630 = vrot.slane %v1624, 4
    %v1633 = vadd.f32 %v1595, %v1629
    %v1634 = vadd.f32 %v1596, %v1630
    %v1635 = vxor.u32 %v1633, 2147483648
    %v1636 = vxor.u32 %v1634, 2147483648
    %v1637 = vmul.f32 %v1635, 1.442695
    %v1638 = vpow.pop %v1637
    %v1639 = vmul.f32 %v1636, 1.442695
    %v1640 = vpow.pop %v1639
    %v1641 = vadd.f32 %v1638, 1.0
    %v1642 = vadd.f32 %v1640, 1.0
    %v1643 = vrcp.pop %v1641
    %v1644 = vmul.f32 %v1641, %v1643
    %v1645 = vsub.f32 1.0, %v1644
    %v1646 = vmul.f32 %v1643, %v1645
    %v1647 = vadd.f32 %v1643, %v1646
    %vm1648 = vweird.f32 %v1641
    %vm1649 = vweird.f32 %v1643
    %vm1650 = vmor %vm1648, %vm1649
    %v1651 = vsel %vm1650, %v1643, %v1647
    %v1652 = vand.u32 2147483647, %v1641
    %vm1653 = vcmp.eq.f32.partialorder %v1652, 8.507059e+37
    %v1654 = vand.u32 %v1641, 2147483648
    %v1655 = vor.u32 1.1754944e-38, %v1654
    %v1656 = vsel %vm1653, %v1655, %v1651
    %v1657 = vmul.f32 1.0, %v1656
    %v1658 = vrcp.pop %v1642
    %v1659 = vmul.f32 %v1642, %v1658
    %v1660 = vsub.f32 1.0, %v1659
    %v1661 = vmul.f32 %v1658, %v1660
    %v1662 = vadd.f32 %v1658, %v1661
    %vm1663 = vweird.f32 %v1642
    %vm1664 = vweird.f32 %v1658
    %vm1665 = vmor %vm1663, %vm1664
    %v1666 = vsel %vm1665, %v1658, %v1662
    %v1667 = vand.u32 2147483647, %v1642
    %vm1668 = vcmp.eq.f32.partialorder %v1667, 8.507059e+37
    %v1669 = vand.u32 %v1642, 2147483648
    %v1670 = vor.u32 1.1754944e-38, %v1669
    %v1671 = vsel %vm1668, %v1670, %v1666
    %v1672 = vmul.f32 1.0, %v1671
    %v1673 = vtanh.pop %v1634
    %v1675 = vrot.slane %v1586, 4
    %1676 = vrot.lane.b32.xlu0 %v1675, 64
    %v1677 = vpop.permute.xlu0 %1676
    %v1679 = vmul.f32 %v1657, %v1677
    %1681 = vrot.lane.b32.xlu0 %v1673, 64
    %v1682 = vpop.permute.xlu0 %1681
    %v1684 = vmul.f32 %v1657, %v1682
    %1686 = vrot.lane.b32.xlu0 %v1684, 64
    %v1687 = vpop.permute.xlu0 %1686
    %v1689 = vadd.f32 %v1679, %v1687
    %v1690 = vtanh.pop %v1689
    %1692 = vrot.lane.b32.xlu0 %v1690, 64
    %v1693 = vpop.permute.xlu0 %1692
    %v1695 = vmul.f32 %v1672, %v1693
    %v1696 = vld [vmem:[#allocation4 + $0x4] sm:$0x3]
    %v1697 = vsub.f32 1.0, %v1696
    %v1699 = vrot.slane %v1695, 4
    %v1701 = vmul.f32 %v1696, %v1699
    %v1703 = vrot.slane %v1689, 4
    %1704 = vrot.lane.b32.xlu0 %v1703, 64
    %v1705 = vpop.permute.xlu0 %1704
    %v1707 = vmul.f32 %v1696, %v1705
    %v1708 = vmul.f32 %v1697, %v1586
    %v1709 = vadd.f32 %v1707, %v1708
    %v1710 = vmul.f32 %v1697, %v1588
    %v1711 = vadd.f32 %v1701, %v1710
    %1712 = vst.msk [vmem:[#allocation3 + $0x4] sm:$0x3] %vm337, %v1701
    %1714 = vrot.lane.b32.xlu0 %v1701, 64
    %v1715 = vpop.permute.xlu0 %1714
    %1717 = vst.msk [vmem:[#allocation3 + $0xa] sm:$0x3] %vm343, %v1715
    %v1718 = vld [vmem:[#allocation2] sm:$0xc0]
    %v1719 = vld [vmem:[#allocation2 + $0x8] sm:$0xc0]
    %v1720 = vpack.c.bf16 %v1711, %v1711
    %v1722 = vsel %vm238, %v1720, 0
    %1724 = vmatpush.bf16.msra.mxu0 0
    %1725 = vmatpush.bf16.msra.mxu0 0
    %1726 = vmatpush.bf16.msra.mxu0 0
    %1727 = vmatpush.bf16.msra.mxu0 0
    %1728 = vmatpush.bf16.msra.mxu0 %v1361
    %1729 = vmatpush.bf16.msra.mxu0 %v1359
    %1730 = vmatpush.bf16.msra.mxu0 %v1357
    %1731 = vmatpush.bf16.msra.mxu0 %v1355
    %1732 = vmatmul.bf16.gmra.mxu0 %v1722
    %v1733 = vpop.f32.mrf.mxu0
    %v1734 = vadd.f32 0.0, %v1733
    %v1735 = vpop.f32.mrf.mxu0
    %1736 = vdwg.mxu0
    %1737 = vmatpush.bf16.msra.mxu0 0
    %1738 = vmatpush.bf16.msra.mxu0 0
    %1739 = vmatpush.bf16.msra.mxu0 0
    %1740 = vmatpush.bf16.msra.mxu0 0
    %1741 = vmatpush.bf16.msra.mxu0 %v1362
    %1742 = vmatpush.bf16.msra.mxu0 %v1360
    %1743 = vmatpush.bf16.msra.mxu0 %v1358
    %1744 = vmatpush.bf16.msra.mxu0 %v1356
    %1745 = vmatmul.bf16.gmra.mxu0 %v1722
    %v1746 = vpop.f32.mrf.mxu0
    %v1747 = vadd.f32 0.0, %v1746
    %v1748 = vpop.f32.mrf.mxu0
    %1749 = vdwg.mxu0
    %v1752 = vrot.slane %v1734, 2
    %v1753 = vrot.slane %v1747, 2
    %v1756 = vadd.f32 %v1718, %v1752
    %v1757 = vadd.f32 %v1719, %v1753
    %v1758 = vxor.u32 %v1756, 2147483648
    %v1759 = vxor.u32 %v1757, 2147483648
    %v1760 = vmul.f32 %v1758, 1.442695
    %v1761 = vpow.pop %v1760
    %v1762 = vmul.f32 %v1759, 1.442695
    %v1763 = vpow.pop %v1762
    %v1764 = vadd.f32 %v1761, 1.0
    %v1765 = vadd.f32 %v1763, 1.0
    %v1766 = vrcp.pop %v1764
    %v1767 = vmul.f32 %v1764, %v1766
    %v1768 = vsub.f32 1.0, %v1767
    %v1769 = vmul.f32 %v1766, %v1768
    %v1770 = vadd.f32 %v1766, %v1769
    %vm1771 = vweird.f32 %v1764
    %vm1772 = vweird.f32 %v1766
    %vm1773 = vmor %vm1771, %vm1772
    %v1774 = vsel %vm1773, %v1766, %v1770
    %v1775 = vand.u32 2147483647, %v1764
    %vm1776 = vcmp.eq.f32.partialorder %v1775, 8.507059e+37
    %v1777 = vand.u32 %v1764, 2147483648
    %v1778 = vor.u32 1.1754944e-38, %v1777
    %v1779 = vsel %vm1776, %v1778, %v1774
    %v1780 = vmul.f32 1.0, %v1779
    %v1781 = vrcp.pop %v1765
    %v1782 = vmul.f32 %v1765, %v1781
    %v1783 = vsub.f32 1.0, %v1782
    %v1784 = vmul.f32 %v1781, %v1783
    %v1785 = vadd.f32 %v1781, %v1784
    %vm1786 = vweird.f32 %v1765
    %vm1787 = vweird.f32 %v1781
    %vm1788 = vmor %vm1786, %vm1787
    %v1789 = vsel %vm1788, %v1781, %v1785
    %v1790 = vand.u32 2147483647, %v1765
    %vm1791 = vcmp.eq.f32.partialorder %v1790, 8.507059e+37
    %v1792 = vand.u32 %v1765, 2147483648
    %v1793 = vor.u32 1.1754944e-38, %v1792
    %v1794 = vsel %vm1791, %v1793, %v1789
    %v1795 = vmul.f32 1.0, %v1794
    %v1796 = vtanh.pop %v1757
    %v1798 = vrot.slane %v1709, 2
    %1799 = vrot.lane.b32.xlu0 %v1798, 64
    %v1800 = vpop.permute.xlu0 %1799
    %v1802 = vmul.f32 %v1780, %v1800
    %1804 = vrot.lane.b32.xlu0 %v1796, 64
    %v1805 = vpop.permute.xlu0 %1804
    %v1807 = vmul.f32 %v1780, %v1805
    %1809 = vrot.lane.b32.xlu0 %v1807, 64
    %v1810 = vpop.permute.xlu0 %1809
    %v1812 = vadd.f32 %v1802, %v1810
    %v1813 = vtanh.pop %v1812
    %1815 = vrot.lane.b32.xlu0 %v1813, 64
    %v1816 = vpop.permute.xlu0 %1815
    %v1818 = vmul.f32 %v1795, %v1816
    %v1819 = vld [vmem:[#allocation4 + $0x6] sm:$0x3]
    %v1820 = vsub.f32 1.0, %v1819
    %v1822 = vrot.slane %v1818, 6
    %v1824 = vmul.f32 %v1819, %v1822
    %v1826 = vrot.slane %v1812, 6
    %1827 = vrot.lane.b32.xlu0 %v1826, 64
    %v1828 = vpop.permute.xlu0 %1827
    %v1830 = vmul.f32 %v1819, %v1828
    %v1831 = vmul.f32 %v1820, %v1709
    %v1832 = vadd.f32 %v1830, %v1831
    %v1833 = vmul.f32 %v1820, %v1711
    %v1834 = vadd.f32 %v1824, %v1833
    %1835 = vst.msk [vmem:[#allocation3 + $0x6] sm:$0x3] %vm337, %v1824
    %1837 = vrot.lane.b32.xlu0 %v1824, 64
    %v1838 = vpop.permute.xlu0 %1837
    %1840 = vst.msk [vmem:[#allocation3 + $0x8] sm:$0x3] %vm343, %v1838
    %v1841 = vld [vmem:[#allocation2 + $0x10] sm:$0x3]
    %v1842 = vld [vmem:[#allocation2 + $0x18] sm:$0x3]
    %v1843 = vpack.c.bf16 %v1834, %v1834
    %v1845 = vsel %vm238, %v1843, 0
    %1847 = vmatpush.bf16.msra.mxu0 0
    %1848 = vmatpush.bf16.msra.mxu0 0
    %1849 = vmatpush.bf16.msra.mxu0 0
    %1850 = vmatpush.bf16.msra.mxu0 0
    %1851 = vmatpush.bf16.msra.mxu0 %v1361
    %1852 = vmatpush.bf16.msra.mxu0 %v1359
    %1853 = vmatpush.bf16.msra.mxu0 %v1357
    %1854 = vmatpush.bf16.msra.mxu0 %v1355
    %1855 = vmatmul.bf16.gmra.mxu0 %v1845
    %v1856 = vpop.f32.mrf.mxu0
    %v1857 = vadd.f32 0.0, %v1856
    %v1858 = vpop.f32.mrf.mxu0
    %1859 = vdwg.mxu0
    %1860 = vmatpush.bf16.msra.mxu0 0
    %1861 = vmatpush.bf16.msra.mxu0 0
    %1862 = vmatpush.bf16.msra.mxu0 0
    %1863 = vmatpush.bf16.msra.mxu0 0
    %1864 = vmatpush.bf16.msra.mxu0 %v1362
    %1865 = vmatpush.bf16.msra.mxu0 %v1360
    %1866 = vmatpush.bf16.msra.mxu0 %v1358
    %1867 = vmatpush.bf16.msra.mxu0 %v1356
    %1868 = vmatmul.bf16.gmra.mxu0 %v1845
    %v1869 = vpop.f32.mrf.mxu0
    %v1870 = vadd.f32 0.0, %v1869
    %v1871 = vpop.f32.mrf.mxu0
    %1872 = vdwg.mxu0
    %v1873 = vadd.f32 %v1841, %v1857
    %v1874 = vadd.f32 %v1842, %v1870
    %v1875 = vxor.u32 %v1873, 2147483648
    %v1876 = vxor.u32 %v1874, 2147483648
    %v1877 = vmul.f32 %v1875, 1.442695
    %v1878 = vpow.pop %v1877
    %v1879 = vmul.f32 %v1876, 1.442695
    %v1880 = vpow.pop %v1879
    %v1881 = vadd.f32 %v1878, 1.0
    %v1882 = vadd.f32 %v1880, 1.0
    %v1883 = vrcp.pop %v1881
    %v1884 = vmul.f32 %v1881, %v1883
    %v1885 = vsub.f32 1.0, %v1884
    %v1886 = vmul.f32 %v1883, %v1885
    %v1887 = vadd.f32 %v1883, %v1886
    %vm1888 = vweird.f32 %v1881
    %vm1889 = vweird.f32 %v1883
    %vm1890 = vmor %vm1888, %vm1889
    %v1891 = vsel %vm1890, %v1883, %v1887
    %v1892 = vand.u32 2147483647, %v1881
    %vm1893 = vcmp.eq.f32.partialorder %v1892, 8.507059e+37
    %v1894 = vand.u32 %v1881, 2147483648
    %v1895 = vor.u32 1.1754944e-38, %v1894
    %v1896 = vsel %vm1893, %v1895, %v1891
    %v1897 = vmul.f32 1.0, %v1896
    %v1898 = vrcp.pop %v1882
    %v1899 = vmul.f32 %v1882, %v1898
    %v1900 = vsub.f32 1.0, %v1899
    %v1901 = vmul.f32 %v1898, %v1900
    %v1902 = vadd.f32 %v1898, %v1901
    %vm1903 = vweird.f32 %v1882
    %vm1904 = vweird.f32 %v1898
    %vm1905 = vmor %vm1903, %vm1904
    %v1906 = vsel %vm1905, %v1898, %v1902
    %v1907 = vand.u32 2147483647, %v1882
    %vm1908 = vcmp.eq.f32.partialorder %v1907, 8.507059e+37
    %v1909 = vand.u32 %v1882, 2147483648
    %v1910 = vor.u32 1.1754944e-38, %v1909
    %v1911 = vsel %vm1908, %v1910, %v1906
    %v1912 = vmul.f32 1.0, %v1911
    %v1913 = vtanh.pop %v1874
    %1915 = vrot.lane.b32.xlu0 %v1832, 64
    %v1916 = vpop.permute.xlu0 %1915
    %v1918 = vmul.f32 %v1897, %v1916
    %1920 = vrot.lane.b32.xlu0 %v1913, 64
    %v1921 = vpop.permute.xlu0 %1920
    %v1923 = vmul.f32 %v1897, %v1921
    %1925 = vrot.lane.b32.xlu0 %v1923, 64
    %v1926 = vpop.permute.xlu0 %1925
    %v1928 = vadd.f32 %v1918, %v1926
    %v1929 = vtanh.pop %v1928
    %1931 = vrot.lane.b32.xlu0 %v1929, 64
    %v1932 = vpop.permute.xlu0 %1931
    %v1934 = vmul.f32 %v1912, %v1932
    %v1935 = vld [vmem:[#allocation4 + $0x8] sm:$0x3]
    %v1936 = vsub.f32 1.0, %v1935
    %v1937 = vmul.f32 %v1935, %v1934
    %1939 = vrot.lane.b32.xlu0 %v1928, 64
    %v1940 = vpop.permute.xlu0 %1939
    %v1942 = vmul.f32 %v1935, %v1940
    %v1943 = vmul.f32 %v1936, %v1832
    %v1944 = vadd.f32 %v1942, %v1943
    %v1945 = vmul.f32 %v1936, %v1834
    %v1946 = vadd.f32 %v1937, %v1945
    %1947 = vst.msk [vmem:[#allocation3 + $0x8] sm:$0x3] %vm337, %v1937
    %1949 = vrot.lane.b32.xlu0 %v1937, 64
    %v1950 = vpop.permute.xlu0 %1949
    %1952 = vst.msk [vmem:[#allocation3 + $0x6] sm:$0x3] %vm343, %v1950
    %v1953 = vld [vmem:[#allocation2 + $0x10] sm:$0xc]
    %v1954 = vld [vmem:[#allocation2 + $0x18] sm:$0xc]
    %v1955 = vpack.c.bf16 %v1946, %v1946
    %v1957 = vsel %vm238, %v1955, 0
    %1959 = vmatpush.bf16.msra.mxu0 0
    %1960 = vmatpush.bf16.msra.mxu0 0
    %1961 = vmatpush.bf16.msra.mxu0 0
    %1962 = vmatpush.bf16.msra.mxu0 0
    %1963 = vmatpush.bf16.msra.mxu0 %v1361
    %1964 = vmatpush.bf16.msra.mxu0 %v1359
    %1965 = vmatpush.bf16.msra.mxu0 %v1357
    %1966 = vmatpush.bf16.msra.mxu0 %v1355
    %1967 = vmatmul.bf16.gmra.mxu0 %v1957
    %v1968 = vpop.f32.mrf.mxu0
    %v1969 = vadd.f32 0.0, %v1968
    %v1970 = vpop.f32.mrf.mxu0
    %1971 = vdwg.mxu0
    %1972 = vmatpush.bf16.msra.mxu0 0
    %1973 = vmatpush.bf16.msra.mxu0 0
    %1974 = vmatpush.bf16.msra.mxu0 0
    %1975 = vmatpush.bf16.msra.mxu0 0
    %1976 = vmatpush.bf16.msra.mxu0 %v1362
    %1977 = vmatpush.bf16.msra.mxu0 %v1360
    %1978 = vmatpush.bf16.msra.mxu0 %v1358
    %1979 = vmatpush.bf16.msra.mxu0 %v1356
    %1980 = vmatmul.bf16.gmra.mxu0 %v1957
    %v1981 = vpop.f32.mrf.mxu0
    %v1982 = vadd.f32 0.0, %v1981
    %v1983 = vpop.f32.mrf.mxu0
    %1984 = vdwg.mxu0
    %v1987 = vrot.slane %v1969, 6
    %v1988 = vrot.slane %v1982, 6
    %v1991 = vadd.f32 %v1953, %v1987
    %v1992 = vadd.f32 %v1954, %v1988
    %v1993 = vxor.u32 %v1991, 2147483648
    %v1994 = vxor.u32 %v1992, 2147483648
    %v1995 = vmul.f32 %v1993, 1.442695
    %v1996 = vpow.pop %v1995
    %v1997 = vmul.f32 %v1994, 1.442695
    %v1998 = vpow.pop %v1997
    %v1999 = vadd.f32 %v1996, 1.0
    %v2000 = vadd.f32 %v1998, 1.0
    %v2001 = vrcp.pop %v1999
    %v2002 = vmul.f32 %v1999, %v2001
    %v2003 = vsub.f32 1.0, %v2002
    %v2004 = vmul.f32 %v2001, %v2003
    %v2005 = vadd.f32 %v2001, %v2004
    %vm2006 = vweird.f32 %v1999
    %vm2007 = vweird.f32 %v2001
    %vm2008 = vmor %vm2006, %vm2007
    %v2009 = vsel %vm2008, %v2001, %v2005
    %v2010 = vand.u32 2147483647, %v1999
    %vm2011 = vcmp.eq.f32.partialorder %v2010, 8.507059e+37
    %v2012 = vand.u32 %v1999, 2147483648
    %v2013 = vor.u32 1.1754944e-38, %v2012
    %v2014 = vsel %vm2011, %v2013, %v2009
    %v2015 = vmul.f32 1.0, %v2014
    %v2016 = vrcp.pop %v2000
    %v2017 = vmul.f32 %v2000, %v2016
    %v2018 = vsub.f32 1.0, %v2017
    %v2019 = vmul.f32 %v2016, %v2018
    %v2020 = vadd.f32 %v2016, %v2019
    %vm2021 = vweird.f32 %v2000
    %vm2022 = vweird.f32 %v2016
    %vm2023 = vmor %vm2021, %vm2022
    %v2024 = vsel %vm2023, %v2016, %v2020
    %v2025 = vand.u32 2147483647, %v2000
    %vm2026 = vcmp.eq.f32.partialorder %v2025, 8.507059e+37
    %v2027 = vand.u32 %v2000, 2147483648
    %v2028 = vor.u32 1.1754944e-38, %v2027
    %v2029 = vsel %vm2026, %v2028, %v2024
    %v2030 = vmul.f32 1.0, %v2029
    %v2031 = vtanh.pop %v1992
    %v2033 = vrot.slane %v1944, 6
    %2034 = vrot.lane.b32.xlu0 %v2033, 64
    %v2035 = vpop.permute.xlu0 %2034
    %v2037 = vmul.f32 %v2015, %v2035
    %2039 = vrot.lane.b32.xlu0 %v2031, 64
    %v2040 = vpop.permute.xlu0 %2039
    %v2042 = vmul.f32 %v2015, %v2040
    %2044 = vrot.lane.b32.xlu0 %v2042, 64
    %v2045 = vpop.permute.xlu0 %2044
    %v2047 = vadd.f32 %v2037, %v2045
    %v2048 = vtanh.pop %v2047
    %2050 = vrot.lane.b32.xlu0 %v2048, 64
    %v2051 = vpop.permute.xlu0 %2050
    %v2053 = vmul.f32 %v2030, %v2051
    %v2054 = vld [vmem:[#allocation4 + $0xa] sm:$0x3]
    %v2055 = vsub.f32 1.0, %v2054
    %v2057 = vrot.slane %v2053, 2
    %v2059 = vmul.f32 %v2054, %v2057
    %v2061 = vrot.slane %v2047, 2
    %2062 = vrot.lane.b32.xlu0 %v2061, 64
    %v2063 = vpop.permute.xlu0 %2062
    %v2065 = vmul.f32 %v2054, %v2063
    %v2066 = vmul.f32 %v2055, %v1944
    %v2067 = vadd.f32 %v2065, %v2066
    %v2068 = vmul.f32 %v2055, %v1946
    %v2069 = vadd.f32 %v2059, %v2068
    %2070 = vst.msk [vmem:[#allocation3 + $0xa] sm:$0x3] %vm337, %v2059
    %2072 = vrot.lane.b32.xlu0 %v2059, 64
    %v2073 = vpop.permute.xlu0 %2072
    %2075 = vst.msk [vmem:[#allocation3 + $0x4] sm:$0x3] %vm343, %v2073
    %v2076 = vld [vmem:[#allocation2 + $0x10] sm:$0x30]
    %v2077 = vld [vmem:[#allocation2 + $0x18] sm:$0x30]
    %v2078 = vpack.c.bf16 %v2069, %v2069
    %v2080 = vsel %vm238, %v2078, 0
    %2082 = vmatpush.bf16.msra.mxu0 0
    %2083 = vmatpush.bf16.msra.mxu0 0
    %2084 = vmatpush.bf16.msra.mxu0 0
    %2085 = vmatpush.bf16.msra.mxu0 0
    %2086 = vmatpush.bf16.msra.mxu0 %v1361
    %2087 = vmatpush.bf16.msra.mxu0 %v1359
    %2088 = vmatpush.bf16.msra.mxu0 %v1357
    %2089 = vmatpush.bf16.msra.mxu0 %v1355
    %2090 = vmatmul.bf16.gmra.mxu0 %v2080
    %v2091 = vpop.f32.mrf.mxu0
    %v2092 = vadd.f32 0.0, %v2091
    %v2093 = vpop.f32.mrf.mxu0
    %2094 = vdwg.mxu0
    %2095 = vmatpush.bf16.msra.mxu0 0
    %2096 = vmatpush.bf16.msra.mxu0 0
    %2097 = vmatpush.bf16.msra.mxu0 0
    %2098 = vmatpush.bf16.msra.mxu0 0
    %2099 = vmatpush.bf16.msra.mxu0 %v1362
    %2100 = vmatpush.bf16.msra.mxu0 %v1360
    %2101 = vmatpush.bf16.msra.mxu0 %v1358
    %2102 = vmatpush.bf16.msra.mxu0 %v1356
    %2103 = vmatmul.bf16.gmra.mxu0 %v2080
    %v2104 = vpop.f32.mrf.mxu0
    %v2105 = vadd.f32 0.0, %v2104
    %v2106 = vpop.f32.mrf.mxu0
    %2107 = vdwg.mxu0
    %v2110 = vrot.slane %v2092, 4
    %v2111 = vrot.slane %v2105, 4
    %v2114 = vadd.f32 %v2076, %v2110
    %v2115 = vadd.f32 %v2077, %v2111
    %v2116 = vxor.u32 %v2114, 2147483648
    %v2117 = vxor.u32 %v2115, 2147483648
    %v2118 = vmul.f32 %v2116, 1.442695
    %v2119 = vpow.pop %v2118
    %v2120 = vmul.f32 %v2117, 1.442695
    %v2121 = vpow.pop %v2120
    %v2122 = vadd.f32 %v2119, 1.0
    %v2123 = vadd.f32 %v2121, 1.0
    %v2124 = vrcp.pop %v2122
    %v2125 = vmul.f32 %v2122, %v2124
    %v2126 = vsub.f32 1.0, %v2125
    %v2127 = vmul.f32 %v2124, %v2126
    %v2128 = vadd.f32 %v2124, %v2127
    %vm2129 = vweird.f32 %v2122
    %vm2130 = vweird.f32 %v2124
    %vm2131 = vmor %vm2129, %vm2130
    %v2132 = vsel %vm2131, %v2124, %v2128
    %v2133 = vand.u32 2147483647, %v2122
    %vm2134 = vcmp.eq.f32.partialorder %v2133, 8.507059e+37
    %v2135 = vand.u32 %v2122, 2147483648
    %v2136 = vor.u32 1.1754944e-38, %v2135
    %v2137 = vsel %vm2134, %v2136, %v2132
    %v2138 = vmul.f32 1.0, %v2137
    %v2139 = vrcp.pop %v2123
    %v2140 = vmul.f32 %v2123, %v2139
    %v2141 = vsub.f32 1.0, %v2140
    %v2142 = vmul.f32 %v2139, %v2141
    %v2143 = vadd.f32 %v2139, %v2142
    %vm2144 = vweird.f32 %v2123
    %vm2145 = vweird.f32 %v2139
    %vm2146 = vmor %vm2144, %vm2145
    %v2147 = vsel %vm2146, %v2139, %v2143
    %v2148 = vand.u32 2147483647, %v2123
    %vm2149 = vcmp.eq.f32.partialorder %v2148, 8.507059e+37
    %v2150 = vand.u32 %v2123, 2147483648
    %v2151 = vor.u32 1.1754944e-38, %v2150
    %v2152 = vsel %vm2149, %v2151, %v2147
    %v2153 = vmul.f32 1.0, %v2152
    %v2154 = vtanh.pop %v2115
    %v2156 = vrot.slane %v2067, 4
    %2157 = vrot.lane.b32.xlu0 %v2156, 64
    %v2158 = vpop.permute.xlu0 %2157
    %v2160 = vmul.f32 %v2138, %v2158
    %2162 = vrot.lane.b32.xlu0 %v2154, 64
    %v2163 = vpop.permute.xlu0 %2162
    %v2165 = vmul.f32 %v2138, %v2163
    %2167 = vrot.lane.b32.xlu0 %v2165, 64
    %v2168 = vpop.permute.xlu0 %2167
    %v2170 = vadd.f32 %v2160, %v2168
    %v2171 = vtanh.pop %v2170
    %2173 = vrot.lane.b32.xlu0 %v2171, 64
    %v2174 = vpop.permute.xlu0 %2173
    %v2176 = vmul.f32 %v2153, %v2174
    %v2177 = vld [vmem:[#allocation4 + $0xc] sm:$0x3]
    %v2178 = vsub.f32 1.0, %v2177
    %v2180 = vrot.slane %v2176, 4
    %v2182 = vmul.f32 %v2177, %v2180
    %v2184 = vrot.slane %v2170, 4
    %2185 = vrot.lane.b32.xlu0 %v2184, 64
    %v2186 = vpop.permute.xlu0 %2185
    %v2188 = vmul.f32 %v2177, %v2186
    %v2189 = vmul.f32 %v2178, %v2067
    %v2190 = vadd.f32 %v2188, %v2189
    %v2191 = vmul.f32 %v2178, %v2069
    %v2192 = vadd.f32 %v2182, %v2191
    %2193 = vst.msk [vmem:[#allocation3 + $0xc] sm:$0x3] %vm337, %v2182
    %2195 = vrot.lane.b32.xlu0 %v2182, 64
    %v2196 = vpop.permute.xlu0 %2195
    %2198 = vst.msk [vmem:[#allocation3 + $0x2] sm:$0x3] %vm343, %v2196
    %v2199 = vld [vmem:[#allocation2 + $0x10] sm:$0xc0]
    %v2200 = vld [vmem:[#allocation2 + $0x18] sm:$0xc0]
    %v2201 = vpack.c.bf16 %v2192, %v2192
    %v2203 = vsel %vm238, %v2201, 0
    %2205 = vmatpush.bf16.msra.mxu0 0
    %2206 = vmatpush.bf16.msra.mxu0 0
    %2207 = vmatpush.bf16.msra.mxu0 0
    %2208 = vmatpush.bf16.msra.mxu0 0
    %2209 = vmatpush.bf16.msra.mxu0 %v1361
    %2210 = vmatpush.bf16.msra.mxu0 %v1359
    %2211 = vmatpush.bf16.msra.mxu0 %v1357
    %2212 = vmatpush.bf16.msra.mxu0 %v1355
    %2213 = vmatmul.bf16.gmra.mxu0 %v2203
    %v2214 = vpop.f32.mrf.mxu0
    %v2215 = vadd.f32 0.0, %v2214
    %v2216 = vpop.f32.mrf.mxu0
    %2217 = vdwg.mxu0
    %2218 = vmatpush.bf16.msra.mxu0 0
    %2219 = vmatpush.bf16.msra.mxu0 0
    %2220 = vmatpush.bf16.msra.mxu0 0
    %2221 = vmatpush.bf16.msra.mxu0 0
    %2222 = vmatpush.bf16.msra.mxu0 %v1362
    %2223 = vmatpush.bf16.msra.mxu0 %v1360
    %2224 = vmatpush.bf16.msra.mxu0 %v1358
    %2225 = vmatpush.bf16.msra.mxu0 %v1356
    %2226 = vmatmul.bf16.gmra.mxu0 %v2203
    %v2227 = vpop.f32.mrf.mxu0
    %v2228 = vadd.f32 0.0, %v2227
    %v2229 = vpop.f32.mrf.mxu0
    %2230 = vdwg.mxu0
    %v2233 = vrot.slane %v2215, 2
    %v2234 = vrot.slane %v2228, 2
    %v2237 = vadd.f32 %v2199, %v2233
    %v2238 = vadd.f32 %v2200, %v2234
    %v2239 = vxor.u32 %v2237, 2147483648
    %v2240 = vxor.u32 %v2238, 2147483648
    %v2241 = vmul.f32 %v2239, 1.442695
    %v2242 = vpow.pop %v2241
    %v2243 = vmul.f32 %v2240, 1.442695
    %v2244 = vpow.pop %v2243
    %v2245 = vadd.f32 %v2242, 1.0
    %v2246 = vadd.f32 %v2244, 1.0
    %v2247 = vrcp.pop %v2245
    %v2248 = vmul.f32 %v2245, %v2247
    %v2249 = vsub.f32 1.0, %v2248
    %v2250 = vmul.f32 %v2247, %v2249
    %v2251 = vadd.f32 %v2247, %v2250
    %vm2252 = vweird.f32 %v2245
    %vm2253 = vweird.f32 %v2247
    %vm2254 = vmor %vm2252, %vm2253
    %v2255 = vsel %vm2254, %v2247, %v2251
    %v2256 = vand.u32 2147483647, %v2245
    %vm2257 = vcmp.eq.f32.partialorder %v2256, 8.507059e+37
    %v2258 = vand.u32 %v2245, 2147483648
    %v2259 = vor.u32 1.1754944e-38, %v2258
    %v2260 = vsel %vm2257, %v2259, %v2255
    %v2261 = vmul.f32 1.0, %v2260
    %v2262 = vrcp.pop %v2246
    %v2263 = vmul.f32 %v2246, %v2262
    %v2264 = vsub.f32 1.0, %v2263
    %v2265 = vmul.f32 %v2262, %v2264
    %v2266 = vadd.f32 %v2262, %v2265
    %vm2267 = vweird.f32 %v2246
    %vm2268 = vweird.f32 %v2262
    %vm2269 = vmor %vm2267, %vm2268
    %v2270 = vsel %vm2269, %v2262, %v2266
    %v2271 = vand.u32 2147483647, %v2246
    %vm2272 = vcmp.eq.f32.partialorder %v2271, 8.507059e+37
    %v2273 = vand.u32 %v2246, 2147483648
    %v2274 = vor.u32 1.1754944e-38, %v2273
    %v2275 = vsel %vm2272, %v2274, %v2270
    %v2276 = vmul.f32 1.0, %v2275
    %v2277 = vtanh.pop %v2238
    %v2279 = vrot.slane %v2190, 2
    %2280 = vrot.lane.b32.xlu0 %v2279, 64
    %v2281 = vpop.permute.xlu0 %2280
    %v2283 = vmul.f32 %v2261, %v2281
    %2285 = vrot.lane.b32.xlu0 %v2277, 64
    %v2286 = vpop.permute.xlu0 %2285
    %v2288 = vmul.f32 %v2261, %v2286
    %2290 = vrot.lane.b32.xlu0 %v2288, 64
    %v2291 = vpop.permute.xlu0 %2290
    %v2293 = vadd.f32 %v2283, %v2291
    %v2294 = vtanh.pop %v2293
    %2296 = vrot.lane.b32.xlu0 %v2294, 64
    %v2297 = vpop.permute.xlu0 %2296
    %v2299 = vmul.f32 %v2276, %v2297
    %v2300 = vld [vmem:[#allocation4 + $0xe] sm:$0x3]
    %v2302 = vrot.slane %v2299, 6
    %v2304 = vmul.f32 %v2300, %v2302
    %2305 = vst.msk [vmem:[#allocation3 + $0xe] sm:$0x3] %vm337, %v2304
    %2307 = vrot.lane.b32.xlu0 %v2304, 64
    %v2308 = vpop.permute.xlu0 %2307
    %2310 = vst.msk [vmem:[#allocation3] sm:$0x3] %vm343, %v2308
    %v2311 = vld [vmem:[#allocation3] sm:$0xff]
    %v2312 = vld [vmem:[#allocation3 + $0x8] sm:$0xff]
    %v2313 = vpack.c.bf16 %v2312, %v2311
    %v2314 = vld [vmem:[#allocation12] sm:$0xff]
    %v2315 = vld [vmem:[#allocation12 + $0x8] sm:$0xff]
    %v2316 = vld [vmem:[#allocation12 + $0x10] sm:$0xff]
    %v2317 = vld [vmem:[#allocation12 + $0x18] sm:$0xff]
    %v2318 = vld [vmem:[#allocation12 + $0x20] sm:$0xff]
    %v2319 = vld [vmem:[#allocation12 + $0x28] sm:$0xff]
    %v2320 = vld [vmem:[#allocation12 + $0x30] sm:$0xff]
    %v2321 = vld [vmem:[#allocation12 + $0x38] sm:$0xff]
    %v2322 = vld [vmem:[#allocation12 + $0x40] sm:$0xff]
    %v2323 = vld [vmem:[#allocation12 + $0x48] sm:$0xff]
    %v2324 = vld [vmem:[#allocation12 + $0x50] sm:$0xff]
    %v2325 = vld [vmem:[#allocation12 + $0x58] sm:$0xff]
    %v2326 = vld [vmem:[#allocation12 + $0x60] sm:$0xff]
    %v2327 = vld [vmem:[#allocation12 + $0x68] sm:$0xff]
    %v2328 = vld [vmem:[#allocation12 + $0x70] sm:$0xff]
    %v2329 = vld [vmem:[#allocation12 + $0x78] sm:$0xff]
    %v2330 = vld [vmem:[%s8] sm:$0x3]
    %v2332 = vperm.slane %v2330, 0
    %v2333 = vperm.slane %v2330, 1
    %v2352 = vunpack.c.l.b16 %v2314
    %v2353 = vunpack.c.h.b16 %v2314
    %v2354 = vunpack.c.l.b16 %v2315
    %v2355 = vunpack.c.h.b16 %v2315
    %v2356 = vunpack.c.l.b16 %v2316
    %v2357 = vunpack.c.h.b16 %v2316
    %v2358 = vunpack.c.l.b16 %v2317
    %v2359 = vunpack.c.h.b16 %v2317
    %v2360 = vunpack.c.l.b16 %v2318
    %v2361 = vunpack.c.h.b16 %v2318
    %v2362 = vunpack.c.l.b16 %v2319
    %v2363 = vunpack.c.h.b16 %v2319
    %v2364 = vunpack.c.l.b16 %v2320
    %v2365 = vunpack.c.h.b16 %v2320
    %v2366 = vunpack.c.l.b16 %v2321
    %v2367 = vunpack.c.h.b16 %v2321
    %v2368 = vunpack.c.l.b16 %v2322
    %v2369 = vunpack.c.h.b16 %v2322
    %v2370 = vunpack.c.l.b16 %v2323
    %v2371 = vunpack.c.h.b16 %v2323
    %v2372 = vunpack.c.l.b16 %v2324
    %v2373 = vunpack.c.h.b16 %v2324
    %v2374 = vunpack.c.l.b16 %v2325
    %v2375 = vunpack.c.h.b16 %v2325
    %v2376 = vunpack.c.l.b16 %v2326
    %v2377 = vunpack.c.h.b16 %v2326
    %v2378 = vunpack.c.l.b16 %v2327
    %v2379 = vunpack.c.h.b16 %v2327
    %v2380 = vunpack.c.l.b16 %v2328
    %v2381 = vunpack.c.h.b16 %v2328
    %v2382 = vunpack.c.l.b16 %v2329
    %v2383 = vunpack.c.h.b16 %v2329
    %v2384 = vpack.c.b16 %v2354, %v2352
    %v2385 = vpack.c.b16 %v2355, %v2353
    %v2386 = vpack.c.b16 %v2358, %v2356
    %v2387 = vpack.c.b16 %v2359, %v2357
    %v2388 = vpack.c.b16 %v2362, %v2360
    %v2389 = vpack.c.b16 %v2363, %v2361
    %v2390 = vpack.c.b16 %v2366, %v2364
    %v2391 = vpack.c.b16 %v2367, %v2365
    %v2392 = vpack.c.b16 %v2370, %v2368
    %v2393 = vpack.c.b16 %v2371, %v2369
    %v2394 = vpack.c.b16 %v2374, %v2372
    %v2395 = vpack.c.b16 %v2375, %v2373
    %v2396 = vpack.c.b16 %v2378, %v2376
    %v2397 = vpack.c.b16 %v2379, %v2377
    %v2398 = vpack.c.b16 %v2382, %v2380
    %v2399 = vpack.c.b16 %v2383, %v2381
    %2416 = vmatpush.bf16.msra.mxu0 %v2398
    %2417 = vmatpush.bf16.msra.mxu0 %v2396
    %2418 = vmatpush.bf16.msra.mxu0 %v2394
    %2419 = vmatpush.bf16.msra.mxu0 %v2392
    %2420 = vmatpush.bf16.msra.mxu0 %v2390
    %2421 = vmatpush.bf16.msra.mxu0 %v2388
    %2422 = vmatpush.bf16.msra.mxu0 %v2386
    %2423 = vmatpush.bf16.msra.mxu0 %v2384
    %2424 = vmatmul.bf16.gmra.mxu0 %v2313
    %v2425 = vpop.f32.mrf.mxu0
    %v2426 = vadd.f32 %v2332, %v2425
    %v2427 = vpop.f32.mrf.mxu0
    %v2428 = vadd.f32 %v2332, %v2427
    %2429 = vdwg.mxu0
    %2430 = vmatpush.bf16.msra.mxu0 %v2399
    %2431 = vmatpush.bf16.msra.mxu0 %v2397
    %2432 = vmatpush.bf16.msra.mxu0 %v2395
    %2433 = vmatpush.bf16.msra.mxu0 %v2393
    %2434 = vmatpush.bf16.msra.mxu0 %v2391
    %2435 = vmatpush.bf16.msra.mxu0 %v2389
    %2436 = vmatpush.bf16.msra.mxu0 %v2387
    %2437 = vmatpush.bf16.msra.mxu0 %v2385
    %2438 = vmatmul.bf16.gmra.mxu0 %v2313
    %v2439 = vpop.f32.mrf.mxu0
    %v2440 = vadd.f32 %v2333, %v2439
    %v2441 = vpop.f32.mrf.mxu0
    %v2442 = vadd.f32 %v2333, %v2441
    %2443 = vdwg.mxu0
    %2444 = vst [vmem:[#allocation2] sm:$0xff] %v2426
    %2445 = vst [vmem:[#allocation2 + $0x8] sm:$0xff] %v2440
    %2446 = vst [vmem:[#allocation2 + $0x10] sm:$0xff] %v2428
    %2447 = vst [vmem:[#allocation2 + $0x18] sm:$0xff] %v2442
    %v2448 = vld [vmem:[#allocation13] sm:$0xff]
    %v2449 = vld [vmem:[#allocation13 + $0x8] sm:$0xff]
    %v2450 = vld [vmem:[#allocation13 + $0x10] sm:$0xff]
    %v2451 = vld [vmem:[#allocation13 + $0x18] sm:$0xff]
    %v2452 = vld [vmem:[#allocation13 + $0x20] sm:$0xff]
    %v2453 = vld [vmem:[#allocation13 + $0x28] sm:$0xff]
    %v2454 = vld [vmem:[#allocation13 + $0x30] sm:$0xff]
    %v2455 = vld [vmem:[#allocation13 + $0x38] sm:$0xff]
    %v2456 = vld [vmem:[#allocation2] sm:$0x3]
    %v2457 = vld [vmem:[#allocation2 + $0x8] sm:$0x3]
    %v2466 = vunpack.c.l.b16 %v2448
    %v2467 = vunpack.c.h.b16 %v2448
    %v2468 = vunpack.c.l.b16 %v2449
    %v2469 = vunpack.c.h.b16 %v2449
    %v2470 = vunpack.c.l.b16 %v2450
    %v2471 = vunpack.c.h.b16 %v2450
    %v2472 = vunpack.c.l.b16 %v2451
    %v2473 = vunpack.c.h.b16 %v2451
    %v2474 = vunpack.c.l.b16 %v2452
    %v2475 = vunpack.c.h.b16 %v2452
    %v2476 = vunpack.c.l.b16 %v2453
    %v2477 = vunpack.c.h.b16 %v2453
    %v2478 = vunpack.c.l.b16 %v2454
    %v2479 = vunpack.c.h.b16 %v2454
    %v2480 = vunpack.c.l.b16 %v2455
    %v2481 = vunpack.c.h.b16 %v2455
    %v2482 = vpack.c.b16 %v2468, %v2466
    %v2483 = vpack.c.b16 %v2469, %v2467
    %v2484 = vpack.c.b16 %v2472, %v2470
    %v2485 = vpack.c.b16 %v2473, %v2471
    %v2486 = vpack.c.b16 %v2476, %v2474
    %v2487 = vpack.c.b16 %v2477, %v2475
    %v2488 = vpack.c.b16 %v2480, %v2478
    %v2489 = vpack.c.b16 %v2481, %v2479
    %2498 = vmatpush.bf16.msra.mxu0 0
    %2499 = vmatpush.bf16.msra.mxu0 0
    %2500 = vmatpush.bf16.msra.mxu0 0
    %2501 = vmatpush.bf16.msra.mxu0 0
    %2502 = vmatpush.bf16.msra.mxu0 %v2488
    %2503 = vmatpush.bf16.msra.mxu0 %v2486
    %2504 = vmatpush.bf16.msra.mxu0 %v2484
    %2505 = vmatpush.bf16.msra.mxu0 %v2482
    %2506 = vmatmul.bf16.gmra.mxu0 %v240
    %v2507 = vpop.f32.mrf.mxu0
    %v2508 = vadd.f32 0.0, %v2507
    %v2509 = vpop.f32.mrf.mxu0
    %2510 = vdwg.mxu0
    %2511 = vmatpush.bf16.msra.mxu0 0
    %2512 = vmatpush.bf16.msra.mxu0 0
    %2513 = vmatpush.bf16.msra.mxu0 0
    %2514 = vmatpush.bf16.msra.mxu0 0
    %2515 = vmatpush.bf16.msra.mxu0 %v2489
    %2516 = vmatpush.bf16.msra.mxu0 %v2487
    %2517 = vmatpush.bf16.msra.mxu0 %v2485
    %2518 = vmatpush.bf16.msra.mxu0 %v2483
    %2519 = vmatmul.bf16.gmra.mxu0 %v240
    %v2520 = vpop.f32.mrf.mxu0
    %v2521 = vadd.f32 0.0, %v2520
    %v2522 = vpop.f32.mrf.mxu0
    %2523 = vdwg.mxu0
    %v2524 = vadd.f32 %v2456, %v2508
    %v2525 = vadd.f32 %v2457, %v2521
    %v2526 = vxor.u32 %v2524, 2147483648
    %v2527 = vxor.u32 %v2525, 2147483648
    %v2528 = vmul.f32 %v2526, 1.442695
    %v2529 = vpow.pop %v2528
    %v2530 = vmul.f32 %v2527, 1.442695
    %v2531 = vpow.pop %v2530
    %v2532 = vadd.f32 %v2529, 1.0
    %v2533 = vadd.f32 %v2531, 1.0
    %v2534 = vrcp.pop %v2532
    %v2535 = vmul.f32 %v2532, %v2534
    %v2536 = vsub.f32 1.0, %v2535
    %v2537 = vmul.f32 %v2534, %v2536
    %v2538 = vadd.f32 %v2534, %v2537
    %vm2539 = vweird.f32 %v2532
    %vm2540 = vweird.f32 %v2534
    %vm2541 = vmor %vm2539, %vm2540
    %v2542 = vsel %vm2541, %v2534, %v2538
    %v2543 = vand.u32 2147483647, %v2532
    %vm2544 = vcmp.eq.f32.partialorder %v2543, 8.507059e+37
    %v2545 = vand.u32 %v2532, 2147483648
    %v2546 = vor.u32 1.1754944e-38, %v2545
    %v2547 = vsel %vm2544, %v2546, %v2542
    %v2548 = vmul.f32 1.0, %v2547
    %v2549 = vrcp.pop %v2533
    %v2550 = vmul.f32 %v2533, %v2549
    %v2551 = vsub.f32 1.0, %v2550
    %v2552 = vmul.f32 %v2549, %v2551
    %v2553 = vadd.f32 %v2549, %v2552
    %vm2554 = vweird.f32 %v2533
    %vm2555 = vweird.f32 %v2549
    %vm2556 = vmor %vm2554, %vm2555
    %v2557 = vsel %vm2556, %v2549, %v2553
    %v2558 = vand.u32 2147483647, %v2533
    %vm2559 = vcmp.eq.f32.partialorder %v2558, 8.507059e+37
    %v2560 = vand.u32 %v2533, 2147483648
    %v2561 = vor.u32 1.1754944e-38, %v2560
    %v2562 = vsel %vm2559, %v2561, %v2557
    %v2563 = vmul.f32 1.0, %v2562
    %v2564 = vtanh.pop %v2525
    %v2565 = vmul.f32 %v2548, 0.0
    %2567 = vrot.lane.b32.xlu0 %v2564, 64
    %v2568 = vpop.permute.xlu0 %2567
    %v2570 = vmul.f32 %v2548, %v2568
    %2572 = vrot.lane.b32.xlu0 %v2570, 64
    %v2573 = vpop.permute.xlu0 %2572
    %v2575 = vadd.f32 %v2565, %v2573
    %v2576 = vtanh.pop %v2575
    %2578 = vrot.lane.b32.xlu0 %v2576, 64
    %v2579 = vpop.permute.xlu0 %2578
    %v2581 = vmul.f32 %v2563, %v2579
    %v2582 = vld [vmem:[#allocation4] sm:$0x3]
    %v2583 = vsub.f32 1.0, %v2582
    %v2584 = vmul.f32 %v2582, %v2581
    %2586 = vrot.lane.b32.xlu0 %v2575, 64
    %v2587 = vpop.permute.xlu0 %2586
    %v2589 = vmul.f32 %v2582, %v2587
    %v2590 = vmul.f32 %v2583, 0.0
    %v2591 = vadd.f32 %v2589, %v2590
    %v2592 = vadd.f32 %v2584, %v2590
    %2593 = vst.msk [vmem:[#allocation3] sm:$0x3] %vm337, %v2584
    %2595 = vrot.lane.b32.xlu0 %v2584, 64
    %v2596 = vpop.permute.xlu0 %2595
    %2598 = vst.msk [vmem:[#allocation3 + $0xe] sm:$0x3] %vm343, %v2596
    %v2599 = vld [vmem:[#allocation2] sm:$0xc]
    %v2600 = vld [vmem:[#allocation2 + $0x8] sm:$0xc]
    %v2601 = vpack.c.bf16 %v2592, %v2592
    %v2603 = vsel %vm238, %v2601, 0
    %2605 = vmatpush.bf16.msra.mxu0 0
    %2606 = vmatpush.bf16.msra.mxu0 0
    %2607 = vmatpush.bf16.msra.mxu0 0
    %2608 = vmatpush.bf16.msra.mxu0 0
    %2609 = vmatpush.bf16.msra.mxu0 %v2488
    %2610 = vmatpush.bf16.msra.mxu0 %v2486
    %2611 = vmatpush.bf16.msra.mxu0 %v2484
    %2612 = vmatpush.bf16.msra.mxu0 %v2482
    %2613 = vmatmul.bf16.gmra.mxu0 %v2603
    %v2614 = vpop.f32.mrf.mxu0
    %v2615 = vadd.f32 0.0, %v2614
    %v2616 = vpop.f32.mrf.mxu0
    %2617 = vdwg.mxu0
    %2618 = vmatpush.bf16.msra.mxu0 0
    %2619 = vmatpush.bf16.msra.mxu0 0
    %2620 = vmatpush.bf16.msra.mxu0 0
    %2621 = vmatpush.bf16.msra.mxu0 0
    %2622 = vmatpush.bf16.msra.mxu0 %v2489
    %2623 = vmatpush.bf16.msra.mxu0 %v2487
    %2624 = vmatpush.bf16.msra.mxu0 %v2485
    %2625 = vmatpush.bf16.msra.mxu0 %v2483
    %2626 = vmatmul.bf16.gmra.mxu0 %v2603
    %v2627 = vpop.f32.mrf.mxu0
    %v2628 = vadd.f32 0.0, %v2627
    %v2629 = vpop.f32.mrf.mxu0
    %2630 = vdwg.mxu0
    %v2633 = vrot.slane %v2615, 6
    %v2634 = vrot.slane %v2628, 6
    %v2637 = vadd.f32 %v2599, %v2633
    %v2638 = vadd.f32 %v2600, %v2634
    %v2639 = vxor.u32 %v2637, 2147483648
    %v2640 = vxor.u32 %v2638, 2147483648
    %v2641 = vmul.f32 %v2639, 1.442695
    %v2642 = vpow.pop %v2641
    %v2643 = vmul.f32 %v2640, 1.442695
    %v2644 = vpow.pop %v2643
    %v2645 = vadd.f32 %v2642, 1.0
    %v2646 = vadd.f32 %v2644, 1.0
    %v2647 = vrcp.pop %v2645
    %v2648 = vmul.f32 %v2645, %v2647
    %v2649 = vsub.f32 1.0, %v2648
    %v2650 = vmul.f32 %v2647, %v2649
    %v2651 = vadd.f32 %v2647, %v2650
    %vm2652 = vweird.f32 %v2645
    %vm2653 = vweird.f32 %v2647
    %vm2654 = vmor %vm2652, %vm2653
    %v2655 = vsel %vm2654, %v2647, %v2651
    %v2656 = vand.u32 2147483647, %v2645
    %vm2657 = vcmp.eq.f32.partialorder %v2656, 8.507059e+37
    %v2658 = vand.u32 %v2645, 2147483648
    %v2659 = vor.u32 1.1754944e-38, %v2658
    %v2660 = vsel %vm2657, %v2659, %v2655
    %v2661 = vmul.f32 1.0, %v2660
    %v2662 = vrcp.pop %v2646
    %v2663 = vmul.f32 %v2646, %v2662
    %v2664 = vsub.f32 1.0, %v2663
    %v2665 = vmul.f32 %v2662, %v2664
    %v2666 = vadd.f32 %v2662, %v2665
    %vm2667 = vweird.f32 %v2646
    %vm2668 = vweird.f32 %v2662
    %vm2669 = vmor %vm2667, %vm2668
    %v2670 = vsel %vm2669, %v2662, %v2666
    %v2671 = vand.u32 2147483647, %v2646
    %vm2672 = vcmp.eq.f32.partialorder %v2671, 8.507059e+37
    %v2673 = vand.u32 %v2646, 2147483648
    %v2674 = vor.u32 1.1754944e-38, %v2673
    %v2675 = vsel %vm2672, %v2674, %v2670
    %v2676 = vmul.f32 1.0, %v2675
    %v2677 = vtanh.pop %v2638
    %v2679 = vrot.slane %v2591, 6
    %2680 = vrot.lane.b32.xlu0 %v2679, 64
    %v2681 = vpop.permute.xlu0 %2680
    %v2683 = vmul.f32 %v2661, %v2681
    %2685 = vrot.lane.b32.xlu0 %v2677, 64
    %v2686 = vpop.permute.xlu0 %2685
    %v2688 = vmul.f32 %v2661, %v2686
    %2690 = vrot.lane.b32.xlu0 %v2688, 64
    %v2691 = vpop.permute.xlu0 %2690
    %v2693 = vadd.f32 %v2683, %v2691
    %v2694 = vtanh.pop %v2693
    %2696 = vrot.lane.b32.xlu0 %v2694, 64
    %v2697 = vpop.permute.xlu0 %2696
    %v2699 = vmul.f32 %v2676, %v2697
    %v2700 = vld [vmem:[#allocation4 + $0x2] sm:$0x3]
    %v2701 = vsub.f32 1.0, %v2700
    %v2703 = vrot.slane %v2699, 2
    %v2705 = vmul.f32 %v2700, %v2703
    %v2707 = vrot.slane %v2693, 2
    %2708 = vrot.lane.b32.xlu0 %v2707, 64
    %v2709 = vpop.permute.xlu0 %2708
    %v2711 = vmul.f32 %v2700, %v2709
    %v2712 = vmul.f32 %v2701, %v2591
    %v2713 = vadd.f32 %v2711, %v2712
    %v2714 = vmul.f32 %v2701, %v2592
    %v2715 = vadd.f32 %v2705, %v2714
    %2716 = vst.msk [vmem:[#allocation3 + $0x2] sm:$0x3] %vm337, %v2705
    %2718 = vrot.lane.b32.xlu0 %v2705, 64
    %v2719 = vpop.permute.xlu0 %2718
    %2721 = vst.msk [vmem:[#allocation3 + $0xc] sm:$0x3] %vm343, %v2719
    %v2722 = vld [vmem:[#allocation2] sm:$0x30]
    %v2723 = vld [vmem:[#allocation2 + $0x8] sm:$0x30]
    %v2724 = vpack.c.bf16 %v2715, %v2715
    %v2726 = vsel %vm238, %v2724, 0
    %2728 = vmatpush.bf16.msra.mxu0 0
    %2729 = vmatpush.bf16.msra.mxu0 0
    %2730 = vmatpush.bf16.msra.mxu0 0
    %2731 = vmatpush.bf16.msra.mxu0 0
    %2732 = vmatpush.bf16.msra.mxu0 %v2488
    %2733 = vmatpush.bf16.msra.mxu0 %v2486
    %2734 = vmatpush.bf16.msra.mxu0 %v2484
    %2735 = vmatpush.bf16.msra.mxu0 %v2482
    %2736 = vmatmul.bf16.gmra.mxu0 %v2726
    %v2737 = vpop.f32.mrf.mxu0
    %v2738 = vadd.f32 0.0, %v2737
    %v2739 = vpop.f32.mrf.mxu0
    %2740 = vdwg.mxu0
    %2741 = vmatpush.bf16.msra.mxu0 0
    %2742 = vmatpush.bf16.msra.mxu0 0
    %2743 = vmatpush.bf16.msra.mxu0 0
    %2744 = vmatpush.bf16.msra.mxu0 0
    %2745 = vmatpush.bf16.msra.mxu0 %v2489
    %2746 = vmatpush.bf16.msra.mxu0 %v2487
    %2747 = vmatpush.bf16.msra.mxu0 %v2485
    %2748 = vmatpush.bf16.msra.mxu0 %v2483
    %2749 = vmatmul.bf16.gmra.mxu0 %v2726
    %v2750 = vpop.f32.mrf.mxu0
    %v2751 = vadd.f32 0.0, %v2750
    %v2752 = vpop.f32.mrf.mxu0
    %2753 = vdwg.mxu0
    %v2756 = vrot.slane %v2738, 4
    %v2757 = vrot.slane %v2751, 4
    %v2760 = vadd.f32 %v2722, %v2756
    %v2761 = vadd.f32 %v2723, %v2757
    %v2762 = vxor.u32 %v2760, 2147483648
    %v2763 = vxor.u32 %v2761, 2147483648
    %v2764 = vmul.f32 %v2762, 1.442695
    %v2765 = vpow.pop %v2764
    %v2766 = vmul.f32 %v2763, 1.442695
    %v2767 = vpow.pop %v2766
    %v2768 = vadd.f32 %v2765, 1.0
    %v2769 = vadd.f32 %v2767, 1.0
    %v2770 = vrcp.pop %v2768
    %v2771 = vmul.f32 %v2768, %v2770
    %v2772 = vsub.f32 1.0, %v2771
    %v2773 = vmul.f32 %v2770, %v2772
    %v2774 = vadd.f32 %v2770, %v2773
    %vm2775 = vweird.f32 %v2768
    %vm2776 = vweird.f32 %v2770
    %vm2777 = vmor %vm2775, %vm2776
    %v2778 = vsel %vm2777, %v2770, %v2774
    %v2779 = vand.u32 2147483647, %v2768
    %vm2780 = vcmp.eq.f32.partialorder %v2779, 8.507059e+37
    %v2781 = vand.u32 %v2768, 2147483648
    %v2782 = vor.u32 1.1754944e-38, %v2781
    %v2783 = vsel %vm2780, %v2782, %v2778
    %v2784 = vmul.f32 1.0, %v2783
    %v2785 = vrcp.pop %v2769
    %v2786 = vmul.f32 %v2769, %v2785
    %v2787 = vsub.f32 1.0, %v2786
    %v2788 = vmul.f32 %v2785, %v2787
    %v2789 = vadd.f32 %v2785, %v2788
    %vm2790 = vweird.f32 %v2769
    %vm2791 = vweird.f32 %v2785
    %vm2792 = vmor %vm2790, %vm2791
    %v2793 = vsel %vm2792, %v2785, %v2789
    %v2794 = vand.u32 2147483647, %v2769
    %vm2795 = vcmp.eq.f32.partialorder %v2794, 8.507059e+37
    %v2796 = vand.u32 %v2769, 2147483648
    %v2797 = vor.u32 1.1754944e-38, %v2796
    %v2798 = vsel %vm2795, %v2797, %v2793
    %v2799 = vmul.f32 1.0, %v2798
    %v2800 = vtanh.pop %v2761
    %v2802 = vrot.slane %v2713, 4
    %2803 = vrot.lane.b32.xlu0 %v2802, 64
    %v2804 = vpop.permute.xlu0 %2803
    %v2806 = vmul.f32 %v2784, %v2804
    %2808 = vrot.lane.b32.xlu0 %v2800, 64
    %v2809 = vpop.permute.xlu0 %2808
    %v2811 = vmul.f32 %v2784, %v2809
    %2813 = vrot.lane.b32.xlu0 %v2811, 64
    %v2814 = vpop.permute.xlu0 %2813
    %v2816 = vadd.f32 %v2806, %v2814
    %v2817 = vtanh.pop %v2816
    %2819 = vrot.lane.b32.xlu0 %v2817, 64
    %v2820 = vpop.permute.xlu0 %2819
    %v2822 = vmul.f32 %v2799, %v2820
    %v2823 = vld [vmem:[#allocation4 + $0x4] sm:$0x3]
    %v2824 = vsub.f32 1.0, %v2823
    %v2826 = vrot.slane %v2822, 4
    %v2828 = vmul.f32 %v2823, %v2826
    %v2830 = vrot.slane %v2816, 4
    %2831 = vrot.lane.b32.xlu0 %v2830, 64
    %v2832 = vpop.permute.xlu0 %2831
    %v2834 = vmul.f32 %v2823, %v2832
    %v2835 = vmul.f32 %v2824, %v2713
    %v2836 = vadd.f32 %v2834, %v2835
    %v2837 = vmul.f32 %v2824, %v2715
    %v2838 = vadd.f32 %v2828, %v2837
    %2839 = vst.msk [vmem:[#allocation3 + $0x4] sm:$0x3] %vm337, %v2828
    %2841 = vrot.lane.b32.xlu0 %v2828, 64
    %v2842 = vpop.permute.xlu0 %2841
    %2844 = vst.msk [vmem:[#allocation3 + $0xa] sm:$0x3] %vm343, %v2842
    %v2845 = vld [vmem:[#allocation2] sm:$0xc0]
    %v2846 = vld [vmem:[#allocation2 + $0x8] sm:$0xc0]
    %v2847 = vpack.c.bf16 %v2838, %v2838
    %v2849 = vsel %vm238, %v2847, 0
    %2851 = vmatpush.bf16.msra.mxu0 0
    %2852 = vmatpush.bf16.msra.mxu0 0
    %2853 = vmatpush.bf16.msra.mxu0 0
    %2854 = vmatpush.bf16.msra.mxu0 0
    %2855 = vmatpush.bf16.msra.mxu0 %v2488
    %2856 = vmatpush.bf16.msra.mxu0 %v2486
    %2857 = vmatpush.bf16.msra.mxu0 %v2484
    %2858 = vmatpush.bf16.msra.mxu0 %v2482
    %2859 = vmatmul.bf16.gmra.mxu0 %v2849
    %v2860 = vpop.f32.mrf.mxu0
    %v2861 = vadd.f32 0.0, %v2860
    %v2862 = vpop.f32.mrf.mxu0
    %2863 = vdwg.mxu0
    %2864 = vmatpush.bf16.msra.mxu0 0
    %2865 = vmatpush.bf16.msra.mxu0 0
    %2866 = vmatpush.bf16.msra.mxu0 0
    %2867 = vmatpush.bf16.msra.mxu0 0
    %2868 = vmatpush.bf16.msra.mxu0 %v2489
    %2869 = vmatpush.bf16.msra.mxu0 %v2487
    %2870 = vmatpush.bf16.msra.mxu0 %v2485
    %2871 = vmatpush.bf16.msra.mxu0 %v2483
    %2872 = vmatmul.bf16.gmra.mxu0 %v2849
    %v2873 = vpop.f32.mrf.mxu0
    %v2874 = vadd.f32 0.0, %v2873
    %v2875 = vpop.f32.mrf.mxu0
    %2876 = vdwg.mxu0
    %v2879 = vrot.slane %v2861, 2
    %v2880 = vrot.slane %v2874, 2
    %v2883 = vadd.f32 %v2845, %v2879
    %v2884 = vadd.f32 %v2846, %v2880
    %v2885 = vxor.u32 %v2883, 2147483648
    %v2886 = vxor.u32 %v2884, 2147483648
    %v2887 = vmul.f32 %v2885, 1.442695
    %v2888 = vpow.pop %v2887
    %v2889 = vmul.f32 %v2886, 1.442695
    %v2890 = vpow.pop %v2889
    %v2891 = vadd.f32 %v2888, 1.0
    %v2892 = vadd.f32 %v2890, 1.0
    %v2893 = vrcp.pop %v2891
    %v2894 = vmul.f32 %v2891, %v2893
    %v2895 = vsub.f32 1.0, %v2894
    %v2896 = vmul.f32 %v2893, %v2895
    %v2897 = vadd.f32 %v2893, %v2896
    %vm2898 = vweird.f32 %v2891
    %vm2899 = vweird.f32 %v2893
    %vm2900 = vmor %vm2898, %vm2899
    %v2901 = vsel %vm2900, %v2893, %v2897
    %v2902 = vand.u32 2147483647, %v2891
    %vm2903 = vcmp.eq.f32.partialorder %v2902, 8.507059e+37
    %v2904 = vand.u32 %v2891, 2147483648
    %v2905 = vor.u32 1.1754944e-38, %v2904
    %v2906 = vsel %vm2903, %v2905, %v2901
    %v2907 = vmul.f32 1.0, %v2906
    %v2908 = vrcp.pop %v2892
    %v2909 = vmul.f32 %v2892, %v2908
    %v2910 = vsub.f32 1.0, %v2909
    %v2911 = vmul.f32 %v2908, %v2910
    %v2912 = vadd.f32 %v2908, %v2911
    %vm2913 = vweird.f32 %v2892
    %vm2914 = vweird.f32 %v2908
    %vm2915 = vmor %vm2913, %vm2914
    %v2916 = vsel %vm2915, %v2908, %v2912
    %v2917 = vand.u32 2147483647, %v2892
    %vm2918 = vcmp.eq.f32.partialorder %v2917, 8.507059e+37
    %v2919 = vand.u32 %v2892, 2147483648
    %v2920 = vor.u32 1.1754944e-38, %v2919
    %v2921 = vsel %vm2918, %v2920, %v2916
    %v2922 = vmul.f32 1.0, %v2921
    %v2923 = vtanh.pop %v2884
    %v2925 = vrot.slane %v2836, 2
    %2926 = vrot.lane.b32.xlu0 %v2925, 64
    %v2927 = vpop.permute.xlu0 %2926
    %v2929 = vmul.f32 %v2907, %v2927
    %2931 = vrot.lane.b32.xlu0 %v2923, 64
    %v2932 = vpop.permute.xlu0 %2931
    %v2934 = vmul.f32 %v2907, %v2932
    %2936 = vrot.lane.b32.xlu0 %v2934, 64
    %v2937 = vpop.permute.xlu0 %2936
    %v2939 = vadd.f32 %v2929, %v2937
    %v2940 = vtanh.pop %v2939
    %2942 = vrot.lane.b32.xlu0 %v2940, 64
    %v2943 = vpop.permute.xlu0 %2942
    %v2945 = vmul.f32 %v2922, %v2943
    %v2946 = vld [vmem:[#allocation4 + $0x6] sm:$0x3]
    %v2947 = vsub.f32 1.0, %v2946
    %v2949 = vrot.slane %v2945, 6
    %v2951 = vmul.f32 %v2946, %v2949
    %v2953 = vrot.slane %v2939, 6
    %2954 = vrot.lane.b32.xlu0 %v2953, 64
    %v2955 = vpop.permute.xlu0 %2954
    %v2957 = vmul.f32 %v2946, %v2955
    %v2958 = vmul.f32 %v2947, %v2836
    %v2959 = vadd.f32 %v2957, %v2958
    %v2960 = vmul.f32 %v2947, %v2838
    %v2961 = vadd.f32 %v2951, %v2960
    %2962 = vst.msk [vmem:[#allocation3 + $0x6] sm:$0x3] %vm337, %v2951
    %2964 = vrot.lane.b32.xlu0 %v2951, 64
    %v2965 = vpop.permute.xlu0 %2964
    %2967 = vst.msk [vmem:[#allocation3 + $0x8] sm:$0x3] %vm343, %v2965
    %v2968 = vld [vmem:[#allocation2 + $0x10] sm:$0x3]
    %v2969 = vld [vmem:[#allocation2 + $0x18] sm:$0x3]
    %v2970 = vpack.c.bf16 %v2961, %v2961
    %v2972 = vsel %vm238, %v2970, 0
    %2974 = vmatpush.bf16.msra.mxu0 0
    %2975 = vmatpush.bf16.msra.mxu0 0
    %2976 = vmatpush.bf16.msra.mxu0 0
    %2977 = vmatpush.bf16.msra.mxu0 0
    %2978 = vmatpush.bf16.msra.mxu0 %v2488
    %2979 = vmatpush.bf16.msra.mxu0 %v2486
    %2980 = vmatpush.bf16.msra.mxu0 %v2484
    %2981 = vmatpush.bf16.msra.mxu0 %v2482
    %2982 = vmatmul.bf16.gmra.mxu0 %v2972
    %v2983 = vpop.f32.mrf.mxu0
    %v2984 = vadd.f32 0.0, %v2983
    %v2985 = vpop.f32.mrf.mxu0
    %2986 = vdwg.mxu0
    %2987 = vmatpush.bf16.msra.mxu0 0
    %2988 = vmatpush.bf16.msra.mxu0 0
    %2989 = vmatpush.bf16.msra.mxu0 0
    %2990 = vmatpush.bf16.msra.mxu0 0
    %2991 = vmatpush.bf16.msra.mxu0 %v2489
    %2992 = vmatpush.bf16.msra.mxu0 %v2487
    %2993 = vmatpush.bf16.msra.mxu0 %v2485
    %2994 = vmatpush.bf16.msra.mxu0 %v2483
    %2995 = vmatmul.bf16.gmra.mxu0 %v2972
    %v2996 = vpop.f32.mrf.mxu0
    %v2997 = vadd.f32 0.0, %v2996
    %v2998 = vpop.f32.mrf.mxu0
    %2999 = vdwg.mxu0
    %v3000 = vadd.f32 %v2968, %v2984
    %v3001 = vadd.f32 %v2969, %v2997
    %v3002 = vxor.u32 %v3000, 2147483648
    %v3003 = vxor.u32 %v3001, 2147483648
    %v3004 = vmul.f32 %v3002, 1.442695
    %v3005 = vpow.pop %v3004
    %v3006 = vmul.f32 %v3003, 1.442695
    %v3007 = vpow.pop %v3006
    %v3008 = vadd.f32 %v3005, 1.0
    %v3009 = vadd.f32 %v3007, 1.0
    %v3010 = vrcp.pop %v3008
    %v3011 = vmul.f32 %v3008, %v3010
    %v3012 = vsub.f32 1.0, %v3011
    %v3013 = vmul.f32 %v3010, %v3012
    %v3014 = vadd.f32 %v3010, %v3013
    %vm3015 = vweird.f32 %v3008
    %vm3016 = vweird.f32 %v3010
    %vm3017 = vmor %vm3015, %vm3016
    %v3018 = vsel %vm3017, %v3010, %v3014
    %v3019 = vand.u32 2147483647, %v3008
    %vm3020 = vcmp.eq.f32.partialorder %v3019, 8.507059e+37
    %v3021 = vand.u32 %v3008, 2147483648
    %v3022 = vor.u32 1.1754944e-38, %v3021
    %v3023 = vsel %vm3020, %v3022, %v3018
    %v3024 = vmul.f32 1.0, %v3023
    %v3025 = vrcp.pop %v3009
    %v3026 = vmul.f32 %v3009, %v3025
    %v3027 = vsub.f32 1.0, %v3026
    %v3028 = vmul.f32 %v3025, %v3027
    %v3029 = vadd.f32 %v3025, %v3028
    %vm3030 = vweird.f32 %v3009
    %vm3031 = vweird.f32 %v3025
    %vm3032 = vmor %vm3030, %vm3031
    %v3033 = vsel %vm3032, %v3025, %v3029
    %v3034 = vand.u32 2147483647, %v3009
    %vm3035 = vcmp.eq.f32.partialorder %v3034, 8.507059e+37
    %v3036 = vand.u32 %v3009, 2147483648
    %v3037 = vor.u32 1.1754944e-38, %v3036
    %v3038 = vsel %vm3035, %v3037, %v3033
    %v3039 = vmul.f32 1.0, %v3038
    %v3040 = vtanh.pop %v3001
    %3042 = vrot.lane.b32.xlu0 %v2959, 64
    %v3043 = vpop.permute.xlu0 %3042
    %v3045 = vmul.f32 %v3024, %v3043
    %3047 = vrot.lane.b32.xlu0 %v3040, 64
    %v3048 = vpop.permute.xlu0 %3047
    %v3050 = vmul.f32 %v3024, %v3048
    %3052 = vrot.lane.b32.xlu0 %v3050, 64
    %v3053 = vpop.permute.xlu0 %3052
    %v3055 = vadd.f32 %v3045, %v3053
    %v3056 = vtanh.pop %v3055
    %3058 = vrot.lane.b32.xlu0 %v3056, 64
    %v3059 = vpop.permute.xlu0 %3058
    %v3061 = vmul.f32 %v3039, %v3059
    %v3062 = vld [vmem:[#allocation4 + $0x8] sm:$0x3]
    %v3063 = vsub.f32 1.0, %v3062
    %v3064 = vmul.f32 %v3062, %v3061
    %3066 = vrot.lane.b32.xlu0 %v3055, 64
    %v3067 = vpop.permute.xlu0 %3066
    %v3069 = vmul.f32 %v3062, %v3067
    %v3070 = vmul.f32 %v3063, %v2959
    %v3071 = vadd.f32 %v3069, %v3070
    %v3072 = vmul.f32 %v3063, %v2961
    %v3073 = vadd.f32 %v3064, %v3072
    %3074 = vst.msk [vmem:[#allocation3 + $0x8] sm:$0x3] %vm337, %v3064
    %3076 = vrot.lane.b32.xlu0 %v3064, 64
    %v3077 = vpop.permute.xlu0 %3076
    %3079 = vst.msk [vmem:[#allocation3 + $0x6] sm:$0x3] %vm343, %v3077
    %v3080 = vld [vmem:[#allocation2 + $0x10] sm:$0xc]
    %v3081 = vld [vmem:[#allocation2 + $0x18] sm:$0xc]
    %v3082 = vpack.c.bf16 %v3073, %v3073
    %v3084 = vsel %vm238, %v3082, 0
    %3086 = vmatpush.bf16.msra.mxu0 0
    %3087 = vmatpush.bf16.msra.mxu0 0
    %3088 = vmatpush.bf16.msra.mxu0 0
    %3089 = vmatpush.bf16.msra.mxu0 0
    %3090 = vmatpush.bf16.msra.mxu0 %v2488
    %3091 = vmatpush.bf16.msra.mxu0 %v2486
    %3092 = vmatpush.bf16.msra.mxu0 %v2484
    %3093 = vmatpush.bf16.msra.mxu0 %v2482
    %3094 = vmatmul.bf16.gmra.mxu0 %v3084
    %v3095 = vpop.f32.mrf.mxu0
    %v3096 = vadd.f32 0.0, %v3095
    %v3097 = vpop.f32.mrf.mxu0
    %3098 = vdwg.mxu0
    %3099 = vmatpush.bf16.msra.mxu0 0
    %3100 = vmatpush.bf16.msra.mxu0 0
    %3101 = vmatpush.bf16.msra.mxu0 0
    %3102 = vmatpush.bf16.msra.mxu0 0
    %3103 = vmatpush.bf16.msra.mxu0 %v2489
    %3104 = vmatpush.bf16.msra.mxu0 %v2487
    %3105 = vmatpush.bf16.msra.mxu0 %v2485
    %3106 = vmatpush.bf16.msra.mxu0 %v2483
    %3107 = vmatmul.bf16.gmra.mxu0 %v3084
    %v3108 = vpop.f32.mrf.mxu0
    %v3109 = vadd.f32 0.0, %v3108
    %v3110 = vpop.f32.mrf.mxu0
    %3111 = vdwg.mxu0
    %v3114 = vrot.slane %v3096, 6
    %v3115 = vrot.slane %v3109, 6
    %v3118 = vadd.f32 %v3080, %v3114
    %v3119 = vadd.f32 %v3081, %v3115
    %v3120 = vxor.u32 %v3118, 2147483648
    %v3121 = vxor.u32 %v3119, 2147483648
    %v3122 = vmul.f32 %v3120, 1.442695
    %v3123 = vpow.pop %v3122
    %v3124 = vmul.f32 %v3121, 1.442695
    %v3125 = vpow.pop %v3124
    %v3126 = vadd.f32 %v3123, 1.0
    %v3127 = vadd.f32 %v3125, 1.0
    %v3128 = vrcp.pop %v3126
    %v3129 = vmul.f32 %v3126, %v3128
    %v3130 = vsub.f32 1.0, %v3129
    %v3131 = vmul.f32 %v3128, %v3130
    %v3132 = vadd.f32 %v3128, %v3131
    %vm3133 = vweird.f32 %v3126
    %vm3134 = vweird.f32 %v3128
    %vm3135 = vmor %vm3133, %vm3134
    %v3136 = vsel %vm3135, %v3128, %v3132
    %v3137 = vand.u32 2147483647, %v3126
    %vm3138 = vcmp.eq.f32.partialorder %v3137, 8.507059e+37
    %v3139 = vand.u32 %v3126, 2147483648
    %v3140 = vor.u32 1.1754944e-38, %v3139
    %v3141 = vsel %vm3138, %v3140, %v3136
    %v3142 = vmul.f32 1.0, %v3141
    %v3143 = vrcp.pop %v3127
    %v3144 = vmul.f32 %v3127, %v3143
    %v3145 = vsub.f32 1.0, %v3144
    %v3146 = vmul.f32 %v3143, %v3145
    %v3147 = vadd.f32 %v3143, %v3146
    %vm3148 = vweird.f32 %v3127
    %vm3149 = vweird.f32 %v3143
    %vm3150 = vmor %vm3148, %vm3149
    %v3151 = vsel %vm3150, %v3143, %v3147
    %v3152 = vand.u32 2147483647, %v3127
    %vm3153 = vcmp.eq.f32.partialorder %v3152, 8.507059e+37
    %v3154 = vand.u32 %v3127, 2147483648
    %v3155 = vor.u32 1.1754944e-38, %v3154
    %v3156 = vsel %vm3153, %v3155, %v3151
    %v3157 = vmul.f32 1.0, %v3156
    %v3158 = vtanh.pop %v3119
    %v3160 = vrot.slane %v3071, 6
    %3161 = vrot.lane.b32.xlu0 %v3160, 64
    %v3162 = vpop.permute.xlu0 %3161
    %v3164 = vmul.f32 %v3142, %v3162
    %3166 = vrot.lane.b32.xlu0 %v3158, 64
    %v3167 = vpop.permute.xlu0 %3166
    %v3169 = vmul.f32 %v3142, %v3167
    %3171 = vrot.lane.b32.xlu0 %v3169, 64
    %v3172 = vpop.permute.xlu0 %3171
    %v3174 = vadd.f32 %v3164, %v3172
    %v3175 = vtanh.pop %v3174
    %3177 = vrot.lane.b32.xlu0 %v3175, 64
    %v3178 = vpop.permute.xlu0 %3177
    %v3180 = vmul.f32 %v3157, %v3178
    %v3181 = vld [vmem:[#allocation4 + $0xa] sm:$0x3]
    %v3182 = vsub.f32 1.0, %v3181
    %v3184 = vrot.slane %v3180, 2
    %v3186 = vmul.f32 %v3181, %v3184
    %v3188 = vrot.slane %v3174, 2
    %3189 = vrot.lane.b32.xlu0 %v3188, 64
    %v3190 = vpop.permute.xlu0 %3189
    %v3192 = vmul.f32 %v3181, %v3190
    %v3193 = vmul.f32 %v3182, %v3071
    %v3194 = vadd.f32 %v3192, %v3193
    %v3195 = vmul.f32 %v3182, %v3073
    %v3196 = vadd.f32 %v3186, %v3195
    %3197 = vst.msk [vmem:[#allocation3 + $0xa] sm:$0x3] %vm337, %v3186
    %3199 = vrot.lane.b32.xlu0 %v3186, 64
    %v3200 = vpop.permute.xlu0 %3199
    %3202 = vst.msk [vmem:[#allocation3 + $0x4] sm:$0x3] %vm343, %v3200
    %v3203 = vld [vmem:[#allocation2 + $0x10] sm:$0x30]
    %v3204 = vld [vmem:[#allocation2 + $0x18] sm:$0x30]
    %v3205 = vpack.c.bf16 %v3196, %v3196
    %v3207 = vsel %vm238, %v3205, 0
    %3209 = vmatpush.bf16.msra.mxu0 0
    %3210 = vmatpush.bf16.msra.mxu0 0
    %3211 = vmatpush.bf16.msra.mxu0 0
    %3212 = vmatpush.bf16.msra.mxu0 0
    %3213 = vmatpush.bf16.msra.mxu0 %v2488
    %3214 = vmatpush.bf16.msra.mxu0 %v2486
    %3215 = vmatpush.bf16.msra.mxu0 %v2484
    %3216 = vmatpush.bf16.msra.mxu0 %v2482
    %3217 = vmatmul.bf16.gmra.mxu0 %v3207
    %v3218 = vpop.f32.mrf.mxu0
    %v3219 = vadd.f32 0.0, %v3218
    %v3220 = vpop.f32.mrf.mxu0
    %3221 = vdwg.mxu0
    %3222 = vmatpush.bf16.msra.mxu0 0
    %3223 = vmatpush.bf16.msra.mxu0 0
    %3224 = vmatpush.bf16.msra.mxu0 0
    %3225 = vmatpush.bf16.msra.mxu0 0
    %3226 = vmatpush.bf16.msra.mxu0 %v2489
    %3227 = vmatpush.bf16.msra.mxu0 %v2487
    %3228 = vmatpush.bf16.msra.mxu0 %v2485
    %3229 = vmatpush.bf16.msra.mxu0 %v2483
    %3230 = vmatmul.bf16.gmra.mxu0 %v3207
    %v3231 = vpop.f32.mrf.mxu0
    %v3232 = vadd.f32 0.0, %v3231
    %v3233 = vpop.f32.mrf.mxu0
    %3234 = vdwg.mxu0
    %v3237 = vrot.slane %v3219, 4
    %v3238 = vrot.slane %v3232, 4
    %v3241 = vadd.f32 %v3203, %v3237
    %v3242 = vadd.f32 %v3204, %v3238
    %v3243 = vxor.u32 %v3241, 2147483648
    %v3244 = vxor.u32 %v3242, 2147483648
    %v3245 = vmul.f32 %v3243, 1.442695
    %v3246 = vpow.pop %v3245
    %v3247 = vmul.f32 %v3244, 1.442695
    %v3248 = vpow.pop %v3247
    %v3249 = vadd.f32 %v3246, 1.0
    %v3250 = vadd.f32 %v3248, 1.0
    %v3251 = vrcp.pop %v3249
    %v3252 = vmul.f32 %v3249, %v3251
    %v3253 = vsub.f32 1.0, %v3252
    %v3254 = vmul.f32 %v3251, %v3253
    %v3255 = vadd.f32 %v3251, %v3254
    %vm3256 = vweird.f32 %v3249
    %vm3257 = vweird.f32 %v3251
    %vm3258 = vmor %vm3256, %vm3257
    %v3259 = vsel %vm3258, %v3251, %v3255
    %v3260 = vand.u32 2147483647, %v3249
    %vm3261 = vcmp.eq.f32.partialorder %v3260, 8.507059e+37
    %v3262 = vand.u32 %v3249, 2147483648
    %v3263 = vor.u32 1.1754944e-38, %v3262
    %v3264 = vsel %vm3261, %v3263, %v3259
    %v3265 = vmul.f32 1.0, %v3264
    %v3266 = vrcp.pop %v3250
    %v3267 = vmul.f32 %v3250, %v3266
    %v3268 = vsub.f32 1.0, %v3267
    %v3269 = vmul.f32 %v3266, %v3268
    %v3270 = vadd.f32 %v3266, %v3269
    %vm3271 = vweird.f32 %v3250
    %vm3272 = vweird.f32 %v3266
    %vm3273 = vmor %vm3271, %vm3272
    %v3274 = vsel %vm3273, %v3266, %v3270
    %v3275 = vand.u32 2147483647, %v3250
    %vm3276 = vcmp.eq.f32.partialorder %v3275, 8.507059e+37
    %v3277 = vand.u32 %v3250, 2147483648
    %v3278 = vor.u32 1.1754944e-38, %v3277
    %v3279 = vsel %vm3276, %v3278, %v3274
    %v3280 = vmul.f32 1.0, %v3279
    %v3281 = vtanh.pop %v3242
    %v3283 = vrot.slane %v3194, 4
    %3284 = vrot.lane.b32.xlu0 %v3283, 64
    %v3285 = vpop.permute.xlu0 %3284
    %v3287 = vmul.f32 %v3265, %v3285
    %3289 = vrot.lane.b32.xlu0 %v3281, 64
    %v3290 = vpop.permute.xlu0 %3289
    %v3292 = vmul.f32 %v3265, %v3290
    %3294 = vrot.lane.b32.xlu0 %v3292, 64
    %v3295 = vpop.permute.xlu0 %3294
    %v3297 = vadd.f32 %v3287, %v3295
    %v3298 = vtanh.pop %v3297
    %3300 = vrot.lane.b32.xlu0 %v3298, 64
    %v3301 = vpop.permute.xlu0 %3300
    %v3303 = vmul.f32 %v3280, %v3301
    %v3304 = vld [vmem:[#allocation4 + $0xc] sm:$0x3]
    %v3305 = vsub.f32 1.0, %v3304
    %v3307 = vrot.slane %v3303, 4
    %v3309 = vmul.f32 %v3304, %v3307
    %v3311 = vrot.slane %v3297, 4
    %3312 = vrot.lane.b32.xlu0 %v3311, 64
    %v3313 = vpop.permute.xlu0 %3312
    %v3315 = vmul.f32 %v3304, %v3313
    %v3316 = vmul.f32 %v3305, %v3194
    %v3317 = vadd.f32 %v3315, %v3316
    %v3318 = vmul.f32 %v3305, %v3196
    %v3319 = vadd.f32 %v3309, %v3318
    %3320 = vst.msk [vmem:[#allocation3 + $0xc] sm:$0x3] %vm337, %v3309
    %3322 = vrot.lane.b32.xlu0 %v3309, 64
    %v3323 = vpop.permute.xlu0 %3322
    %3325 = vst.msk [vmem:[#allocation3 + $0x2] sm:$0x3] %vm343, %v3323
    %v3326 = vld [vmem:[#allocation2 + $0x10] sm:$0xc0]
    %v3327 = vld [vmem:[#allocation2 + $0x18] sm:$0xc0]
    %v3328 = vpack.c.bf16 %v3319, %v3319
    %v3330 = vsel %vm238, %v3328, 0
    %3332 = vmatpush.bf16.msra.mxu0 0
    %3333 = vmatpush.bf16.msra.mxu0 0
    %3334 = vmatpush.bf16.msra.mxu0 0
    %3335 = vmatpush.bf16.msra.mxu0 0
    %3336 = vmatpush.bf16.msra.mxu0 %v2488
    %3337 = vmatpush.bf16.msra.mxu0 %v2486
    %3338 = vmatpush.bf16.msra.mxu0 %v2484
    %3339 = vmatpush.bf16.msra.mxu0 %v2482
    %3340 = vmatmul.bf16.gmra.mxu0 %v3330
    %v3341 = vpop.f32.mrf.mxu0
    %v3342 = vadd.f32 0.0, %v3341
    %v3343 = vpop.f32.mrf.mxu0
    %3344 = vdwg.mxu0
    %3345 = vmatpush.bf16.msra.mxu0 0
    %3346 = vmatpush.bf16.msra.mxu0 0
    %3347 = vmatpush.bf16.msra.mxu0 0
    %3348 = vmatpush.bf16.msra.mxu0 0
    %3349 = vmatpush.bf16.msra.mxu0 %v2489
    %3350 = vmatpush.bf16.msra.mxu0 %v2487
    %3351 = vmatpush.bf16.msra.mxu0 %v2485
    %3352 = vmatpush.bf16.msra.mxu0 %v2483
    %3353 = vmatmul.bf16.gmra.mxu0 %v3330
    %v3354 = vpop.f32.mrf.mxu0
    %v3355 = vadd.f32 0.0, %v3354
    %v3356 = vpop.f32.mrf.mxu0
    %3357 = vdwg.mxu0
    %v3360 = vrot.slane %v3342, 2
    %v3361 = vrot.slane %v3355, 2
    %v3364 = vadd.f32 %v3326, %v3360
    %v3365 = vadd.f32 %v3327, %v3361
    %v3366 = vxor.u32 %v3364, 2147483648
    %v3367 = vxor.u32 %v3365, 2147483648
    %v3368 = vmul.f32 %v3366, 1.442695
    %v3369 = vpow.pop %v3368
    %v3370 = vmul.f32 %v3367, 1.442695
    %v3371 = vpow.pop %v3370
    %v3372 = vadd.f32 %v3369, 1.0
    %v3373 = vadd.f32 %v3371, 1.0
    %v3374 = vrcp.pop %v3372
    %v3375 = vmul.f32 %v3372, %v3374
    %v3376 = vsub.f32 1.0, %v3375
    %v3377 = vmul.f32 %v3374, %v3376
    %v3378 = vadd.f32 %v3374, %v3377
    %vm3379 = vweird.f32 %v3372
    %vm3380 = vweird.f32 %v3374
    %vm3381 = vmor %vm3379, %vm3380
    %v3382 = vsel %vm3381, %v3374, %v3378
    %v3383 = vand.u32 2147483647, %v3372
    %vm3384 = vcmp.eq.f32.partialorder %v3383, 8.507059e+37
    %v3385 = vand.u32 %v3372, 2147483648
    %v3386 = vor.u32 1.1754944e-38, %v3385
    %v3387 = vsel %vm3384, %v3386, %v3382
    %v3388 = vmul.f32 1.0, %v3387
    %v3389 = vrcp.pop %v3373
    %v3390 = vmul.f32 %v3373, %v3389
    %v3391 = vsub.f32 1.0, %v3390
    %v3392 = vmul.f32 %v3389, %v3391
    %v3393 = vadd.f32 %v3389, %v3392
    %vm3394 = vweird.f32 %v3373
    %vm3395 = vweird.f32 %v3389
    %vm3396 = vmor %vm3394, %vm3395
    %v3397 = vsel %vm3396, %v3389, %v3393
    %v3398 = vand.u32 2147483647, %v3373
    %vm3399 = vcmp.eq.f32.partialorder %v3398, 8.507059e+37
    %v3400 = vand.u32 %v3373, 2147483648
    %v3401 = vor.u32 1.1754944e-38, %v3400
    %v3402 = vsel %vm3399, %v3401, %v3397
    %v3403 = vmul.f32 1.0, %v3402
    %v3404 = vtanh.pop %v3365
    %v3406 = vrot.slane %v3317, 2
    %3407 = vrot.lane.b32.xlu0 %v3406, 64
    %v3408 = vpop.permute.xlu0 %3407
    %v3410 = vmul.f32 %v3388, %v3408
    %3412 = vrot.lane.b32.xlu0 %v3404, 64
    %v3413 = vpop.permute.xlu0 %3412
    %v3415 = vmul.f32 %v3388, %v3413
    %3417 = vrot.lane.b32.xlu0 %v3415, 64
    %v3418 = vpop.permute.xlu0 %3417
    %v3420 = vadd.f32 %v3410, %v3418
    %v3421 = vtanh.pop %v3420
    %3423 = vrot.lane.b32.xlu0 %v3421, 64
    %v3424 = vpop.permute.xlu0 %3423
    %v3426 = vmul.f32 %v3403, %v3424
    %v3427 = vld [vmem:[#allocation4 + $0xe] sm:$0x3]
    %v3429 = vrot.slane %v3426, 6
    %v3431 = vmul.f32 %v3427, %v3429
    %3432 = vst.msk [vmem:[#allocation3 + $0xe] sm:$0x3] %vm337, %v3431
    %3434 = vrot.lane.b32.xlu0 %v3431, 64
    %v3435 = vpop.permute.xlu0 %3434
    %3437 = vst.msk [vmem:[#allocation3] sm:$0x3] %vm343, %v3435
    %v3438 = vld [vmem:[#allocation3] sm:$0xff]
    %v3439 = vld [vmem:[#allocation3 + $0x8] sm:$0xff]
    %v3440 = vld [vmem:[%s10] sm:$0xff]
    %v3441 = vld [vmem:[%s10 + $0x8] sm:$0xff]
    %v3442 = vld [vmem:[%s10 + $0x10] sm:$0xff]
    %v3443 = vld [vmem:[%s10 + $0x18] sm:$0xff]
    %v3444 = vld [vmem:[%s10 + $0x20] sm:$0xff]
    %v3445 = vld [vmem:[%s10 + $0x28] sm:$0xff]
    %v3446 = vld [vmem:[%s10 + $0x30] sm:$0xff]
    %v3447 = vld [vmem:[%s10 + $0x38] sm:$0xff]
    %v3448 = vld [vmem:[%s10 + $0x40] sm:$0xff]
    %v3449 = vld [vmem:[%s10 + $0x48] sm:$0xff]
    %v3450 = vld [vmem:[%s10 + $0x50] sm:$0xff]
    %v3451 = vld [vmem:[%s10 + $0x58] sm:$0xff]
    %v3452 = vld [vmem:[%s10 + $0x60] sm:$0xff]
    %v3453 = vld [vmem:[%s10 + $0x68] sm:$0xff]
    %v3454 = vld [vmem:[%s10 + $0x70] sm:$0xff]
    %v3455 = vld [vmem:[%s10 + $0x78] sm:$0xff]
    %v3456 = vld [vmem:[%s11] sm:$0x1]
    %v3458 = vperm.slane %v3456, 0
    %3460 = vmatpush.msra.mxu0 %v3455
    %3461 = vmatpush.msra.mxu0 %v3454
    %3462 = vmatpush.msra.mxu0 %v3453
    %3463 = vmatpush.msra.mxu0 %v3452
    %3464 = vmatpush.msra.mxu0 %v3451
    %3465 = vmatpush.msra.mxu0 %v3450
    %3466 = vmatpush.msra.mxu0 %v3449
    %3467 = vmatpush.msra.mxu0 %v3448
    %3468 = vmatpush.msra.mxu0 %v3447
    %3469 = vmatpush.msra.mxu0 %v3446
    %3470 = vmatpush.msra.mxu0 %v3445
    %3471 = vmatpush.msra.mxu0 %v3444
    %3472 = vmatpush.msra.mxu0 %v3443
    %3473 = vmatpush.msra.mxu0 %v3442
    %3474 = vmatpush.msra.mxu0 %v3441
    %3475 = vmatpush.msra.mxu0 %v3440
    %3476 = vmatmul.f32.gmra.mxu0 %v3438
    %v3477 = vpop.f32.mrf.mxu0
    %v3478 = vadd.f32 %v3458, %v3477
    %3479 = vmatmul.f32.gmra.mxu0 %v3439
    %v3480 = vpop.f32.mrf.mxu0
    %v3481 = vadd.f32 %v3458, %v3480
    %3482 = vdwg.mxu0
    %v3483 = vld [vmem:[#allocation4] sm:$0xff]
    %v3484 = vld [vmem:[#allocation4 + $0x8] sm:$0xff]
    %3486 = vset.pattern.permute.xlu0 0
    %3487 = vperm.xlu0 %3486, %v3483
    %v3488 = vpop.permute.xlu0 %3487
    %3491 = vset.pattern.permute.xlu0 0
    %3492 = vperm.xlu0 %3491, %v3484
    %v3493 = vpop.permute.xlu0 %3492
    %v3495 = vmul.f32 %v3478, %v3488
    %v3496 = vmul.f32 %v3481, %v3493
    %v3497 = vsel %vm152, %v3495, -inf
    %3498 = vmax.xlane.f32.xlu0 %v3497
    %v3499 = vpop.xlane.xlu0 %3498
    %v3500 = vsel %vm152, %v3496, -inf
    %3501 = vmax.xlane.f32.xlu0 %v3500
    %v3502 = vpop.xlane.xlu0 %3501
    %v3503 = vsub.f32 %v3495, %v3499
    %v3504 = vsub.f32 %v3496, %v3502
    %v3505 = vmul.f32 %v3503, 1.442695
    %v3506 = vpow.pop %v3505
    %v3507 = vmul.f32 %v3504, 1.442695
    %v3508 = vpow.pop %v3507
    %v3509 = vsel %vm152, %v3506, 0.0
    %3510 = vadd.xlane.f32.xlu0 %v3509
    %v3511 = vpop.xlane.xlu0 %3510
    %v3512 = vsel %vm152, %v3508, 0.0
    %3513 = vadd.xlane.f32.xlu0 %v3512
    %v3514 = vpop.xlane.xlu0 %3513
    %v3515 = vlog2.pop %v3511
    %v3516 = vmul.f32 %v3515, 0.6931472
    %v3517 = vlog2.pop %v3514
    %v3518 = vmul.f32 %v3517, 0.6931472
    %v3519 = vsub.f32 %v3503, %v3516
    %v3520 = vsub.f32 %v3504, %v3518
    %3521 = vst.msk [vmem:[#allocation15] sm:$0xff] %vm152, %v3519
    %3522 = vst.msk [vmem:[#allocation15 + $0x8] sm:$0xff] %vm152, %v3520
    // Predicated region
    $region74: #{tpu_custom_call.1} parent=1 // pred_check
      _
    $region75: #{tpu_custom_call.1} parent=1 // pred_check_branch
      %3524 = sbr.rel (0) target = $region77
    $region76: #{tpu_custom_call.1} parent=1 // pred_region
      %3526 = vsyncadd [#allocation6], 0
      %s3527 = sshll.u32 [#allocation15], 4
      %s3528 = int_to_ptr.vmem [resolvable:$true] %s3527
      %s3529 = sshll.u32 %s12, 4
      %s3530 = int_to_ptr.hbm [resolvable:$true] %s3529
      %3535 = dma.vmem_to_hbm [thread:$0]  %s3528, 256, %s3530, [#allocation6], 128, 128, 8
    $region77: #{tpu_custom_call.1} parent=1 // pred_fallthru
      _
    // Predicated region
    $region78: #{tpu_custom_call.1} parent=1 // pred_check
      _
    $region79: #{tpu_custom_call.1} parent=1 // pred_check_branch
      %3537 = sbr.rel (0) target = $region81
    $region80: #{tpu_custom_call.1} parent=1 // pred_region
      %3539 = dma.done [#allocation6], 256
    $region81: #{tpu_custom_call.1} parent=1 // pred_fallthru
      _
    %3540 = vsyncpa [#allocation5], 1
    %3541 = vsyncpa [#allocation8], 1
    %3542 = vsyncpa [#allocation11], 1
    %3543 = vsyncpa [#allocation14], 1
    %3544 = vsyncpa [#allocation6], 1

</llo_original>
